<compile_context>
chip_gen: v5e
topology: v5e:2x2
jax: 0.10.0
libtpu: 0.0.40
codegen_flags: <defaults>
</compile_context>

<pallas_src>
import functools

import jax
import jax.numpy as jnp
from jax.experimental import pallas as pl
from jax.experimental.pallas import tpu as pltpu

MARGIN = 0.0      # module default
REG_NORM = 1.0    # module default

# Fixed packing order of the 13 class-index rows / 3 relation-index rows.
#   class:   0:nf1.c 1:nf1.d | 2:nf2.c 3:nf2.d 4:nf2.e | 5:nf3.c 6:nf3.d
#            7:nf4.c 8:nf4.d | 9:dis.c 10:dis.d | 11:neg.c 12:neg.d
#   rel:     0:nf3.r 1:nf4.r 2:neg.r
N_CLS_OPS = 13
N_REL_OPS = 3


def elem_loss_kernel(cls_wT_ref, rel_wT_ref, cls_idx_ref, rel_idx_ref, out_ref):
    D = rel_wT_ref.shape[0]          # embedding_dim
    C = cls_wT_ref.shape[1]          # number of classes
    R = rel_wT_ref.shape[1]          # number of relations
    B = cls_idx_ref.shape[1] // N_CLS_OPS

    # ---- In-kernel gather: one-hot matmul on the MXU, transposed layout ----
    cls_idx = cls_idx_ref[...]                                    # (1, 13*B) i32
    onehot_c = (jax.lax.broadcasted_iota(jnp.int32, (C, N_CLS_OPS * B), 0)
                == cls_idx).astype(jnp.float32)                   # (C, 13*B)
    cls_T = jnp.dot(cls_wT_ref[...], onehot_c,
                    preferred_element_type=jnp.float32)           # (D+1, 13*B)

    rel_idx = rel_idx_ref[...]                                    # (1, 3*B) i32
    onehot_r = (jax.lax.broadcasted_iota(jnp.int32, (R, N_REL_OPS * B), 0)
                == rel_idx).astype(jnp.float32)                   # (R, 3*B)
    rel_T = jnp.dot(rel_wT_ref[...], onehot_r,
                    preferred_element_type=jnp.float32)           # (D, 3*B)

    def cls_op(i):
        blk = cls_T[:, i * B:(i + 1) * B]                         # (D+1, B)
        return blk[:D, :], jnp.abs(blk[D:D + 1, :])               # center, |radius|

    def rel_op(i):
        return rel_T[:, i * B:(i + 1) * B]                        # (D, B)

    def norm0(x):
        # L2 norm over the embedding (sublane) axis -> (1, B)
        return jnp.sqrt(jnp.sum(x * x, axis=0, keepdims=True))

    def reg(x):
        # Elem.reg: |‖x‖_2 - reg_norm|
        return jnp.abs(norm0(x) - REG_NORM)

    # ---------------- nf1Loss: C ⊑ D ----------------
    x1, rc = cls_op(0)
    x2, rd = cls_op(1)
    l1 = (jnp.maximum(norm0(x1 - x2) + rc - rd - MARGIN, 0.0)
          + reg(x1) + reg(x2))

    # ---------------- nf2Loss: C ⊓ D ⊑ E ----------------
    x1, rc = cls_op(2)
    x2, rd = cls_op(3)
    x3, _re = cls_op(4)          # E's radius is unused (matches reference)
    sr = rc + rd
    l2 = (jnp.maximum(norm0(x2 - x1) - sr - MARGIN, 0.0)
          + jnp.maximum(norm0(x3 - x1) - rc - MARGIN, 0.0)
          + jnp.maximum(norm0(x3 - x2) - rd - MARGIN, 0.0)
          + reg(x1) + reg(x2) + reg(x3))

    # ---------------- nf3Loss: C ⊑ ∃R.D ----------------
    x1, rc = cls_op(5)
    x2, rd = cls_op(6)
    r = rel_op(0)
    l3 = (jnp.maximum(norm0(x1 + r - x2) + rc - rd - MARGIN, 0.0)
          + reg(x1) + reg(x2))

    # ---------------- nf4Loss: ∃R.C ⊑ D ----------------
    x1, rc = cls_op(7)
    x2, rd = cls_op(8)
    r = rel_op(1)
    l4 = (jnp.maximum(norm0(x1 - r - x2) - (rd - rc) - MARGIN, 0.0)
          + reg(x1) + reg(x2))

    # ---------------- disJointLoss: C ⊓ D ⊑ ⊥ ----------------
    x1, rc = cls_op(9)
    x2, rd = cls_op(10)
    ld = (jnp.maximum((rc + rd) - norm0(x2 - x1) + MARGIN, 0.0)
          + reg(x1) + reg(x2))

    # ---------------- neg_loss (no ReLU in the reference) ----------------
    x1, rc = cls_op(11)
    x2, rd = cls_op(12)
    r = rel_op(2)
    ln = (-(norm0(x1 + r - x2) - rc - rd) + MARGIN
          + reg(x1) + reg(x2))

    # loss1.mean()+loss2.mean()+disjoint.mean()+loss4.mean()+loss3.mean()+negLoss.mean()
    # == mean over B of the per-row sum (all six share B rows).
    out_ref[0, 0] = jnp.mean(l1 + l2 + l3 + l4 + ld + ln)


@functools.partial(jax.jit, static_argnames=("batch",))
def elem_forward(class_w, rel_w, data, key, batch=512):
    """Replicates Elem.forward: sample `batch` rows per normal form, then run
    the fused gather+loss kernel and return the scalar total loss.
    (Assumes all six normal-form datasets are non-empty, as in the test.)"""
    keys = jax.random.split(key, 6)

    def sample(k, arr):  # np.random.choice(len(arr), size=batch), with replacement
        idx = jax.random.randint(k, (batch,), 0, arr.shape[0])
        return jnp.take(arr, idx, axis=0)

    nf1 = sample(keys[0], data["nf1"])        # (B, 2)  class indices
    nf2 = sample(keys[1], data["nf2"])        # (B, 3)  class indices
    nf3 = sample(keys[2], data["nf3"])        # (B, 3)  [class, rel, class]
    nf4 = sample(keys[3], data["nf4"])        # (B, 3)  [rel, class, class]
    dis = sample(keys[4], data["disjoint"])   # (B, 2)  class indices
    neg = sample(keys[5], data["nf3_neg0"])   # (B, 3)  [class, rel, class]

    cls_idx = jnp.stack(
        [nf1[:, 0], nf1[:, 1],
         nf2[:, 0], nf2[:, 1], nf2[:, 2],
         nf3[:, 0], nf3[:, 2],
         nf4[:, 1], nf4[:, 2],
         dis[:, 0], dis[:, 1],
         neg[:, 0], neg[:, 2]],
        axis=0).astype(jnp.int32).reshape(1, N_CLS_OPS * batch)   # (1, 13*B)

    rel_idx = jnp.stack(
        [nf3[:, 1], nf4[:, 0], neg[:, 1]],
        axis=0).astype(jnp.int32).reshape(1, N_REL_OPS * batch)   # (1, 3*B)

    class_w_T = class_w.T.astype(jnp.float32)   # (D+1, C)
    rel_w_T = rel_w.T.astype(jnp.float32)       # (D,   R)

    out = pl.pallas_call(
        elem_loss_kernel,
        out_shape=jax.ShapeDtypeStruct((1, 1), jnp.float32),
        in_specs=[pl.BlockSpec(memory_space=pltpu.MemorySpace.VMEM)] * 4,
        out_specs=pl.BlockSpec(memory_space=pltpu.MemorySpace.SMEM),
    )(class_w_T, rel_w_T, cls_idx, rel_idx)
    return out[0, 0]


if __name__ == "__main__":
    key = jax.random.PRNGKey(0)
    k_cls, k_rel, k_data, k_fwd = jax.random.split(key, 4)

    # Small, module-consistent config.
    class_num = 20          # len(class_)
    relation_num = 5
    embedding_dim = 32
    batch = 512             # hardcoded in Elem.forward

    # Deterministic parameter init mirroring __init__:
    # uniform(-1, 1) then per-row L2 normalization.
    class_w = jax.random.uniform(
        k_cls, (class_num, embedding_dim + 1), jnp.float32, minval=-1.0, maxval=1.0)
    class_w = class_w / jnp.linalg.norm(class_w, axis=1, keepdims=True)
    rel_w = jax.random.uniform(
        k_rel, (relation_num, embedding_dim), jnp.float32, minval=-1.0, maxval=1.0)
    rel_w = rel_w / jnp.linalg.norm(rel_w, axis=1, keepdims=True)

    # Synthetic axiom index data (what `input[...]` holds in forward()).
    n_ax = 40
    dk = jax.random.split(k_data, 12)
    ci = lambda k, shape: jax.random.randint(k, shape, 0, class_num, dtype=jnp.int32)
    ri = lambda k, shape: jax.random.randint(k, shape, 0, relation_num, dtype=jnp.int32)

    data = {
        "nf1": ci(dk[0], (n_ax, 2)),
        "nf2": ci(dk[1], (n_ax, 3)),
        "nf3": jnp.stack([ci(dk[2], (n_ax,)), ri(dk[3], (n_ax,)), ci(dk[4], (n_ax,))], axis=1),
        "nf4": jnp.stack([ri(dk[5], (n_ax,)), ci(dk[6], (n_ax,)), ci(dk[7], (n_ax,))], axis=1),
        "disjoint": ci(dk[8], (n_ax, 2)),
        "nf3_neg0": jnp.stack([ci(dk[9], (n_ax,)), ri(dk[10], (n_ax,)), ci(dk[11], (n_ax,))], axis=1),
    }

    total_loss = elem_forward(class_w, rel_w, data, k_fwd, batch=batch)
    jax.block_until_ready(total_loss)
    assert total_loss.shape == () and jnp.isfinite(total_loss)
    print("KERNEL_OK")
</pallas_src>

<mosaic_0001>
module attributes {stable_mosaic.version = 11 : i64} {
  func.func @elem_loss_kernel(%arg0: memref<33x20xf32, #tpu.memory_space<vmem>>, %arg1: memref<32x5xf32, #tpu.memory_space<vmem>>, %arg2: memref<1x6656xi32, #tpu.memory_space<vmem>>, %arg3: memref<1x1536xi32, #tpu.memory_space<vmem>>, %arg4: memref<1x1xf32, #tpu.memory_space<smem>>) attributes {dimension_semantics = [], scalar_prefetch = 0 : i64, scratch_operands = 0 : i64, tpu.core_type = #tpu.core_type<tc>} {
    %c0 = arith.constant 0 : index
    %c0_0 = arith.constant 0 : index
    %0 = vector.load %arg2[%c0, %c0_0] : memref<1x6656xi32, #tpu.memory_space<vmem>>, vector<1x6656xi32>
    %1 = tpu.iota {dimensions = array<i32: 0>} : vector<20x6656xi32>
    %2 = vector.broadcast %0 : vector<1x6656xi32> to vector<20x6656xi32>
    %3 = arith.cmpi eq, %1, %2 : vector<20x6656xi32>
    %4 = arith.extui %3 : vector<20x6656xi1> to vector<20x6656xi32>
    %5 = arith.sitofp %4 : vector<20x6656xi32> to vector<20x6656xf32>
    %c0_1 = arith.constant 0 : index
    %c0_2 = arith.constant 0 : index
    %6 = vector.load %arg0[%c0_1, %c0_2] : memref<33x20xf32, #tpu.memory_space<vmem>>, vector<33x20xf32>
    %cst = arith.constant dense<0.000000e+00> : vector<33x6656xf32>
    %7 = tpu.matmul %6, %5, %cst {dimension_numbers = #tpu.dot_dimension_numbers<[1], [0], [0], [1], [0, 0, 1, 1], [], []>} : vector<33x20xf32>, vector<20x6656xf32>, vector<33x6656xf32> -> vector<33x6656xf32>
    %c0_3 = arith.constant 0 : index
    %c0_4 = arith.constant 0 : index
    %8 = vector.load %arg3[%c0_3, %c0_4] : memref<1x1536xi32, #tpu.memory_space<vmem>>, vector<1x1536xi32>
    %9 = tpu.iota {dimensions = array<i32: 0>} : vector<5x1536xi32>
    %10 = vector.broadcast %8 : vector<1x1536xi32> to vector<5x1536xi32>
    %11 = arith.cmpi eq, %9, %10 : vector<5x1536xi32>
    %12 = arith.extui %11 : vector<5x1536xi1> to vector<5x1536xi32>
    %13 = arith.sitofp %12 : vector<5x1536xi32> to vector<5x1536xf32>
    %c0_5 = arith.constant 0 : index
    %c0_6 = arith.constant 0 : index
    %14 = vector.load %arg1[%c0_5, %c0_6] : memref<32x5xf32, #tpu.memory_space<vmem>>, vector<32x5xf32>
    %cst_7 = arith.constant dense<0.000000e+00> : vector<32x1536xf32>
    %15 = tpu.matmul %14, %13, %cst_7 {dimension_numbers = #tpu.dot_dimension_numbers<[1], [0], [0], [1], [0, 0, 1, 1], [], []>} : vector<32x5xf32>, vector<5x1536xf32>, vector<32x1536xf32> -> vector<32x1536xf32>
    %16 = vector.extract_strided_slice %7 {offsets = [0, 0], sizes = [33, 512], strides = [1, 1]} : vector<33x6656xf32> to vector<33x512xf32>
    %17 = vector.extract_strided_slice %16 {offsets = [0, 0], sizes = [32, 512], strides = [1, 1]} : vector<33x512xf32> to vector<32x512xf32>
    %18 = vector.extract_strided_slice %16 {offsets = [32, 0], sizes = [1, 512], strides = [1, 1]} : vector<33x512xf32> to vector<1x512xf32>
    %19 = math.absf %18 : vector<1x512xf32>
    %20 = vector.extract_strided_slice %7 {offsets = [0, 512], sizes = [33, 512], strides = [1, 1]} : vector<33x6656xf32> to vector<33x512xf32>
    %21 = vector.extract_strided_slice %20 {offsets = [0, 0], sizes = [32, 512], strides = [1, 1]} : vector<33x512xf32> to vector<32x512xf32>
    %22 = vector.extract_strided_slice %20 {offsets = [32, 0], sizes = [1, 512], strides = [1, 1]} : vector<33x512xf32> to vector<1x512xf32>
    %23 = math.absf %22 : vector<1x512xf32>
    %24 = arith.subf %17, %21 : vector<32x512xf32>
    %25 = arith.mulf %24, %24 : vector<32x512xf32>
    %cst_8 = arith.constant dense<0.000000e+00> : vector<512xf32>
    %26 = vector.multi_reduction <add>, %25, %cst_8 [0] : vector<32x512xf32> to vector<512xf32>
    %27 = vector.shape_cast %26 : vector<512xf32> to vector<1x512xf32>
    %28 = math.sqrt %27 : vector<1x512xf32>
    %29 = arith.addf %28, %19 : vector<1x512xf32>
    %30 = arith.subf %29, %23 : vector<1x512xf32>
    %cst_9 = arith.constant 0.000000e+00 : f32
    %31 = vector.broadcast %cst_9 : f32 to vector<1x512xf32>
    %32 = arith.subf %30, %31 : vector<1x512xf32>
    %cst_10 = arith.constant 0.000000e+00 : f32
    %33 = vector.broadcast %cst_10 : f32 to vector<1x512xf32>
    %34 = arith.maximumf %32, %33 : vector<1x512xf32>
    %35 = arith.mulf %17, %17 : vector<32x512xf32>
    %cst_11 = arith.constant dense<0.000000e+00> : vector<512xf32>
    %36 = vector.multi_reduction <add>, %35, %cst_11 [0] : vector<32x512xf32> to vector<512xf32>
    %37 = vector.shape_cast %36 : vector<512xf32> to vector<1x512xf32>
    %38 = math.sqrt %37 : vector<1x512xf32>
    %cst_12 = arith.constant 1.000000e+00 : f32
    %39 = vector.broadcast %cst_12 : f32 to vector<1x512xf32>
    %40 = arith.subf %38, %39 : vector<1x512xf32>
    %41 = math.absf %40 : vector<1x512xf32>
    %42 = arith.addf %34, %41 : vector<1x512xf32>
    %43 = arith.mulf %21, %21 : vector<32x512xf32>
    %cst_13 = arith.constant dense<0.000000e+00> : vector<512xf32>
    %44 = vector.multi_reduction <add>, %43, %cst_13 [0] : vector<32x512xf32> to vector<512xf32>
    %45 = vector.shape_cast %44 : vector<512xf32> to vector<1x512xf32>
    %46 = math.sqrt %45 : vector<1x512xf32>
    %cst_14 = arith.constant 1.000000e+00 : f32
    %47 = vector.broadcast %cst_14 : f32 to vector<1x512xf32>
    %48 = arith.subf %46, %47 : vector<1x512xf32>
    %49 = math.absf %48 : vector<1x512xf32>
    %50 = arith.addf %42, %49 : vector<1x512xf32>
    %51 = vector.extract_strided_slice %7 {offsets = [0, 1024], sizes = [33, 512], strides = [1, 1]} : vector<33x6656xf32> to vector<33x512xf32>
    %52 = vector.extract_strided_slice %51 {offsets = [0, 0], sizes = [32, 512], strides = [1, 1]} : vector<33x512xf32> to vector<32x512xf32>
    %53 = vector.extract_strided_slice %51 {offsets = [32, 0], sizes = [1, 512], strides = [1, 1]} : vector<33x512xf32> to vector<1x512xf32>
    %54 = math.absf %53 : vector<1x512xf32>
    %55 = vector.extract_strided_slice %7 {offsets = [0, 1536], sizes = [33, 512], strides = [1, 1]} : vector<33x6656xf32> to vector<33x512xf32>
    %56 = vector.extract_strided_slice %55 {offsets = [0, 0], sizes = [32, 512], strides = [1, 1]} : vector<33x512xf32> to vector<32x512xf32>
    %57 = vector.extract_strided_slice %55 {offsets = [32, 0], sizes = [1, 512], strides = [1, 1]} : vector<33x512xf32> to vector<1x512xf32>
    %58 = math.absf %57 : vector<1x512xf32>
    %59 = vector.extract_strided_slice %7 {offsets = [0, 2048], sizes = [33, 512], strides = [1, 1]} : vector<33x6656xf32> to vector<33x512xf32>
    %60 = vector.extract_strided_slice %59 {offsets = [0, 0], sizes = [32, 512], strides = [1, 1]} : vector<33x512xf32> to vector<32x512xf32>
    %61 = arith.addf %54, %58 : vector<1x512xf32>
    %62 = arith.subf %56, %52 : vector<32x512xf32>
    %63 = arith.mulf %62, %62 : vector<32x512xf32>
    %cst_15 = arith.constant dense<0.000000e+00> : vector<512xf32>
    %64 = vector.multi_reduction <add>, %63, %cst_15 [0] : vector<32x512xf32> to vector<512xf32>
    %65 = vector.shape_cast %64 : vector<512xf32> to vector<1x512xf32>
    %66 = math.sqrt %65 : vector<1x512xf32>
    %67 = arith.subf %66, %61 : vector<1x512xf32>
    %cst_16 = arith.constant 0.000000e+00 : f32
    %68 = vector.broadcast %cst_16 : f32 to vector<1x512xf32>
    %69 = arith.subf %67, %68 : vector<1x512xf32>
    %cst_17 = arith.constant 0.000000e+00 : f32
    %70 = vector.broadcast %cst_17 : f32 to vector<1x512xf32>
    %71 = arith.maximumf %69, %70 : vector<1x512xf32>
    %72 = arith.subf %60, %52 : vector<32x512xf32>
    %73 = arith.mulf %72, %72 : vector<32x512xf32>
    %cst_18 = arith.constant dense<0.000000e+00> : vector<512xf32>
    %74 = vector.multi_reduction <add>, %73, %cst_18 [0] : vector<32x512xf32> to vector<512xf32>
    %75 = vector.shape_cast %74 : vector<512xf32> to vector<1x512xf32>
    %76 = math.sqrt %75 : vector<1x512xf32>
    %77 = arith.subf %76, %54 : vector<1x512xf32>
    %cst_19 = arith.constant 0.000000e+00 : f32
    %78 = vector.broadcast %cst_19 : f32 to vector<1x512xf32>
    %79 = arith.subf %77, %78 : vector<1x512xf32>
    %cst_20 = arith.constant 0.000000e+00 : f32
    %80 = vector.broadcast %cst_20 : f32 to vector<1x512xf32>
    %81 = arith.maximumf %79, %80 : vector<1x512xf32>
    %82 = arith.addf %71, %81 : vector<1x512xf32>
    %83 = arith.subf %60, %56 : vector<32x512xf32>
    %84 = arith.mulf %83, %83 : vector<32x512xf32>
    %cst_21 = arith.constant dense<0.000000e+00> : vector<512xf32>
    %85 = vector.multi_reduction <add>, %84, %cst_21 [0] : vector<32x512xf32> to vector<512xf32>
    %86 = vector.shape_cast %85 : vector<512xf32> to vector<1x512xf32>
    %87 = math.sqrt %86 : vector<1x512xf32>
    %88 = arith.subf %87, %58 : vector<1x512xf32>
    %cst_22 = arith.constant 0.000000e+00 : f32
    %89 = vector.broadcast %cst_22 : f32 to vector<1x512xf32>
    %90 = arith.subf %88, %89 : vector<1x512xf32>
    %cst_23 = arith.constant 0.000000e+00 : f32
    %91 = vector.broadcast %cst_23 : f32 to vector<1x512xf32>
    %92 = arith.maximumf %90, %91 : vector<1x512xf32>
    %93 = arith.addf %82, %92 : vector<1x512xf32>
    %94 = arith.mulf %52, %52 : vector<32x512xf32>
    %cst_24 = arith.constant dense<0.000000e+00> : vector<512xf32>
    %95 = vector.multi_reduction <add>, %94, %cst_24 [0] : vector<32x512xf32> to vector<512xf32>
    %96 = vector.shape_cast %95 : vector<512xf32> to vector<1x512xf32>
    %97 = math.sqrt %96 : vector<1x512xf32>
    %cst_25 = arith.constant 1.000000e+00 : f32
    %98 = vector.broadcast %cst_25 : f32 to vector<1x512xf32>
    %99 = arith.subf %97, %98 : vector<1x512xf32>
    %100 = math.absf %99 : vector<1x512xf32>
    %101 = arith.addf %93, %100 : vector<1x512xf32>
    %102 = arith.mulf %56, %56 : vector<32x512xf32>
    %cst_26 = arith.constant dense<0.000000e+00> : vector<512xf32>
    %103 = vector.multi_reduction <add>, %102, %cst_26 [0] : vector<32x512xf32> to vector<512xf32>
    %104 = vector.shape_cast %103 : vector<512xf32> to vector<1x512xf32>
    %105 = math.sqrt %104 : vector<1x512xf32>
    %cst_27 = arith.constant 1.000000e+00 : f32
    %106 = vector.broadcast %cst_27 : f32 to vector<1x512xf32>
    %107 = arith.subf %105, %106 : vector<1x512xf32>
    %108 = math.absf %107 : vector<1x512xf32>
    %109 = arith.addf %101, %108 : vector<1x512xf32>
    %110 = arith.mulf %60, %60 : vector<32x512xf32>
    %cst_28 = arith.constant dense<0.000000e+00> : vector<512xf32>
    %111 = vector.multi_reduction <add>, %110, %cst_28 [0] : vector<32x512xf32> to vector<512xf32>
    %112 = vector.shape_cast %111 : vector<512xf32> to vector<1x512xf32>
    %113 = math.sqrt %112 : vector<1x512xf32>
    %cst_29 = arith.constant 1.000000e+00 : f32
    %114 = vector.broadcast %cst_29 : f32 to vector<1x512xf32>
    %115 = arith.subf %113, %114 : vector<1x512xf32>
    %116 = math.absf %115 : vector<1x512xf32>
    %117 = arith.addf %109, %116 : vector<1x512xf32>
    %118 = vector.extract_strided_slice %7 {offsets = [0, 2560], sizes = [33, 512], strides = [1, 1]} : vector<33x6656xf32> to vector<33x512xf32>
    %119 = vector.extract_strided_slice %118 {offsets = [0, 0], sizes = [32, 512], strides = [1, 1]} : vector<33x512xf32> to vector<32x512xf32>
    %120 = vector.extract_strided_slice %118 {offsets = [32, 0], sizes = [1, 512], strides = [1, 1]} : vector<33x512xf32> to vector<1x512xf32>
    %121 = math.absf %120 : vector<1x512xf32>
    %122 = vector.extract_strided_slice %7 {offsets = [0, 3072], sizes = [33, 512], strides = [1, 1]} : vector<33x6656xf32> to vector<33x512xf32>
    %123 = vector.extract_strided_slice %122 {offsets = [0, 0], sizes = [32, 512], strides = [1, 1]} : vector<33x512xf32> to vector<32x512xf32>
    %124 = vector.extract_strided_slice %122 {offsets = [32, 0], sizes = [1, 512], strides = [1, 1]} : vector<33x512xf32> to vector<1x512xf32>
    %125 = math.absf %124 : vector<1x512xf32>
    %126 = vector.extract_strided_slice %15 {offsets = [0, 0], sizes = [32, 512], strides = [1, 1]} : vector<32x1536xf32> to vector<32x512xf32>
    %127 = arith.addf %119, %126 : vector<32x512xf32>
    %128 = arith.subf %127, %123 : vector<32x512xf32>
    %129 = arith.mulf %128, %128 : vector<32x512xf32>
    %cst_30 = arith.constant dense<0.000000e+00> : vector<512xf32>
    %130 = vector.multi_reduction <add>, %129, %cst_30 [0] : vector<32x512xf32> to vector<512xf32>
    %131 = vector.shape_cast %130 : vector<512xf32> to vector<1x512xf32>
    %132 = math.sqrt %131 : vector<1x512xf32>
    %133 = arith.addf %132, %121 : vector<1x512xf32>
    %134 = arith.subf %133, %125 : vector<1x512xf32>
    %cst_31 = arith.constant 0.000000e+00 : f32
    %135 = vector.broadcast %cst_31 : f32 to vector<1x512xf32>
    %136 = arith.subf %134, %135 : vector<1x512xf32>
    %cst_32 = arith.constant 0.000000e+00 : f32
    %137 = vector.broadcast %cst_32 : f32 to vector<1x512xf32>
    %138 = arith.maximumf %136, %137 : vector<1x512xf32>
    %139 = arith.mulf %119, %119 : vector<32x512xf32>
    %cst_33 = arith.constant dense<0.000000e+00> : vector<512xf32>
    %140 = vector.multi_reduction <add>, %139, %cst_33 [0] : vector<32x512xf32> to vector<512xf32>
    %141 = vector.shape_cast %140 : vector<512xf32> to vector<1x512xf32>
    %142 = math.sqrt %141 : vector<1x512xf32>
    %cst_34 = arith.constant 1.000000e+00 : f32
    %143 = vector.broadcast %cst_34 : f32 to vector<1x512xf32>
    %144 = arith.subf %142, %143 : vector<1x512xf32>
    %145 = math.absf %144 : vector<1x512xf32>
    %146 = arith.addf %138, %145 : vector<1x512xf32>
    %147 = arith.mulf %123, %123 : vector<32x512xf32>
    %cst_35 = arith.constant dense<0.000000e+00> : vector<512xf32>
    %148 = vector.multi_reduction <add>, %147, %cst_35 [0] : vector<32x512xf32> to vector<512xf32>
    %149 = vector.shape_cast %148 : vector<512xf32> to vector<1x512xf32>
    %150 = math.sqrt %149 : vector<1x512xf32>
    %cst_36 = arith.constant 1.000000e+00 : f32
    %151 = vector.broadcast %cst_36 : f32 to vector<1x512xf32>
    %152 = arith.subf %150, %151 : vector<1x512xf32>
    %153 = math.absf %152 : vector<1x512xf32>
    %154 = arith.addf %146, %153 : vector<1x512xf32>
    %155 = vector.extract_strided_slice %7 {offsets = [0, 3584], sizes = [33, 512], strides = [1, 1]} : vector<33x6656xf32> to vector<33x512xf32>
    %156 = vector.extract_strided_slice %155 {offsets = [0, 0], sizes = [32, 512], strides = [1, 1]} : vector<33x512xf32> to vector<32x512xf32>
    %157 = vector.extract_strided_slice %155 {offsets = [32, 0], sizes = [1, 512], strides = [1, 1]} : vector<33x512xf32> to vector<1x512xf32>
    %158 = math.absf %157 : vector<1x512xf32>
    %159 = vector.extract_strided_slice %7 {offsets = [0, 4096], sizes = [33, 512], strides = [1, 1]} : vector<33x6656xf32> to vector<33x512xf32>
    %160 = vector.extract_strided_slice %159 {offsets = [0, 0], sizes = [32, 512], strides = [1, 1]} : vector<33x512xf32> to vector<32x512xf32>
    %161 = vector.extract_strided_slice %159 {offsets = [32, 0], sizes = [1, 512], strides = [1, 1]} : vector<33x512xf32> to vector<1x512xf32>
    %162 = math.absf %161 : vector<1x512xf32>
    %163 = vector.extract_strided_slice %15 {offsets = [0, 512], sizes = [32, 512], strides = [1, 1]} : vector<32x1536xf32> to vector<32x512xf32>
    %164 = arith.subf %156, %163 : vector<32x512xf32>
    %165 = arith.subf %164, %160 : vector<32x512xf32>
    %166 = arith.mulf %165, %165 : vector<32x512xf32>
    %cst_37 = arith.constant dense<0.000000e+00> : vector<512xf32>
    %167 = vector.multi_reduction <add>, %166, %cst_37 [0] : vector<32x512xf32> to vector<512xf32>
    %168 = vector.shape_cast %167 : vector<512xf32> to vector<1x512xf32>
    %169 = math.sqrt %168 : vector<1x512xf32>
    %170 = arith.subf %162, %158 : vector<1x512xf32>
    %171 = arith.subf %169, %170 : vector<1x512xf32>
    %cst_38 = arith.constant 0.000000e+00 : f32
    %172 = vector.broadcast %cst_38 : f32 to vector<1x512xf32>
    %173 = arith.subf %171, %172 : vector<1x512xf32>
    %cst_39 = arith.constant 0.000000e+00 : f32
    %174 = vector.broadcast %cst_39 : f32 to vector<1x512xf32>
    %175 = arith.maximumf %173, %174 : vector<1x512xf32>
    %176 = arith.mulf %156, %156 : vector<32x512xf32>
    %cst_40 = arith.constant dense<0.000000e+00> : vector<512xf32>
    %177 = vector.multi_reduction <add>, %176, %cst_40 [0] : vector<32x512xf32> to vector<512xf32>
    %178 = vector.shape_cast %177 : vector<512xf32> to vector<1x512xf32>
    %179 = math.sqrt %178 : vector<1x512xf32>
    %cst_41 = arith.constant 1.000000e+00 : f32
    %180 = vector.broadcast %cst_41 : f32 to vector<1x512xf32>
    %181 = arith.subf %179, %180 : vector<1x512xf32>
    %182 = math.absf %181 : vector<1x512xf32>
    %183 = arith.addf %175, %182 : vector<1x512xf32>
    %184 = arith.mulf %160, %160 : vector<32x512xf32>
    %cst_42 = arith.constant dense<0.000000e+00> : vector<512xf32>
    %185 = vector.multi_reduction <add>, %184, %cst_42 [0] : vector<32x512xf32> to vector<512xf32>
    %186 = vector.shape_cast %185 : vector<512xf32> to vector<1x512xf32>
    %187 = math.sqrt %186 : vector<1x512xf32>
    %cst_43 = arith.constant 1.000000e+00 : f32
    %188 = vector.broadcast %cst_43 : f32 to vector<1x512xf32>
    %189 = arith.subf %187, %188 : vector<1x512xf32>
    %190 = math.absf %189 : vector<1x512xf32>
    %191 = arith.addf %183, %190 : vector<1x512xf32>
    %192 = vector.extract_strided_slice %7 {offsets = [0, 4608], sizes = [33, 512], strides = [1, 1]} : vector<33x6656xf32> to vector<33x512xf32>
    %193 = vector.extract_strided_slice %192 {offsets = [0, 0], sizes = [32, 512], strides = [1, 1]} : vector<33x512xf32> to vector<32x512xf32>
    %194 = vector.extract_strided_slice %192 {offsets = [32, 0], sizes = [1, 512], strides = [1, 1]} : vector<33x512xf32> to vector<1x512xf32>
    %195 = math.absf %194 : vector<1x512xf32>
    %196 = vector.extract_strided_slice %7 {offsets = [0, 5120], sizes = [33, 512], strides = [1, 1]} : vector<33x6656xf32> to vector<33x512xf32>
    %197 = vector.extract_strided_slice %196 {offsets = [0, 0], sizes = [32, 512], strides = [1, 1]} : vector<33x512xf32> to vector<32x512xf32>
    %198 = vector.extract_strided_slice %196 {offsets = [32, 0], sizes = [1, 512], strides = [1, 1]} : vector<33x512xf32> to vector<1x512xf32>
    %199 = math.absf %198 : vector<1x512xf32>
    %200 = arith.addf %195, %199 : vector<1x512xf32>
    %201 = arith.subf %197, %193 : vector<32x512xf32>
    %202 = arith.mulf %201, %201 : vector<32x512xf32>
    %cst_44 = arith.constant dense<0.000000e+00> : vector<512xf32>
    %203 = vector.multi_reduction <add>, %202, %cst_44 [0] : vector<32x512xf32> to vector<512xf32>
    %204 = vector.shape_cast %203 : vector<512xf32> to vector<1x512xf32>
    %205 = math.sqrt %204 : vector<1x512xf32>
    %206 = arith.subf %200, %205 : vector<1x512xf32>
    %cst_45 = arith.constant 0.000000e+00 : f32
    %207 = vector.broadcast %cst_45 : f32 to vector<1x512xf32>
    %208 = arith.addf %206, %207 : vector<1x512xf32>
    %cst_46 = arith.constant 0.000000e+00 : f32
    %209 = vector.broadcast %cst_46 : f32 to vector<1x512xf32>
    %210 = arith.maximumf %208, %209 : vector<1x512xf32>
    %211 = arith.mulf %193, %193 : vector<32x512xf32>
    %cst_47 = arith.constant dense<0.000000e+00> : vector<512xf32>
    %212 = vector.multi_reduction <add>, %211, %cst_47 [0] : vector<32x512xf32> to vector<512xf32>
    %213 = vector.shape_cast %212 : vector<512xf32> to vector<1x512xf32>
    %214 = math.sqrt %213 : vector<1x512xf32>
    %cst_48 = arith.constant 1.000000e+00 : f32
    %215 = vector.broadcast %cst_48 : f32 to vector<1x512xf32>
    %216 = arith.subf %214, %215 : vector<1x512xf32>
    %217 = math.absf %216 : vector<1x512xf32>
    %218 = arith.addf %210, %217 : vector<1x512xf32>
    %219 = arith.mulf %197, %197 : vector<32x512xf32>
    %cst_49 = arith.constant dense<0.000000e+00> : vector<512xf32>
    %220 = vector.multi_reduction <add>, %219, %cst_49 [0] : vector<32x512xf32> to vector<512xf32>
    %221 = vector.shape_cast %220 : vector<512xf32> to vector<1x512xf32>
    %222 = math.sqrt %221 : vector<1x512xf32>
    %cst_50 = arith.constant 1.000000e+00 : f32
    %223 = vector.broadcast %cst_50 : f32 to vector<1x512xf32>
    %224 = arith.subf %222, %223 : vector<1x512xf32>
    %225 = math.absf %224 : vector<1x512xf32>
    %226 = arith.addf %218, %225 : vector<1x512xf32>
    %227 = vector.extract_strided_slice %7 {offsets = [0, 5632], sizes = [33, 512], strides = [1, 1]} : vector<33x6656xf32> to vector<33x512xf32>
    %228 = vector.extract_strided_slice %227 {offsets = [0, 0], sizes = [32, 512], strides = [1, 1]} : vector<33x512xf32> to vector<32x512xf32>
    %229 = vector.extract_strided_slice %227 {offsets = [32, 0], sizes = [1, 512], strides = [1, 1]} : vector<33x512xf32> to vector<1x512xf32>
    %230 = math.absf %229 : vector<1x512xf32>
    %231 = vector.extract_strided_slice %7 {offsets = [0, 6144], sizes = [33, 512], strides = [1, 1]} : vector<33x6656xf32> to vector<33x512xf32>
    %232 = vector.extract_strided_slice %231 {offsets = [0, 0], sizes = [32, 512], strides = [1, 1]} : vector<33x512xf32> to vector<32x512xf32>
    %233 = vector.extract_strided_slice %231 {offsets = [32, 0], sizes = [1, 512], strides = [1, 1]} : vector<33x512xf32> to vector<1x512xf32>
    %234 = math.absf %233 : vector<1x512xf32>
    %235 = vector.extract_strided_slice %15 {offsets = [0, 1024], sizes = [32, 512], strides = [1, 1]} : vector<32x1536xf32> to vector<32x512xf32>
    %236 = arith.addf %228, %235 : vector<32x512xf32>
    %237 = arith.subf %236, %232 : vector<32x512xf32>
    %238 = arith.mulf %237, %237 : vector<32x512xf32>
    %cst_51 = arith.constant dense<0.000000e+00> : vector<512xf32>
    %239 = vector.multi_reduction <add>, %238, %cst_51 [0] : vector<32x512xf32> to vector<512xf32>
    %240 = vector.shape_cast %239 : vector<512xf32> to vector<1x512xf32>
    %241 = math.sqrt %240 : vector<1x512xf32>
    %242 = arith.subf %241, %230 : vector<1x512xf32>
    %243 = arith.subf %242, %234 : vector<1x512xf32>
    %cst_52 = arith.constant 0.000000e+00 : f32
    %244 = vector.broadcast %cst_52 : f32 to vector<1x512xf32>
    %245 = arith.subf %244, %243 : vector<1x512xf32>
    %cst_53 = arith.constant 0.000000e+00 : f32
    %246 = vector.broadcast %cst_53 : f32 to vector<1x512xf32>
    %247 = arith.addf %245, %246 : vector<1x512xf32>
    %248 = arith.mulf %228, %228 : vector<32x512xf32>
    %cst_54 = arith.constant dense<0.000000e+00> : vector<512xf32>
    %249 = vector.multi_reduction <add>, %248, %cst_54 [0] : vector<32x512xf32> to vector<512xf32>
    %250 = vector.shape_cast %249 : vector<512xf32> to vector<1x512xf32>
    %251 = math.sqrt %250 : vector<1x512xf32>
    %cst_55 = arith.constant 1.000000e+00 : f32
    %252 = vector.broadcast %cst_55 : f32 to vector<1x512xf32>
    %253 = arith.subf %251, %252 : vector<1x512xf32>
    %254 = math.absf %253 : vector<1x512xf32>
    %255 = arith.addf %247, %254 : vector<1x512xf32>
    %256 = arith.mulf %232, %232 : vector<32x512xf32>
    %cst_56 = arith.constant dense<0.000000e+00> : vector<512xf32>
    %257 = vector.multi_reduction <add>, %256, %cst_56 [0] : vector<32x512xf32> to vector<512xf32>
    %258 = vector.shape_cast %257 : vector<512xf32> to vector<1x512xf32>
    %259 = math.sqrt %258 : vector<1x512xf32>
    %cst_57 = arith.constant 1.000000e+00 : f32
    %260 = vector.broadcast %cst_57 : f32 to vector<1x512xf32>
    %261 = arith.subf %259, %260 : vector<1x512xf32>
    %262 = math.absf %261 : vector<1x512xf32>
    %263 = arith.addf %255, %262 : vector<1x512xf32>
    %264 = arith.addf %50, %117 : vector<1x512xf32>
    %265 = arith.addf %264, %154 : vector<1x512xf32>
    %266 = arith.addf %265, %191 : vector<1x512xf32>
    %267 = arith.addf %266, %226 : vector<1x512xf32>
    %268 = arith.addf %267, %263 : vector<1x512xf32>
    %269 = vector.shape_cast %268 : vector<1x512xf32> to vector<1x1x512xf32>
    %cst_58 = arith.constant dense<0.000000e+00> : vector<1xf32>
    %270 = vector.multi_reduction <add>, %269, %cst_58 [1, 2] : vector<1x1x512xf32> to vector<1xf32>
    %271 = vector.shape_cast %270 : vector<1xf32> to vector<1x1x1xf32>
    %272 = vector.extract %271[0, 0, 0] : f32 from vector<1x1x1xf32>
    %cst_59 = arith.constant 5.120000e+02 : f32
    %273 = arith.divf %272, %cst_59 : f32
    %c0_60 = arith.constant 0 : index
    %c0_61 = arith.constant 0 : index
    %274 = memref.load %arg4[%c0_60, %c0_61] : memref<1x1xf32, #tpu.memory_space<smem>>
    memref.store %273, %arg4[%c0_60, %c0_61] : memref<1x1xf32, #tpu.memory_space<smem>>
    return
  }
}

</mosaic_0001>

<llo_original>
// kernel: elem_forward.3
$region0: #{elem_forward.3}
  #allocation0 [shape = 'u32[]', space=smem, size = 0x4, offset = 0x4, fixed_abs, tag = 'smem constant byte address 0x4 - core index']
  #allocation1 [shape = 'u32[72,128]{1,0:T(1,128)}', space=vmem, size = 0x9000, scoped, tag = 'internal scratch']
  %s0 = inlined_call_operand.vmem [shape: f32[33,20], index: 0, kind: input, shape index: {}]
  %s1 = inlined_call_operand.vmem [shape: f32[32,5], index: 1, kind: input, shape index: {}]
  %s2 = inlined_call_operand.vmem [shape: s32[1,6656], index: 2, kind: input, shape index: {}]
  %s3 = inlined_call_operand.vmem [shape: s32[1,1536], index: 3, kind: input, shape index: {}]
  %s4 = inlined_call_operand.hbm [shape: f32[1,1], index: 4, kind: output, shape index: {}]
  %s5 = sld [smem:[#allocation0]]
  $region26: #{elem_forward.3} parent=0
    _
  %s7 = ssub.s32 1, %s5
  %s8 = scalar_select 0, %s7, %s5
  $region1: #{elem_forward.3} parent=0
    #allocation2 [shape = 'u8[512]{0}', space=smem, size = 0x200, scoped, tag = 'output window, operand 0, single buffered']
    #allocation3 [shape = 's32[1]{0}', space=sflag, size = 0x4, scoped, tag = 'scoped memory for elem_forward.3']
    %9 = vsyncpa [#allocation3], 0
    // Predicated region
    $region2: #{elem_forward.3} parent=1 // pred_check
      _
    $region3: #{elem_forward.3} parent=1 // pred_check_branch
      %11 = sbr.rel (0) target = $region5
    $region4: #{elem_forward.3} parent=1 // pred_region
      _
    $region5: #{elem_forward.3} parent=1 // pred_fallthru
      _
    // Predicated region
    $region6: #{elem_forward.3} parent=1 // pred_check
      _
    $region7: #{elem_forward.3} parent=1 // pred_check_branch
      %13 = sbr.rel (0) target = $region9
    $region8: #{elem_forward.3} parent=1 // pred_region
      _
    $region9: #{elem_forward.3} parent=1 // pred_fallthru
      _
    // Predicated region
    $region10: #{elem_forward.3} parent=1 // pred_check
      _
    $region11: #{elem_forward.3} parent=1 // pred_check_branch
      %15 = sbr.rel (0) target = $region13
    $region12: #{elem_forward.3} parent=1 // pred_region
      _
    $region13: #{elem_forward.3} parent=1 // pred_fallthru
      _
    // Predicated region
    $region14: #{elem_forward.3} parent=1 // pred_check
      _
    $region15: #{elem_forward.3} parent=1 // pred_check_branch
      %17 = sbr.rel (0) target = $region17
    $region16: #{elem_forward.3} parent=1 // pred_region
      _
    $region17: #{elem_forward.3} parent=1 // pred_fallthru
      _
    %v18 = vld [vmem:[%s2] sm:$0xff]
    %v19 = vld [vmem:[%s2 + $0x8] sm:$0xff]
    %v20 = vld [vmem:[%s2 + $0x10] sm:$0xff]
    %v21 = vld [vmem:[%s2 + $0x18] sm:$0xff]
    %v22 = vld [vmem:[%s2 + $0x20] sm:$0xff]
    %v23 = vld [vmem:[%s2 + $0x28] sm:$0xff]
    %v24 = vld [vmem:[%s2 + $0x30] sm:$0xf]
    %v25 = vlaneseq
    %v26 = vshrl.u32 %v25, 7
    %v27 = vadd.s32 %v26, 8
    %v28 = vadd.s32 %v26, 16
    %v29 = vperm.slane %v18, 0
    %v30 = vperm.slane %v18, 1
    %v31 = vperm.slane %v18, 2
    %v32 = vperm.slane %v18, 3
    %v33 = vperm.slane %v18, 4
    %v34 = vperm.slane %v18, 5
    %v35 = vperm.slane %v18, 6
    %v36 = vperm.slane %v18, 7
    %v37 = vperm.slane %v19, 0
    %v38 = vperm.slane %v19, 1
    %v39 = vperm.slane %v19, 2
    %v40 = vperm.slane %v19, 3
    %v41 = vperm.slane %v19, 4
    %v42 = vperm.slane %v19, 5
    %v43 = vperm.slane %v19, 6
    %v44 = vperm.slane %v19, 7
    %v45 = vperm.slane %v20, 0
    %v46 = vperm.slane %v20, 1
    %v47 = vperm.slane %v20, 2
    %v48 = vperm.slane %v20, 3
    %v49 = vperm.slane %v20, 4
    %v50 = vperm.slane %v20, 5
    %v51 = vperm.slane %v20, 6
    %v52 = vperm.slane %v20, 7
    %v53 = vperm.slane %v21, 0
    %v54 = vperm.slane %v21, 1
    %v55 = vperm.slane %v21, 2
    %v56 = vperm.slane %v21, 3
    %v57 = vperm.slane %v21, 4
    %v58 = vperm.slane %v21, 5
    %v59 = vperm.slane %v21, 6
    %v60 = vperm.slane %v21, 7
    %v61 = vperm.slane %v22, 0
    %v62 = vperm.slane %v22, 1
    %v63 = vperm.slane %v22, 2
    %v64 = vperm.slane %v22, 3
    %v65 = vperm.slane %v22, 4
    %v66 = vperm.slane %v22, 5
    %v67 = vperm.slane %v22, 6
    %v68 = vperm.slane %v22, 7
    %v69 = vperm.slane %v23, 0
    %v70 = vperm.slane %v23, 1
    %v71 = vperm.slane %v23, 2
    %v72 = vperm.slane %v23, 3
    %v73 = vperm.slane %v23, 4
    %v74 = vperm.slane %v23, 5
    %v75 = vperm.slane %v23, 6
    %v76 = vperm.slane %v23, 7
    %v77 = vperm.slane %v24, 0
    %v78 = vperm.slane %v24, 1
    %v79 = vperm.slane %v24, 2
    %v80 = vperm.slane %v24, 3
    %vm81 = vcmp.eq.s32.totalorder %v26, %v29
    %vm82 = vcmp.eq.s32.totalorder %v26, %v30
    %vm83 = vcmp.eq.s32.totalorder %v26, %v31
    %vm84 = vcmp.eq.s32.totalorder %v26, %v32
    %vm85 = vcmp.eq.s32.totalorder %v26, %v33
    %vm86 = vcmp.eq.s32.totalorder %v26, %v34
    %vm87 = vcmp.eq.s32.totalorder %v26, %v35
    %vm88 = vcmp.eq.s32.totalorder %v26, %v36
    %vm89 = vcmp.eq.s32.totalorder %v26, %v37
    %vm90 = vcmp.eq.s32.totalorder %v26, %v38
    %vm91 = vcmp.eq.s32.totalorder %v26, %v39
    %vm92 = vcmp.eq.s32.totalorder %v26, %v40
    %vm93 = vcmp.eq.s32.totalorder %v26, %v41
    %vm94 = vcmp.eq.s32.totalorder %v26, %v42
    %vm95 = vcmp.eq.s32.totalorder %v26, %v43
    %vm96 = vcmp.eq.s32.totalorder %v26, %v44
    %vm97 = vcmp.eq.s32.totalorder %v26, %v45
    %vm98 = vcmp.eq.s32.totalorder %v26, %v46
    %vm99 = vcmp.eq.s32.totalorder %v26, %v47
    %vm100 = vcmp.eq.s32.totalorder %v26, %v48
    %vm101 = vcmp.eq.s32.totalorder %v26, %v49
    %vm102 = vcmp.eq.s32.totalorder %v26, %v50
    %vm103 = vcmp.eq.s32.totalorder %v26, %v51
    %vm104 = vcmp.eq.s32.totalorder %v26, %v52
    %vm105 = vcmp.eq.s32.totalorder %v26, %v53
    %vm106 = vcmp.eq.s32.totalorder %v26, %v54
    %vm107 = vcmp.eq.s32.totalorder %v26, %v55
    %vm108 = vcmp.eq.s32.totalorder %v26, %v56
    %vm109 = vcmp.eq.s32.totalorder %v26, %v57
    %vm110 = vcmp.eq.s32.totalorder %v26, %v58
    %vm111 = vcmp.eq.s32.totalorder %v26, %v59
    %vm112 = vcmp.eq.s32.totalorder %v26, %v60
    %vm113 = vcmp.eq.s32.totalorder %v26, %v61
    %vm114 = vcmp.eq.s32.totalorder %v26, %v62
    %vm115 = vcmp.eq.s32.totalorder %v26, %v63
    %vm116 = vcmp.eq.s32.totalorder %v26, %v64
    %vm117 = vcmp.eq.s32.totalorder %v26, %v65
    %vm118 = vcmp.eq.s32.totalorder %v26, %v66
    %vm119 = vcmp.eq.s32.totalorder %v26, %v67
    %vm120 = vcmp.eq.s32.totalorder %v26, %v68
    %vm121 = vcmp.eq.s32.totalorder %v26, %v69
    %vm122 = vcmp.eq.s32.totalorder %v26, %v70
    %vm123 = vcmp.eq.s32.totalorder %v26, %v71
    %vm124 = vcmp.eq.s32.totalorder %v26, %v72
    %vm125 = vcmp.eq.s32.totalorder %v26, %v73
    %vm126 = vcmp.eq.s32.totalorder %v26, %v74
    %vm127 = vcmp.eq.s32.totalorder %v26, %v75
    %vm128 = vcmp.eq.s32.totalorder %v26, %v76
    %vm129 = vcmp.eq.s32.totalorder %v26, %v77
    %vm130 = vcmp.eq.s32.totalorder %v26, %v78
    %vm131 = vcmp.eq.s32.totalorder %v26, %v79
    %vm132 = vcmp.eq.s32.totalorder %v26, %v80
    %vm133 = vcmp.eq.s32.totalorder %v27, %v29
    %vm134 = vcmp.eq.s32.totalorder %v27, %v30
    %vm135 = vcmp.eq.s32.totalorder %v27, %v31
    %vm136 = vcmp.eq.s32.totalorder %v27, %v32
    %vm137 = vcmp.eq.s32.totalorder %v27, %v33
    %vm138 = vcmp.eq.s32.totalorder %v27, %v34
    %vm139 = vcmp.eq.s32.totalorder %v27, %v35
    %vm140 = vcmp.eq.s32.totalorder %v27, %v36
    %vm141 = vcmp.eq.s32.totalorder %v27, %v37
    %vm142 = vcmp.eq.s32.totalorder %v27, %v38
    %vm143 = vcmp.eq.s32.totalorder %v27, %v39
    %vm144 = vcmp.eq.s32.totalorder %v27, %v40
    %vm145 = vcmp.eq.s32.totalorder %v27, %v41
    %vm146 = vcmp.eq.s32.totalorder %v27, %v42
    %vm147 = vcmp.eq.s32.totalorder %v27, %v43
    %vm148 = vcmp.eq.s32.totalorder %v27, %v44
    %vm149 = vcmp.eq.s32.totalorder %v27, %v45
    %vm150 = vcmp.eq.s32.totalorder %v27, %v46
    %vm151 = vcmp.eq.s32.totalorder %v27, %v47
    %vm152 = vcmp.eq.s32.totalorder %v27, %v48
    %vm153 = vcmp.eq.s32.totalorder %v27, %v49
    %vm154 = vcmp.eq.s32.totalorder %v27, %v50
    %vm155 = vcmp.eq.s32.totalorder %v27, %v51
    %vm156 = vcmp.eq.s32.totalorder %v27, %v52
    %vm157 = vcmp.eq.s32.totalorder %v27, %v53
    %vm158 = vcmp.eq.s32.totalorder %v27, %v54
    %vm159 = vcmp.eq.s32.totalorder %v27, %v55
    %vm160 = vcmp.eq.s32.totalorder %v27, %v56
    %vm161 = vcmp.eq.s32.totalorder %v27, %v57
    %vm162 = vcmp.eq.s32.totalorder %v27, %v58
    %vm163 = vcmp.eq.s32.totalorder %v27, %v59
    %vm164 = vcmp.eq.s32.totalorder %v27, %v60
    %vm165 = vcmp.eq.s32.totalorder %v27, %v61
    %vm166 = vcmp.eq.s32.totalorder %v27, %v62
    %vm167 = vcmp.eq.s32.totalorder %v27, %v63
    %vm168 = vcmp.eq.s32.totalorder %v27, %v64
    %vm169 = vcmp.eq.s32.totalorder %v27, %v65
    %vm170 = vcmp.eq.s32.totalorder %v27, %v66
    %vm171 = vcmp.eq.s32.totalorder %v27, %v67
    %vm172 = vcmp.eq.s32.totalorder %v27, %v68
    %vm173 = vcmp.eq.s32.totalorder %v27, %v69
    %vm174 = vcmp.eq.s32.totalorder %v27, %v70
    %vm175 = vcmp.eq.s32.totalorder %v27, %v71
    %vm176 = vcmp.eq.s32.totalorder %v27, %v72
    %vm177 = vcmp.eq.s32.totalorder %v27, %v73
    %vm178 = vcmp.eq.s32.totalorder %v27, %v74
    %vm179 = vcmp.eq.s32.totalorder %v27, %v75
    %vm180 = vcmp.eq.s32.totalorder %v27, %v76
    %vm181 = vcmp.eq.s32.totalorder %v27, %v77
    %vm182 = vcmp.eq.s32.totalorder %v27, %v78
    %vm183 = vcmp.eq.s32.totalorder %v27, %v79
    %vm184 = vcmp.eq.s32.totalorder %v27, %v80
    %vm185 = vcmp.eq.s32.totalorder %v28, %v29
    %vm186 = vcmp.eq.s32.totalorder %v28, %v30
    %vm187 = vcmp.eq.s32.totalorder %v28, %v31
    %vm188 = vcmp.eq.s32.totalorder %v28, %v32
    %vm189 = vcmp.eq.s32.totalorder %v28, %v33
    %vm190 = vcmp.eq.s32.totalorder %v28, %v34
    %vm191 = vcmp.eq.s32.totalorder %v28, %v35
    %vm192 = vcmp.eq.s32.totalorder %v28, %v36
    %vm193 = vcmp.eq.s32.totalorder %v28, %v37
    %vm194 = vcmp.eq.s32.totalorder %v28, %v38
    %vm195 = vcmp.eq.s32.totalorder %v28, %v39
    %vm196 = vcmp.eq.s32.totalorder %v28, %v40
    %vm197 = vcmp.eq.s32.totalorder %v28, %v41
    %vm198 = vcmp.eq.s32.totalorder %v28, %v42
    %vm199 = vcmp.eq.s32.totalorder %v28, %v43
    %vm200 = vcmp.eq.s32.totalorder %v28, %v44
    %vm201 = vcmp.eq.s32.totalorder %v28, %v45
    %vm202 = vcmp.eq.s32.totalorder %v28, %v46
    %vm203 = vcmp.eq.s32.totalorder %v28, %v47
    %vm204 = vcmp.eq.s32.totalorder %v28, %v48
    %vm205 = vcmp.eq.s32.totalorder %v28, %v49
    %vm206 = vcmp.eq.s32.totalorder %v28, %v50
    %vm207 = vcmp.eq.s32.totalorder %v28, %v51
    %vm208 = vcmp.eq.s32.totalorder %v28, %v52
    %vm209 = vcmp.eq.s32.totalorder %v28, %v53
    %vm210 = vcmp.eq.s32.totalorder %v28, %v54
    %vm211 = vcmp.eq.s32.totalorder %v28, %v55
    %vm212 = vcmp.eq.s32.totalorder %v28, %v56
    %vm213 = vcmp.eq.s32.totalorder %v28, %v57
    %vm214 = vcmp.eq.s32.totalorder %v28, %v58
    %vm215 = vcmp.eq.s32.totalorder %v28, %v59
    %vm216 = vcmp.eq.s32.totalorder %v28, %v60
    %vm217 = vcmp.eq.s32.totalorder %v28, %v61
    %vm218 = vcmp.eq.s32.totalorder %v28, %v62
    %vm219 = vcmp.eq.s32.totalorder %v28, %v63
    %vm220 = vcmp.eq.s32.totalorder %v28, %v64
    %vm221 = vcmp.eq.s32.totalorder %v28, %v65
    %vm222 = vcmp.eq.s32.totalorder %v28, %v66
    %vm223 = vcmp.eq.s32.totalorder %v28, %v67
    %vm224 = vcmp.eq.s32.totalorder %v28, %v68
    %vm225 = vcmp.eq.s32.totalorder %v28, %v69
    %vm226 = vcmp.eq.s32.totalorder %v28, %v70
    %vm227 = vcmp.eq.s32.totalorder %v28, %v71
    %vm228 = vcmp.eq.s32.totalorder %v28, %v72
    %vm229 = vcmp.eq.s32.totalorder %v28, %v73
    %vm230 = vcmp.eq.s32.totalorder %v28, %v74
    %vm231 = vcmp.eq.s32.totalorder %v28, %v75
    %vm232 = vcmp.eq.s32.totalorder %v28, %v76
    %vm233 = vcmp.eq.s32.totalorder %v28, %v77
    %vm234 = vcmp.eq.s32.totalorder %v28, %v78
    %vm235 = vcmp.eq.s32.totalorder %v28, %v79
    %vm236 = vcmp.eq.s32.totalorder %v28, %v80
    %v237 = vsel %vm81, 1, 0
    %v238 = vsel %vm82, 1, 0
    %v239 = vsel %vm83, 1, 0
    %v240 = vsel %vm84, 1, 0
    %v241 = vsel %vm85, 1, 0
    %v242 = vsel %vm86, 1, 0
    %v243 = vsel %vm87, 1, 0
    %v244 = vsel %vm88, 1, 0
    %v245 = vsel %vm89, 1, 0
    %v246 = vsel %vm90, 1, 0
    %v247 = vsel %vm91, 1, 0
    %v248 = vsel %vm92, 1, 0
    %v249 = vsel %vm93, 1, 0
    %v250 = vsel %vm94, 1, 0
    %v251 = vsel %vm95, 1, 0
    %v252 = vsel %vm96, 1, 0
    %v253 = vsel %vm97, 1, 0
    %v254 = vsel %vm98, 1, 0
    %v255 = vsel %vm99, 1, 0
    %v256 = vsel %vm100, 1, 0
    %v257 = vsel %vm101, 1, 0
    %v258 = vsel %vm102, 1, 0
    %v259 = vsel %vm103, 1, 0
    %v260 = vsel %vm104, 1, 0
    %v261 = vsel %vm105, 1, 0
    %v262 = vsel %vm106, 1, 0
    %v263 = vsel %vm107, 1, 0
    %v264 = vsel %vm108, 1, 0
    %v265 = vsel %vm109, 1, 0
    %v266 = vsel %vm110, 1, 0
    %v267 = vsel %vm111, 1, 0
    %v268 = vsel %vm112, 1, 0
    %v269 = vsel %vm113, 1, 0
    %v270 = vsel %vm114, 1, 0
    %v271 = vsel %vm115, 1, 0
    %v272 = vsel %vm116, 1, 0
    %v273 = vsel %vm117, 1, 0
    %v274 = vsel %vm118, 1, 0
    %v275 = vsel %vm119, 1, 0
    %v276 = vsel %vm120, 1, 0
    %v277 = vsel %vm121, 1, 0
    %v278 = vsel %vm122, 1, 0
    %v279 = vsel %vm123, 1, 0
    %v280 = vsel %vm124, 1, 0
    %v281 = vsel %vm125, 1, 0
    %v282 = vsel %vm126, 1, 0
    %v283 = vsel %vm127, 1, 0
    %v284 = vsel %vm128, 1, 0
    %v285 = vsel %vm129, 1, 0
    %v286 = vsel %vm130, 1, 0
    %v287 = vsel %vm131, 1, 0
    %v288 = vsel %vm132, 1, 0
    %v289 = vsel %vm133, 1, 0
    %v290 = vsel %vm134, 1, 0
    %v291 = vsel %vm135, 1, 0
    %v292 = vsel %vm136, 1, 0
    %v293 = vsel %vm137, 1, 0
    %v294 = vsel %vm138, 1, 0
    %v295 = vsel %vm139, 1, 0
    %v296 = vsel %vm140, 1, 0
    %v297 = vsel %vm141, 1, 0
    %v298 = vsel %vm142, 1, 0
    %v299 = vsel %vm143, 1, 0
    %v300 = vsel %vm144, 1, 0
    %v301 = vsel %vm145, 1, 0
    %v302 = vsel %vm146, 1, 0
    %v303 = vsel %vm147, 1, 0
    %v304 = vsel %vm148, 1, 0
    %v305 = vsel %vm149, 1, 0
    %v306 = vsel %vm150, 1, 0
    %v307 = vsel %vm151, 1, 0
    %v308 = vsel %vm152, 1, 0
    %v309 = vsel %vm153, 1, 0
    %v310 = vsel %vm154, 1, 0
    %v311 = vsel %vm155, 1, 0
    %v312 = vsel %vm156, 1, 0
    %v313 = vsel %vm157, 1, 0
    %v314 = vsel %vm158, 1, 0
    %v315 = vsel %vm159, 1, 0
    %v316 = vsel %vm160, 1, 0
    %v317 = vsel %vm161, 1, 0
    %v318 = vsel %vm162, 1, 0
    %v319 = vsel %vm163, 1, 0
    %v320 = vsel %vm164, 1, 0
    %v321 = vsel %vm165, 1, 0
    %v322 = vsel %vm166, 1, 0
    %v323 = vsel %vm167, 1, 0
    %v324 = vsel %vm168, 1, 0
    %v325 = vsel %vm169, 1, 0
    %v326 = vsel %vm170, 1, 0
    %v327 = vsel %vm171, 1, 0
    %v328 = vsel %vm172, 1, 0
    %v329 = vsel %vm173, 1, 0
    %v330 = vsel %vm174, 1, 0
    %v331 = vsel %vm175, 1, 0
    %v332 = vsel %vm176, 1, 0
    %v333 = vsel %vm177, 1, 0
    %v334 = vsel %vm178, 1, 0
    %v335 = vsel %vm179, 1, 0
    %v336 = vsel %vm180, 1, 0
    %v337 = vsel %vm181, 1, 0
    %v338 = vsel %vm182, 1, 0
    %v339 = vsel %vm183, 1, 0
    %v340 = vsel %vm184, 1, 0
    %v341 = vsel %vm185, 1, 0
    %v342 = vsel %vm186, 1, 0
    %v343 = vsel %vm187, 1, 0
    %v344 = vsel %vm188, 1, 0
    %v345 = vsel %vm189, 1, 0
    %v346 = vsel %vm190, 1, 0
    %v347 = vsel %vm191, 1, 0
    %v348 = vsel %vm192, 1, 0
    %v349 = vsel %vm193, 1, 0
    %v350 = vsel %vm194, 1, 0
    %v351 = vsel %vm195, 1, 0
    %v352 = vsel %vm196, 1, 0
    %v353 = vsel %vm197, 1, 0
    %v354 = vsel %vm198, 1, 0
    %v355 = vsel %vm199, 1, 0
    %v356 = vsel %vm200, 1, 0
    %v357 = vsel %vm201, 1, 0
    %v358 = vsel %vm202, 1, 0
    %v359 = vsel %vm203, 1, 0
    %v360 = vsel %vm204, 1, 0
    %v361 = vsel %vm205, 1, 0
    %v362 = vsel %vm206, 1, 0
    %v363 = vsel %vm207, 1, 0
    %v364 = vsel %vm208, 1, 0
    %v365 = vsel %vm209, 1, 0
    %v366 = vsel %vm210, 1, 0
    %v367 = vsel %vm211, 1, 0
    %v368 = vsel %vm212, 1, 0
    %v369 = vsel %vm213, 1, 0
    %v370 = vsel %vm214, 1, 0
    %v371 = vsel %vm215, 1, 0
    %v372 = vsel %vm216, 1, 0
    %v373 = vsel %vm217, 1, 0
    %v374 = vsel %vm218, 1, 0
    %v375 = vsel %vm219, 1, 0
    %v376 = vsel %vm220, 1, 0
    %v377 = vsel %vm221, 1, 0
    %v378 = vsel %vm222, 1, 0
    %v379 = vsel %vm223, 1, 0
    %v380 = vsel %vm224, 1, 0
    %v381 = vsel %vm225, 1, 0
    %v382 = vsel %vm226, 1, 0
    %v383 = vsel %vm227, 1, 0
    %v384 = vsel %vm228, 1, 0
    %v385 = vsel %vm229, 1, 0
    %v386 = vsel %vm230, 1, 0
    %v387 = vsel %vm231, 1, 0
    %v388 = vsel %vm232, 1, 0
    %v389 = vsel %vm233, 1, 0
    %v390 = vsel %vm234, 1, 0
    %v391 = vsel %vm235, 1, 0
    %v392 = vsel %vm236, 1, 0
    %v393 = vcvt.s32.f32 %v237
    %v394 = vcvt.s32.f32 %v238
    %v395 = vcvt.s32.f32 %v239
    %v396 = vcvt.s32.f32 %v240
    %v397 = vcvt.s32.f32 %v241
    %v398 = vcvt.s32.f32 %v242
    %v399 = vcvt.s32.f32 %v243
    %v400 = vcvt.s32.f32 %v244
    %v401 = vcvt.s32.f32 %v245
    %v402 = vcvt.s32.f32 %v246
    %v403 = vcvt.s32.f32 %v247
    %v404 = vcvt.s32.f32 %v248
    %v405 = vcvt.s32.f32 %v249
    %v406 = vcvt.s32.f32 %v250
    %v407 = vcvt.s32.f32 %v251
    %v408 = vcvt.s32.f32 %v252
    %v409 = vcvt.s32.f32 %v253
    %v410 = vcvt.s32.f32 %v254
    %v411 = vcvt.s32.f32 %v255
    %v412 = vcvt.s32.f32 %v256
    %v413 = vcvt.s32.f32 %v257
    %v414 = vcvt.s32.f32 %v258
    %v415 = vcvt.s32.f32 %v259
    %v416 = vcvt.s32.f32 %v260
    %v417 = vcvt.s32.f32 %v261
    %v418 = vcvt.s32.f32 %v262
    %v419 = vcvt.s32.f32 %v263
    %v420 = vcvt.s32.f32 %v264
    %v421 = vcvt.s32.f32 %v265
    %v422 = vcvt.s32.f32 %v266
    %v423 = vcvt.s32.f32 %v267
    %v424 = vcvt.s32.f32 %v268
    %v425 = vcvt.s32.f32 %v269
    %v426 = vcvt.s32.f32 %v270
    %v427 = vcvt.s32.f32 %v271
    %v428 = vcvt.s32.f32 %v272
    %v429 = vcvt.s32.f32 %v273
    %v430 = vcvt.s32.f32 %v274
    %v431 = vcvt.s32.f32 %v275
    %v432 = vcvt.s32.f32 %v276
    %v433 = vcvt.s32.f32 %v277
    %v434 = vcvt.s32.f32 %v278
    %v435 = vcvt.s32.f32 %v279
    %v436 = vcvt.s32.f32 %v280
    %v437 = vcvt.s32.f32 %v281
    %v438 = vcvt.s32.f32 %v282
    %v439 = vcvt.s32.f32 %v283
    %v440 = vcvt.s32.f32 %v284
    %v441 = vcvt.s32.f32 %v285
    %v442 = vcvt.s32.f32 %v286
    %v443 = vcvt.s32.f32 %v287
    %v444 = vcvt.s32.f32 %v288
    %v445 = vcvt.s32.f32 %v289
    %v446 = vcvt.s32.f32 %v290
    %v447 = vcvt.s32.f32 %v291
    %v448 = vcvt.s32.f32 %v292
    %v449 = vcvt.s32.f32 %v293
    %v450 = vcvt.s32.f32 %v294
    %v451 = vcvt.s32.f32 %v295
    %v452 = vcvt.s32.f32 %v296
    %v453 = vcvt.s32.f32 %v297
    %v454 = vcvt.s32.f32 %v298
    %v455 = vcvt.s32.f32 %v299
    %v456 = vcvt.s32.f32 %v300
    %v457 = vcvt.s32.f32 %v301
    %v458 = vcvt.s32.f32 %v302
    %v459 = vcvt.s32.f32 %v303
    %v460 = vcvt.s32.f32 %v304
    %v461 = vcvt.s32.f32 %v305
    %v462 = vcvt.s32.f32 %v306
    %v463 = vcvt.s32.f32 %v307
    %v464 = vcvt.s32.f32 %v308
    %v465 = vcvt.s32.f32 %v309
    %v466 = vcvt.s32.f32 %v310
    %v467 = vcvt.s32.f32 %v311
    %v468 = vcvt.s32.f32 %v312
    %v469 = vcvt.s32.f32 %v313
    %v470 = vcvt.s32.f32 %v314
    %v471 = vcvt.s32.f32 %v315
    %v472 = vcvt.s32.f32 %v316
    %v473 = vcvt.s32.f32 %v317
    %v474 = vcvt.s32.f32 %v318
    %v475 = vcvt.s32.f32 %v319
    %v476 = vcvt.s32.f32 %v320
    %v477 = vcvt.s32.f32 %v321
    %v478 = vcvt.s32.f32 %v322
    %v479 = vcvt.s32.f32 %v323
    %v480 = vcvt.s32.f32 %v324
    %v481 = vcvt.s32.f32 %v325
    %v482 = vcvt.s32.f32 %v326
    %v483 = vcvt.s32.f32 %v327
    %v484 = vcvt.s32.f32 %v328
    %v485 = vcvt.s32.f32 %v329
    %v486 = vcvt.s32.f32 %v330
    %v487 = vcvt.s32.f32 %v331
    %v488 = vcvt.s32.f32 %v332
    %v489 = vcvt.s32.f32 %v333
    %v490 = vcvt.s32.f32 %v334
    %v491 = vcvt.s32.f32 %v335
    %v492 = vcvt.s32.f32 %v336
    %v493 = vcvt.s32.f32 %v337
    %v494 = vcvt.s32.f32 %v338
    %v495 = vcvt.s32.f32 %v339
    %v496 = vcvt.s32.f32 %v340
    %v497 = vcvt.s32.f32 %v341
    %v498 = vcvt.s32.f32 %v342
    %v499 = vcvt.s32.f32 %v343
    %v500 = vcvt.s32.f32 %v344
    %v501 = vcvt.s32.f32 %v345
    %v502 = vcvt.s32.f32 %v346
    %v503 = vcvt.s32.f32 %v347
    %v504 = vcvt.s32.f32 %v348
    %v505 = vcvt.s32.f32 %v349
    %v506 = vcvt.s32.f32 %v350
    %v507 = vcvt.s32.f32 %v351
    %v508 = vcvt.s32.f32 %v352
    %v509 = vcvt.s32.f32 %v353
    %v510 = vcvt.s32.f32 %v354
    %v511 = vcvt.s32.f32 %v355
    %v512 = vcvt.s32.f32 %v356
    %v513 = vcvt.s32.f32 %v357
    %v514 = vcvt.s32.f32 %v358
    %v515 = vcvt.s32.f32 %v359
    %v516 = vcvt.s32.f32 %v360
    %v517 = vcvt.s32.f32 %v361
    %v518 = vcvt.s32.f32 %v362
    %v519 = vcvt.s32.f32 %v363
    %v520 = vcvt.s32.f32 %v364
    %v521 = vcvt.s32.f32 %v365
    %v522 = vcvt.s32.f32 %v366
    %v523 = vcvt.s32.f32 %v367
    %v524 = vcvt.s32.f32 %v368
    %v525 = vcvt.s32.f32 %v369
    %v526 = vcvt.s32.f32 %v370
    %v527 = vcvt.s32.f32 %v371
    %v528 = vcvt.s32.f32 %v372
    %v529 = vcvt.s32.f32 %v373
    %v530 = vcvt.s32.f32 %v374
    %v531 = vcvt.s32.f32 %v375
    %v532 = vcvt.s32.f32 %v376
    %v533 = vcvt.s32.f32 %v377
    %v534 = vcvt.s32.f32 %v378
    %v535 = vcvt.s32.f32 %v379
    %v536 = vcvt.s32.f32 %v380
    %v537 = vcvt.s32.f32 %v381
    %v538 = vcvt.s32.f32 %v382
    %v539 = vcvt.s32.f32 %v383
    %v540 = vcvt.s32.f32 %v384
    %v541 = vcvt.s32.f32 %v385
    %v542 = vcvt.s32.f32 %v386
    %v543 = vcvt.s32.f32 %v387
    %v544 = vcvt.s32.f32 %v388
    %v545 = vcvt.s32.f32 %v389
    %v546 = vcvt.s32.f32 %v390
    %v547 = vcvt.s32.f32 %v391
    %v548 = vcvt.s32.f32 %v392
    %v549 = vld [vmem:[%s0] sm:$0xff]
    %v550 = vld [vmem:[%s0 + $0x8] sm:$0xff]
    %v551 = vld [vmem:[%s0 + $0x10] sm:$0xff]
    %v552 = vld [vmem:[%s0 + $0x18] sm:$0xff]
    %v553 = vld [vmem:[%s0 + $0x20] sm:$0x1]
    %vm554 = vcmask 162816
    %v556 = vsel %vm554, %v549, 0
    %v559 = vsel %vm554, %v550, 0
    %v562 = vsel %vm554, %v551, 0
    %v565 = vsel %vm554, %v552, 0
    %v568 = vsel %vm554, %v553, 0
    %vm570 = vcmask 1043456
    %v572 = vsel %vm570, %v497, 0
    %v575 = vsel %vm570, %v498, 0
    %v578 = vsel %vm570, %v499, 0
    %v581 = vsel %vm570, %v500, 0
    %v584 = vsel %vm570, %v501, 0
    %v587 = vsel %vm570, %v502, 0
    %v590 = vsel %vm570, %v503, 0
    %v593 = vsel %vm570, %v504, 0
    %v596 = vsel %vm570, %v505, 0
    %v599 = vsel %vm570, %v506, 0
    %v602 = vsel %vm570, %v507, 0
    %v605 = vsel %vm570, %v508, 0
    %v608 = vsel %vm570, %v509, 0
    %v611 = vsel %vm570, %v510, 0
    %v614 = vsel %vm570, %v511, 0
    %v617 = vsel %vm570, %v512, 0
    %v620 = vsel %vm570, %v513, 0
    %v623 = vsel %vm570, %v514, 0
    %v626 = vsel %vm570, %v515, 0
    %v629 = vsel %vm570, %v516, 0
    %v632 = vsel %vm570, %v517, 0
    %v635 = vsel %vm570, %v518, 0
    %v638 = vsel %vm570, %v519, 0
    %v641 = vsel %vm570, %v520, 0
    %v644 = vsel %vm570, %v521, 0
    %v647 = vsel %vm570, %v522, 0
    %v650 = vsel %vm570, %v523, 0
    %v653 = vsel %vm570, %v524, 0
    %v656 = vsel %vm570, %v525, 0
    %v659 = vsel %vm570, %v526, 0
    %v662 = vsel %vm570, %v527, 0
    %v665 = vsel %vm570, %v528, 0
    %v668 = vsel %vm570, %v529, 0
    %v671 = vsel %vm570, %v530, 0
    %v674 = vsel %vm570, %v531, 0
    %v677 = vsel %vm570, %v532, 0
    %v680 = vsel %vm570, %v533, 0
    %v683 = vsel %vm570, %v534, 0
    %v686 = vsel %vm570, %v535, 0
    %v689 = vsel %vm570, %v536, 0
    %v692 = vsel %vm570, %v537, 0
    %v695 = vsel %vm570, %v538, 0
    %v698 = vsel %vm570, %v539, 0
    %v701 = vsel %vm570, %v540, 0
    %v704 = vsel %vm570, %v541, 0
    %v707 = vsel %vm570, %v542, 0
    %v710 = vsel %vm570, %v543, 0
    %v713 = vsel %vm570, %v544, 0
    %v716 = vsel %vm570, %v545, 0
    %v719 = vsel %vm570, %v546, 0
    %v722 = vsel %vm570, %v547, 0
    %v725 = vsel %vm570, %v548, 0
    %727 = vmatpush.msra.mxu0 0.0
    %728 = vmatpush.msra.mxu0 0.0
    %729 = vmatpush.msra.mxu0 0.0
    %730 = vmatpush.msra.mxu0 0.0
    %731 = vmatpush.msra.mxu0 0.0
    %732 = vmatpush.msra.mxu0 0.0
    %733 = vmatpush.msra.mxu0 0.0
    %734 = vmatpush.msra.mxu0 0.0
    %735 = vmatpush.msra.mxu0 0.0
    %736 = vmatpush.msra.mxu0 0.0
    %737 = vmatpush.msra.mxu0 0.0
    %738 = vmatpush.msra.mxu0 0.0
    %739 = vmatpush.msra.mxu0 0.0
    %740 = vmatpush.msra.mxu0 %v572
    %741 = vmatpush.msra.mxu0 %v445
    %742 = vmatpush.msra.mxu0 %v393
    %743 = vmatmul.f32.gmra.mxu0 %v556
    %v744 = vpop.f32.mrf.mxu0
    %v745 = vadd.f32 0.0, %v744
    %746 = vmatmul.f32.gmra.mxu0 %v559
    %v747 = vpop.f32.mrf.mxu0
    %v748 = vadd.f32 0.0, %v747
    %749 = vmatmul.f32.gmra.mxu0 %v562
    %v750 = vpop.f32.mrf.mxu0
    %v751 = vadd.f32 0.0, %v750
    %752 = vmatmul.f32.gmra.mxu0 %v565
    %v753 = vpop.f32.mrf.mxu0
    %v754 = vadd.f32 0.0, %v753
    %755 = vmatmul.f32.gmra.mxu0 %v568
    %v756 = vpop.f32.mrf.mxu0
    %v757 = vadd.f32 0.0, %v756
    %758 = vdwg.mxu0
    %759 = vmatpush.msra.mxu0 0.0
    %760 = vmatpush.msra.mxu0 0.0
    %761 = vmatpush.msra.mxu0 0.0
    %762 = vmatpush.msra.mxu0 0.0
    %763 = vmatpush.msra.mxu0 0.0
    %764 = vmatpush.msra.mxu0 0.0
    %765 = vmatpush.msra.mxu0 0.0
    %766 = vmatpush.msra.mxu0 0.0
    %767 = vmatpush.msra.mxu0 0.0
    %768 = vmatpush.msra.mxu0 0.0
    %769 = vmatpush.msra.mxu0 0.0
    %770 = vmatpush.msra.mxu0 0.0
    %771 = vmatpush.msra.mxu0 0.0
    %772 = vmatpush.msra.mxu0 %v575
    %773 = vmatpush.msra.mxu0 %v446
    %774 = vmatpush.msra.mxu0 %v394
    %775 = vmatmul.f32.gmra.mxu0 %v556
    %v776 = vpop.f32.mrf.mxu0
    %v777 = vadd.f32 0.0, %v776
    %778 = vmatmul.f32.gmra.mxu0 %v559
    %v779 = vpop.f32.mrf.mxu0
    %v780 = vadd.f32 0.0, %v779
    %781 = vmatmul.f32.gmra.mxu0 %v562
    %v782 = vpop.f32.mrf.mxu0
    %v783 = vadd.f32 0.0, %v782
    %784 = vmatmul.f32.gmra.mxu0 %v565
    %v785 = vpop.f32.mrf.mxu0
    %v786 = vadd.f32 0.0, %v785
    %787 = vmatmul.f32.gmra.mxu0 %v568
    %v788 = vpop.f32.mrf.mxu0
    %v789 = vadd.f32 0.0, %v788
    %790 = vdwg.mxu0
    %791 = vmatpush.msra.mxu0 0.0
    %792 = vmatpush.msra.mxu0 0.0
    %793 = vmatpush.msra.mxu0 0.0
    %794 = vmatpush.msra.mxu0 0.0
    %795 = vmatpush.msra.mxu0 0.0
    %796 = vmatpush.msra.mxu0 0.0
    %797 = vmatpush.msra.mxu0 0.0
    %798 = vmatpush.msra.mxu0 0.0
    %799 = vmatpush.msra.mxu0 0.0
    %800 = vmatpush.msra.mxu0 0.0
    %801 = vmatpush.msra.mxu0 0.0
    %802 = vmatpush.msra.mxu0 0.0
    %803 = vmatpush.msra.mxu0 0.0
    %804 = vmatpush.msra.mxu0 %v578
    %805 = vmatpush.msra.mxu0 %v447
    %806 = vmatpush.msra.mxu0 %v395
    %807 = vmatmul.f32.gmra.mxu0 %v556
    %v808 = vpop.f32.mrf.mxu0
    %v809 = vadd.f32 0.0, %v808
    %810 = vmatmul.f32.gmra.mxu0 %v559
    %v811 = vpop.f32.mrf.mxu0
    %v812 = vadd.f32 0.0, %v811
    %813 = vmatmul.f32.gmra.mxu0 %v562
    %v814 = vpop.f32.mrf.mxu0
    %v815 = vadd.f32 0.0, %v814
    %816 = vmatmul.f32.gmra.mxu0 %v565
    %v817 = vpop.f32.mrf.mxu0
    %v818 = vadd.f32 0.0, %v817
    %819 = vmatmul.f32.gmra.mxu0 %v568
    %v820 = vpop.f32.mrf.mxu0
    %v821 = vadd.f32 0.0, %v820
    %822 = vdwg.mxu0
    %823 = vmatpush.msra.mxu0 0.0
    %824 = vmatpush.msra.mxu0 0.0
    %825 = vmatpush.msra.mxu0 0.0
    %826 = vmatpush.msra.mxu0 0.0
    %827 = vmatpush.msra.mxu0 0.0
    %828 = vmatpush.msra.mxu0 0.0
    %829 = vmatpush.msra.mxu0 0.0
    %830 = vmatpush.msra.mxu0 0.0
    %831 = vmatpush.msra.mxu0 0.0
    %832 = vmatpush.msra.mxu0 0.0
    %833 = vmatpush.msra.mxu0 0.0
    %834 = vmatpush.msra.mxu0 0.0
    %835 = vmatpush.msra.mxu0 0.0
    %836 = vmatpush.msra.mxu0 %v581
    %837 = vmatpush.msra.mxu0 %v448
    %838 = vmatpush.msra.mxu0 %v396
    %839 = vmatmul.f32.gmra.mxu0 %v556
    %v840 = vpop.f32.mrf.mxu0
    %v841 = vadd.f32 0.0, %v840
    %842 = vmatmul.f32.gmra.mxu0 %v559
    %v843 = vpop.f32.mrf.mxu0
    %v844 = vadd.f32 0.0, %v843
    %845 = vmatmul.f32.gmra.mxu0 %v562
    %v846 = vpop.f32.mrf.mxu0
    %v847 = vadd.f32 0.0, %v846
    %848 = vmatmul.f32.gmra.mxu0 %v565
    %v849 = vpop.f32.mrf.mxu0
    %v850 = vadd.f32 0.0, %v849
    %851 = vmatmul.f32.gmra.mxu0 %v568
    %v852 = vpop.f32.mrf.mxu0
    %v853 = vadd.f32 0.0, %v852
    %854 = vdwg.mxu0
    %855 = vmatpush.msra.mxu0 0.0
    %856 = vmatpush.msra.mxu0 0.0
    %857 = vmatpush.msra.mxu0 0.0
    %858 = vmatpush.msra.mxu0 0.0
    %859 = vmatpush.msra.mxu0 0.0
    %860 = vmatpush.msra.mxu0 0.0
    %861 = vmatpush.msra.mxu0 0.0
    %862 = vmatpush.msra.mxu0 0.0
    %863 = vmatpush.msra.mxu0 0.0
    %864 = vmatpush.msra.mxu0 0.0
    %865 = vmatpush.msra.mxu0 0.0
    %866 = vmatpush.msra.mxu0 0.0
    %867 = vmatpush.msra.mxu0 0.0
    %868 = vmatpush.msra.mxu0 %v584
    %869 = vmatpush.msra.mxu0 %v449
    %870 = vmatpush.msra.mxu0 %v397
    %871 = vmatmul.f32.gmra.mxu0 %v556
    %v872 = vpop.f32.mrf.mxu0
    %v873 = vadd.f32 0.0, %v872
    %874 = vmatmul.f32.gmra.mxu0 %v559
    %v875 = vpop.f32.mrf.mxu0
    %v876 = vadd.f32 0.0, %v875
    %877 = vmatmul.f32.gmra.mxu0 %v562
    %v878 = vpop.f32.mrf.mxu0
    %v879 = vadd.f32 0.0, %v878
    %880 = vmatmul.f32.gmra.mxu0 %v565
    %v881 = vpop.f32.mrf.mxu0
    %v882 = vadd.f32 0.0, %v881
    %883 = vmatmul.f32.gmra.mxu0 %v568
    %v884 = vpop.f32.mrf.mxu0
    %v885 = vadd.f32 0.0, %v884
    %886 = vdwg.mxu0
    %887 = vmatpush.msra.mxu0 0.0
    %888 = vmatpush.msra.mxu0 0.0
    %889 = vmatpush.msra.mxu0 0.0
    %890 = vmatpush.msra.mxu0 0.0
    %891 = vmatpush.msra.mxu0 0.0
    %892 = vmatpush.msra.mxu0 0.0
    %893 = vmatpush.msra.mxu0 0.0
    %894 = vmatpush.msra.mxu0 0.0
    %895 = vmatpush.msra.mxu0 0.0
    %896 = vmatpush.msra.mxu0 0.0
    %897 = vmatpush.msra.mxu0 0.0
    %898 = vmatpush.msra.mxu0 0.0
    %899 = vmatpush.msra.mxu0 0.0
    %900 = vmatpush.msra.mxu0 %v587
    %901 = vmatpush.msra.mxu0 %v450
    %902 = vmatpush.msra.mxu0 %v398
    %903 = vmatmul.f32.gmra.mxu0 %v556
    %v904 = vpop.f32.mrf.mxu0
    %v905 = vadd.f32 0.0, %v904
    %906 = vmatmul.f32.gmra.mxu0 %v559
    %v907 = vpop.f32.mrf.mxu0
    %v908 = vadd.f32 0.0, %v907
    %909 = vmatmul.f32.gmra.mxu0 %v562
    %v910 = vpop.f32.mrf.mxu0
    %v911 = vadd.f32 0.0, %v910
    %912 = vmatmul.f32.gmra.mxu0 %v565
    %v913 = vpop.f32.mrf.mxu0
    %v914 = vadd.f32 0.0, %v913
    %915 = vmatmul.f32.gmra.mxu0 %v568
    %v916 = vpop.f32.mrf.mxu0
    %v917 = vadd.f32 0.0, %v916
    %918 = vdwg.mxu0
    %919 = vmatpush.msra.mxu0 0.0
    %920 = vmatpush.msra.mxu0 0.0
    %921 = vmatpush.msra.mxu0 0.0
    %922 = vmatpush.msra.mxu0 0.0
    %923 = vmatpush.msra.mxu0 0.0
    %924 = vmatpush.msra.mxu0 0.0
    %925 = vmatpush.msra.mxu0 0.0
    %926 = vmatpush.msra.mxu0 0.0
    %927 = vmatpush.msra.mxu0 0.0
    %928 = vmatpush.msra.mxu0 0.0
    %929 = vmatpush.msra.mxu0 0.0
    %930 = vmatpush.msra.mxu0 0.0
    %931 = vmatpush.msra.mxu0 0.0
    %932 = vmatpush.msra.mxu0 %v590
    %933 = vmatpush.msra.mxu0 %v451
    %934 = vmatpush.msra.mxu0 %v399
    %935 = vmatmul.f32.gmra.mxu0 %v556
    %v936 = vpop.f32.mrf.mxu0
    %v937 = vadd.f32 0.0, %v936
    %938 = vmatmul.f32.gmra.mxu0 %v559
    %v939 = vpop.f32.mrf.mxu0
    %v940 = vadd.f32 0.0, %v939
    %941 = vmatmul.f32.gmra.mxu0 %v562
    %v942 = vpop.f32.mrf.mxu0
    %v943 = vadd.f32 0.0, %v942
    %944 = vmatmul.f32.gmra.mxu0 %v565
    %v945 = vpop.f32.mrf.mxu0
    %v946 = vadd.f32 0.0, %v945
    %947 = vmatmul.f32.gmra.mxu0 %v568
    %v948 = vpop.f32.mrf.mxu0
    %v949 = vadd.f32 0.0, %v948
    %950 = vdwg.mxu0
    %951 = vmatpush.msra.mxu0 0.0
    %952 = vmatpush.msra.mxu0 0.0
    %953 = vmatpush.msra.mxu0 0.0
    %954 = vmatpush.msra.mxu0 0.0
    %955 = vmatpush.msra.mxu0 0.0
    %956 = vmatpush.msra.mxu0 0.0
    %957 = vmatpush.msra.mxu0 0.0
    %958 = vmatpush.msra.mxu0 0.0
    %959 = vmatpush.msra.mxu0 0.0
    %960 = vmatpush.msra.mxu0 0.0
    %961 = vmatpush.msra.mxu0 0.0
    %962 = vmatpush.msra.mxu0 0.0
    %963 = vmatpush.msra.mxu0 0.0
    %964 = vmatpush.msra.mxu0 %v593
    %965 = vmatpush.msra.mxu0 %v452
    %966 = vmatpush.msra.mxu0 %v400
    %967 = vmatmul.f32.gmra.mxu0 %v556
    %v968 = vpop.f32.mrf.mxu0
    %v969 = vadd.f32 0.0, %v968
    %970 = vmatmul.f32.gmra.mxu0 %v559
    %v971 = vpop.f32.mrf.mxu0
    %v972 = vadd.f32 0.0, %v971
    %973 = vmatmul.f32.gmra.mxu0 %v562
    %v974 = vpop.f32.mrf.mxu0
    %v975 = vadd.f32 0.0, %v974
    %976 = vmatmul.f32.gmra.mxu0 %v565
    %v977 = vpop.f32.mrf.mxu0
    %v978 = vadd.f32 0.0, %v977
    %979 = vmatmul.f32.gmra.mxu0 %v568
    %v980 = vpop.f32.mrf.mxu0
    %v981 = vadd.f32 0.0, %v980
    %982 = vdwg.mxu0
    %983 = vmatpush.msra.mxu0 0.0
    %984 = vmatpush.msra.mxu0 0.0
    %985 = vmatpush.msra.mxu0 0.0
    %986 = vmatpush.msra.mxu0 0.0
    %987 = vmatpush.msra.mxu0 0.0
    %988 = vmatpush.msra.mxu0 0.0
    %989 = vmatpush.msra.mxu0 0.0
    %990 = vmatpush.msra.mxu0 0.0
    %991 = vmatpush.msra.mxu0 0.0
    %992 = vmatpush.msra.mxu0 0.0
    %993 = vmatpush.msra.mxu0 0.0
    %994 = vmatpush.msra.mxu0 0.0
    %995 = vmatpush.msra.mxu0 0.0
    %996 = vmatpush.msra.mxu0 %v596
    %997 = vmatpush.msra.mxu0 %v453
    %998 = vmatpush.msra.mxu0 %v401
    %999 = vmatmul.f32.gmra.mxu0 %v556
    %v1000 = vpop.f32.mrf.mxu0
    %v1001 = vadd.f32 0.0, %v1000
    %1002 = vmatmul.f32.gmra.mxu0 %v559
    %v1003 = vpop.f32.mrf.mxu0
    %v1004 = vadd.f32 0.0, %v1003
    %1005 = vmatmul.f32.gmra.mxu0 %v562
    %v1006 = vpop.f32.mrf.mxu0
    %v1007 = vadd.f32 0.0, %v1006
    %1008 = vmatmul.f32.gmra.mxu0 %v565
    %v1009 = vpop.f32.mrf.mxu0
    %v1010 = vadd.f32 0.0, %v1009
    %1011 = vmatmul.f32.gmra.mxu0 %v568
    %v1012 = vpop.f32.mrf.mxu0
    %v1013 = vadd.f32 0.0, %v1012
    %1014 = vdwg.mxu0
    %1015 = vmatpush.msra.mxu0 0.0
    %1016 = vmatpush.msra.mxu0 0.0
    %1017 = vmatpush.msra.mxu0 0.0
    %1018 = vmatpush.msra.mxu0 0.0
    %1019 = vmatpush.msra.mxu0 0.0
    %1020 = vmatpush.msra.mxu0 0.0
    %1021 = vmatpush.msra.mxu0 0.0
    %1022 = vmatpush.msra.mxu0 0.0
    %1023 = vmatpush.msra.mxu0 0.0
    %1024 = vmatpush.msra.mxu0 0.0
    %1025 = vmatpush.msra.mxu0 0.0
    %1026 = vmatpush.msra.mxu0 0.0
    %1027 = vmatpush.msra.mxu0 0.0
    %1028 = vmatpush.msra.mxu0 %v599
    %1029 = vmatpush.msra.mxu0 %v454
    %1030 = vmatpush.msra.mxu0 %v402
    %1031 = vmatmul.f32.gmra.mxu0 %v556
    %v1032 = vpop.f32.mrf.mxu0
    %v1033 = vadd.f32 0.0, %v1032
    %1034 = vmatmul.f32.gmra.mxu0 %v559
    %v1035 = vpop.f32.mrf.mxu0
    %v1036 = vadd.f32 0.0, %v1035
    %1037 = vmatmul.f32.gmra.mxu0 %v562
    %v1038 = vpop.f32.mrf.mxu0
    %v1039 = vadd.f32 0.0, %v1038
    %1040 = vmatmul.f32.gmra.mxu0 %v565
    %v1041 = vpop.f32.mrf.mxu0
    %v1042 = vadd.f32 0.0, %v1041
    %1043 = vmatmul.f32.gmra.mxu0 %v568
    %v1044 = vpop.f32.mrf.mxu0
    %v1045 = vadd.f32 0.0, %v1044
    %1046 = vdwg.mxu0
    %1047 = vmatpush.msra.mxu0 0.0
    %1048 = vmatpush.msra.mxu0 0.0
    %1049 = vmatpush.msra.mxu0 0.0
    %1050 = vmatpush.msra.mxu0 0.0
    %1051 = vmatpush.msra.mxu0 0.0
    %1052 = vmatpush.msra.mxu0 0.0
    %1053 = vmatpush.msra.mxu0 0.0
    %1054 = vmatpush.msra.mxu0 0.0
    %1055 = vmatpush.msra.mxu0 0.0
    %1056 = vmatpush.msra.mxu0 0.0
    %1057 = vmatpush.msra.mxu0 0.0
    %1058 = vmatpush.msra.mxu0 0.0
    %1059 = vmatpush.msra.mxu0 0.0
    %1060 = vmatpush.msra.mxu0 %v602
    %1061 = vmatpush.msra.mxu0 %v455
    %1062 = vmatpush.msra.mxu0 %v403
    %1063 = vmatmul.f32.gmra.mxu0 %v556
    %v1064 = vpop.f32.mrf.mxu0
    %v1065 = vadd.f32 0.0, %v1064
    %1066 = vmatmul.f32.gmra.mxu0 %v559
    %v1067 = vpop.f32.mrf.mxu0
    %v1068 = vadd.f32 0.0, %v1067
    %1069 = vmatmul.f32.gmra.mxu0 %v562
    %v1070 = vpop.f32.mrf.mxu0
    %v1071 = vadd.f32 0.0, %v1070
    %1072 = vmatmul.f32.gmra.mxu0 %v565
    %v1073 = vpop.f32.mrf.mxu0
    %v1074 = vadd.f32 0.0, %v1073
    %1075 = vmatmul.f32.gmra.mxu0 %v568
    %v1076 = vpop.f32.mrf.mxu0
    %v1077 = vadd.f32 0.0, %v1076
    %1078 = vdwg.mxu0
    %1079 = vmatpush.msra.mxu0 0.0
    %1080 = vmatpush.msra.mxu0 0.0
    %1081 = vmatpush.msra.mxu0 0.0
    %1082 = vmatpush.msra.mxu0 0.0
    %1083 = vmatpush.msra.mxu0 0.0
    %1084 = vmatpush.msra.mxu0 0.0
    %1085 = vmatpush.msra.mxu0 0.0
    %1086 = vmatpush.msra.mxu0 0.0
    %1087 = vmatpush.msra.mxu0 0.0
    %1088 = vmatpush.msra.mxu0 0.0
    %1089 = vmatpush.msra.mxu0 0.0
    %1090 = vmatpush.msra.mxu0 0.0
    %1091 = vmatpush.msra.mxu0 0.0
    %1092 = vmatpush.msra.mxu0 %v605
    %1093 = vmatpush.msra.mxu0 %v456
    %1094 = vmatpush.msra.mxu0 %v404
    %1095 = vmatmul.f32.gmra.mxu0 %v556
    %v1096 = vpop.f32.mrf.mxu0
    %v1097 = vadd.f32 0.0, %v1096
    %1098 = vmatmul.f32.gmra.mxu0 %v559
    %v1099 = vpop.f32.mrf.mxu0
    %v1100 = vadd.f32 0.0, %v1099
    %1101 = vmatmul.f32.gmra.mxu0 %v562
    %v1102 = vpop.f32.mrf.mxu0
    %v1103 = vadd.f32 0.0, %v1102
    %1104 = vmatmul.f32.gmra.mxu0 %v565
    %v1105 = vpop.f32.mrf.mxu0
    %v1106 = vadd.f32 0.0, %v1105
    %1107 = vmatmul.f32.gmra.mxu0 %v568
    %v1108 = vpop.f32.mrf.mxu0
    %v1109 = vadd.f32 0.0, %v1108
    %1110 = vdwg.mxu0
    %1111 = vmatpush.msra.mxu0 0.0
    %1112 = vmatpush.msra.mxu0 0.0
    %1113 = vmatpush.msra.mxu0 0.0
    %1114 = vmatpush.msra.mxu0 0.0
    %1115 = vmatpush.msra.mxu0 0.0
    %1116 = vmatpush.msra.mxu0 0.0
    %1117 = vmatpush.msra.mxu0 0.0
    %1118 = vmatpush.msra.mxu0 0.0
    %1119 = vmatpush.msra.mxu0 0.0
    %1120 = vmatpush.msra.mxu0 0.0
    %1121 = vmatpush.msra.mxu0 0.0
    %1122 = vmatpush.msra.mxu0 0.0
    %1123 = vmatpush.msra.mxu0 0.0
    %1124 = vmatpush.msra.mxu0 %v608
    %1125 = vmatpush.msra.mxu0 %v457
    %1126 = vmatpush.msra.mxu0 %v405
    %1127 = vmatmul.f32.gmra.mxu0 %v556
    %v1128 = vpop.f32.mrf.mxu0
    %v1129 = vadd.f32 0.0, %v1128
    %1130 = vmatmul.f32.gmra.mxu0 %v559
    %v1131 = vpop.f32.mrf.mxu0
    %v1132 = vadd.f32 0.0, %v1131
    %1133 = vmatmul.f32.gmra.mxu0 %v562
    %v1134 = vpop.f32.mrf.mxu0
    %v1135 = vadd.f32 0.0, %v1134
    %1136 = vmatmul.f32.gmra.mxu0 %v565
    %v1137 = vpop.f32.mrf.mxu0
    %v1138 = vadd.f32 0.0, %v1137
    %1139 = vmatmul.f32.gmra.mxu0 %v568
    %v1140 = vpop.f32.mrf.mxu0
    %v1141 = vadd.f32 0.0, %v1140
    %1142 = vdwg.mxu0
    %1143 = vmatpush.msra.mxu0 0.0
    %1144 = vmatpush.msra.mxu0 0.0
    %1145 = vmatpush.msra.mxu0 0.0
    %1146 = vmatpush.msra.mxu0 0.0
    %1147 = vmatpush.msra.mxu0 0.0
    %1148 = vmatpush.msra.mxu0 0.0
    %1149 = vmatpush.msra.mxu0 0.0
    %1150 = vmatpush.msra.mxu0 0.0
    %1151 = vmatpush.msra.mxu0 0.0
    %1152 = vmatpush.msra.mxu0 0.0
    %1153 = vmatpush.msra.mxu0 0.0
    %1154 = vmatpush.msra.mxu0 0.0
    %1155 = vmatpush.msra.mxu0 0.0
    %1156 = vmatpush.msra.mxu0 %v611
    %1157 = vmatpush.msra.mxu0 %v458
    %1158 = vmatpush.msra.mxu0 %v406
    %1159 = vmatmul.f32.gmra.mxu0 %v556
    %v1160 = vpop.f32.mrf.mxu0
    %v1161 = vadd.f32 0.0, %v1160
    %1162 = vmatmul.f32.gmra.mxu0 %v559
    %v1163 = vpop.f32.mrf.mxu0
    %v1164 = vadd.f32 0.0, %v1163
    %1165 = vmatmul.f32.gmra.mxu0 %v562
    %v1166 = vpop.f32.mrf.mxu0
    %v1167 = vadd.f32 0.0, %v1166
    %1168 = vmatmul.f32.gmra.mxu0 %v565
    %v1169 = vpop.f32.mrf.mxu0
    %v1170 = vadd.f32 0.0, %v1169
    %1171 = vmatmul.f32.gmra.mxu0 %v568
    %v1172 = vpop.f32.mrf.mxu0
    %v1173 = vadd.f32 0.0, %v1172
    %1174 = vdwg.mxu0
    %1175 = vmatpush.msra.mxu0 0.0
    %1176 = vmatpush.msra.mxu0 0.0
    %1177 = vmatpush.msra.mxu0 0.0
    %1178 = vmatpush.msra.mxu0 0.0
    %1179 = vmatpush.msra.mxu0 0.0
    %1180 = vmatpush.msra.mxu0 0.0
    %1181 = vmatpush.msra.mxu0 0.0
    %1182 = vmatpush.msra.mxu0 0.0
    %1183 = vmatpush.msra.mxu0 0.0
    %1184 = vmatpush.msra.mxu0 0.0
    %1185 = vmatpush.msra.mxu0 0.0
    %1186 = vmatpush.msra.mxu0 0.0
    %1187 = vmatpush.msra.mxu0 0.0
    %1188 = vmatpush.msra.mxu0 %v614
    %1189 = vmatpush.msra.mxu0 %v459
    %1190 = vmatpush.msra.mxu0 %v407
    %1191 = vmatmul.f32.gmra.mxu0 %v556
    %v1192 = vpop.f32.mrf.mxu0
    %v1193 = vadd.f32 0.0, %v1192
    %1194 = vmatmul.f32.gmra.mxu0 %v559
    %v1195 = vpop.f32.mrf.mxu0
    %v1196 = vadd.f32 0.0, %v1195
    %1197 = vmatmul.f32.gmra.mxu0 %v562
    %v1198 = vpop.f32.mrf.mxu0
    %v1199 = vadd.f32 0.0, %v1198
    %1200 = vmatmul.f32.gmra.mxu0 %v565
    %v1201 = vpop.f32.mrf.mxu0
    %v1202 = vadd.f32 0.0, %v1201
    %1203 = vmatmul.f32.gmra.mxu0 %v568
    %v1204 = vpop.f32.mrf.mxu0
    %v1205 = vadd.f32 0.0, %v1204
    %1206 = vdwg.mxu0
    %1207 = vmatpush.msra.mxu0 0.0
    %1208 = vmatpush.msra.mxu0 0.0
    %1209 = vmatpush.msra.mxu0 0.0
    %1210 = vmatpush.msra.mxu0 0.0
    %1211 = vmatpush.msra.mxu0 0.0
    %1212 = vmatpush.msra.mxu0 0.0
    %1213 = vmatpush.msra.mxu0 0.0
    %1214 = vmatpush.msra.mxu0 0.0
    %1215 = vmatpush.msra.mxu0 0.0
    %1216 = vmatpush.msra.mxu0 0.0
    %1217 = vmatpush.msra.mxu0 0.0
    %1218 = vmatpush.msra.mxu0 0.0
    %1219 = vmatpush.msra.mxu0 0.0
    %1220 = vmatpush.msra.mxu0 %v617
    %1221 = vmatpush.msra.mxu0 %v460
    %1222 = vmatpush.msra.mxu0 %v408
    %1223 = vmatmul.f32.gmra.mxu0 %v556
    %v1224 = vpop.f32.mrf.mxu0
    %v1225 = vadd.f32 0.0, %v1224
    %1226 = vmatmul.f32.gmra.mxu0 %v559
    %v1227 = vpop.f32.mrf.mxu0
    %v1228 = vadd.f32 0.0, %v1227
    %1229 = vmatmul.f32.gmra.mxu0 %v562
    %v1230 = vpop.f32.mrf.mxu0
    %v1231 = vadd.f32 0.0, %v1230
    %1232 = vmatmul.f32.gmra.mxu0 %v565
    %v1233 = vpop.f32.mrf.mxu0
    %v1234 = vadd.f32 0.0, %v1233
    %1235 = vmatmul.f32.gmra.mxu0 %v568
    %v1236 = vpop.f32.mrf.mxu0
    %v1237 = vadd.f32 0.0, %v1236
    %1238 = vdwg.mxu0
    %1239 = vmatpush.msra.mxu0 0.0
    %1240 = vmatpush.msra.mxu0 0.0
    %1241 = vmatpush.msra.mxu0 0.0
    %1242 = vmatpush.msra.mxu0 0.0
    %1243 = vmatpush.msra.mxu0 0.0
    %1244 = vmatpush.msra.mxu0 0.0
    %1245 = vmatpush.msra.mxu0 0.0
    %1246 = vmatpush.msra.mxu0 0.0
    %1247 = vmatpush.msra.mxu0 0.0
    %1248 = vmatpush.msra.mxu0 0.0
    %1249 = vmatpush.msra.mxu0 0.0
    %1250 = vmatpush.msra.mxu0 0.0
    %1251 = vmatpush.msra.mxu0 0.0
    %1252 = vmatpush.msra.mxu0 %v620
    %1253 = vmatpush.msra.mxu0 %v461
    %1254 = vmatpush.msra.mxu0 %v409
    %1255 = vmatmul.f32.gmra.mxu0 %v556
    %v1256 = vpop.f32.mrf.mxu0
    %v1257 = vadd.f32 0.0, %v1256
    %1258 = vmatmul.f32.gmra.mxu0 %v559
    %v1259 = vpop.f32.mrf.mxu0
    %v1260 = vadd.f32 0.0, %v1259
    %1261 = vmatmul.f32.gmra.mxu0 %v562
    %v1262 = vpop.f32.mrf.mxu0
    %v1263 = vadd.f32 0.0, %v1262
    %1264 = vmatmul.f32.gmra.mxu0 %v565
    %v1265 = vpop.f32.mrf.mxu0
    %v1266 = vadd.f32 0.0, %v1265
    %1267 = vmatmul.f32.gmra.mxu0 %v568
    %v1268 = vpop.f32.mrf.mxu0
    %1269 = vdwg.mxu0
    %1270 = vmatpush.msra.mxu0 0.0
    %1271 = vmatpush.msra.mxu0 0.0
    %1272 = vmatpush.msra.mxu0 0.0
    %1273 = vmatpush.msra.mxu0 0.0
    %1274 = vmatpush.msra.mxu0 0.0
    %1275 = vmatpush.msra.mxu0 0.0
    %1276 = vmatpush.msra.mxu0 0.0
    %1277 = vmatpush.msra.mxu0 0.0
    %1278 = vmatpush.msra.mxu0 0.0
    %1279 = vmatpush.msra.mxu0 0.0
    %1280 = vmatpush.msra.mxu0 0.0
    %1281 = vmatpush.msra.mxu0 0.0
    %1282 = vmatpush.msra.mxu0 0.0
    %1283 = vmatpush.msra.mxu0 %v623
    %1284 = vmatpush.msra.mxu0 %v462
    %1285 = vmatpush.msra.mxu0 %v410
    %1286 = vmatmul.f32.gmra.mxu0 %v556
    %v1287 = vpop.f32.mrf.mxu0
    %v1288 = vadd.f32 0.0, %v1287
    %1289 = vmatmul.f32.gmra.mxu0 %v559
    %v1290 = vpop.f32.mrf.mxu0
    %v1291 = vadd.f32 0.0, %v1290
    %1292 = vmatmul.f32.gmra.mxu0 %v562
    %v1293 = vpop.f32.mrf.mxu0
    %v1294 = vadd.f32 0.0, %v1293
    %1295 = vmatmul.f32.gmra.mxu0 %v565
    %v1296 = vpop.f32.mrf.mxu0
    %v1297 = vadd.f32 0.0, %v1296
    %1298 = vmatmul.f32.gmra.mxu0 %v568
    %v1299 = vpop.f32.mrf.mxu0
    %1300 = vdwg.mxu0
    %1301 = vmatpush.msra.mxu0 0.0
    %1302 = vmatpush.msra.mxu0 0.0
    %1303 = vmatpush.msra.mxu0 0.0
    %1304 = vmatpush.msra.mxu0 0.0
    %1305 = vmatpush.msra.mxu0 0.0
    %1306 = vmatpush.msra.mxu0 0.0
    %1307 = vmatpush.msra.mxu0 0.0
    %1308 = vmatpush.msra.mxu0 0.0
    %1309 = vmatpush.msra.mxu0 0.0
    %1310 = vmatpush.msra.mxu0 0.0
    %1311 = vmatpush.msra.mxu0 0.0
    %1312 = vmatpush.msra.mxu0 0.0
    %1313 = vmatpush.msra.mxu0 0.0
    %1314 = vmatpush.msra.mxu0 %v626
    %1315 = vmatpush.msra.mxu0 %v463
    %1316 = vmatpush.msra.mxu0 %v411
    %1317 = vmatmul.f32.gmra.mxu0 %v556
    %v1318 = vpop.f32.mrf.mxu0
    %v1319 = vadd.f32 0.0, %v1318
    %1320 = vmatmul.f32.gmra.mxu0 %v559
    %v1321 = vpop.f32.mrf.mxu0
    %v1322 = vadd.f32 0.0, %v1321
    %1323 = vmatmul.f32.gmra.mxu0 %v562
    %v1324 = vpop.f32.mrf.mxu0
    %v1325 = vadd.f32 0.0, %v1324
    %1326 = vmatmul.f32.gmra.mxu0 %v565
    %v1327 = vpop.f32.mrf.mxu0
    %v1328 = vadd.f32 0.0, %v1327
    %1329 = vmatmul.f32.gmra.mxu0 %v568
    %v1330 = vpop.f32.mrf.mxu0
    %1331 = vdwg.mxu0
    %1332 = vmatpush.msra.mxu0 0.0
    %1333 = vmatpush.msra.mxu0 0.0
    %1334 = vmatpush.msra.mxu0 0.0
    %1335 = vmatpush.msra.mxu0 0.0
    %1336 = vmatpush.msra.mxu0 0.0
    %1337 = vmatpush.msra.mxu0 0.0
    %1338 = vmatpush.msra.mxu0 0.0
    %1339 = vmatpush.msra.mxu0 0.0
    %1340 = vmatpush.msra.mxu0 0.0
    %1341 = vmatpush.msra.mxu0 0.0
    %1342 = vmatpush.msra.mxu0 0.0
    %1343 = vmatpush.msra.mxu0 0.0
    %1344 = vmatpush.msra.mxu0 0.0
    %1345 = vmatpush.msra.mxu0 %v629
    %1346 = vmatpush.msra.mxu0 %v464
    %1347 = vmatpush.msra.mxu0 %v412
    %1348 = vmatmul.f32.gmra.mxu0 %v556
    %v1349 = vpop.f32.mrf.mxu0
    %v1350 = vadd.f32 0.0, %v1349
    %1351 = vmatmul.f32.gmra.mxu0 %v559
    %v1352 = vpop.f32.mrf.mxu0
    %v1353 = vadd.f32 0.0, %v1352
    %1354 = vmatmul.f32.gmra.mxu0 %v562
    %v1355 = vpop.f32.mrf.mxu0
    %v1356 = vadd.f32 0.0, %v1355
    %1357 = vmatmul.f32.gmra.mxu0 %v565
    %v1358 = vpop.f32.mrf.mxu0
    %v1359 = vadd.f32 0.0, %v1358
    %1360 = vmatmul.f32.gmra.mxu0 %v568
    %v1361 = vpop.f32.mrf.mxu0
    %1362 = vdwg.mxu0
    %1363 = vmatpush.msra.mxu0 0.0
    %1364 = vmatpush.msra.mxu0 0.0
    %1365 = vmatpush.msra.mxu0 0.0
    %1366 = vmatpush.msra.mxu0 0.0
    %1367 = vmatpush.msra.mxu0 0.0
    %1368 = vmatpush.msra.mxu0 0.0
    %1369 = vmatpush.msra.mxu0 0.0
    %1370 = vmatpush.msra.mxu0 0.0
    %1371 = vmatpush.msra.mxu0 0.0
    %1372 = vmatpush.msra.mxu0 0.0
    %1373 = vmatpush.msra.mxu0 0.0
    %1374 = vmatpush.msra.mxu0 0.0
    %1375 = vmatpush.msra.mxu0 0.0
    %1376 = vmatpush.msra.mxu0 %v632
    %1377 = vmatpush.msra.mxu0 %v465
    %1378 = vmatpush.msra.mxu0 %v413
    %1379 = vmatmul.f32.gmra.mxu0 %v556
    %v1380 = vpop.f32.mrf.mxu0
    %v1381 = vadd.f32 0.0, %v1380
    %1382 = vmatmul.f32.gmra.mxu0 %v559
    %v1383 = vpop.f32.mrf.mxu0
    %v1384 = vadd.f32 0.0, %v1383
    %1385 = vmatmul.f32.gmra.mxu0 %v562
    %v1386 = vpop.f32.mrf.mxu0
    %v1387 = vadd.f32 0.0, %v1386
    %1388 = vmatmul.f32.gmra.mxu0 %v565
    %v1389 = vpop.f32.mrf.mxu0
    %v1390 = vadd.f32 0.0, %v1389
    %1391 = vmatmul.f32.gmra.mxu0 %v568
    %v1392 = vpop.f32.mrf.mxu0
    %v1393 = vadd.f32 0.0, %v1392
    %1394 = vdwg.mxu0
    %1395 = vmatpush.msra.mxu0 0.0
    %1396 = vmatpush.msra.mxu0 0.0
    %1397 = vmatpush.msra.mxu0 0.0
    %1398 = vmatpush.msra.mxu0 0.0
    %1399 = vmatpush.msra.mxu0 0.0
    %1400 = vmatpush.msra.mxu0 0.0
    %1401 = vmatpush.msra.mxu0 0.0
    %1402 = vmatpush.msra.mxu0 0.0
    %1403 = vmatpush.msra.mxu0 0.0
    %1404 = vmatpush.msra.mxu0 0.0
    %1405 = vmatpush.msra.mxu0 0.0
    %1406 = vmatpush.msra.mxu0 0.0
    %1407 = vmatpush.msra.mxu0 0.0
    %1408 = vmatpush.msra.mxu0 %v635
    %1409 = vmatpush.msra.mxu0 %v466
    %1410 = vmatpush.msra.mxu0 %v414
    %1411 = vmatmul.f32.gmra.mxu0 %v556
    %v1412 = vpop.f32.mrf.mxu0
    %v1413 = vadd.f32 0.0, %v1412
    %1414 = vmatmul.f32.gmra.mxu0 %v559
    %v1415 = vpop.f32.mrf.mxu0
    %v1416 = vadd.f32 0.0, %v1415
    %1417 = vmatmul.f32.gmra.mxu0 %v562
    %v1418 = vpop.f32.mrf.mxu0
    %v1419 = vadd.f32 0.0, %v1418
    %1420 = vmatmul.f32.gmra.mxu0 %v565
    %v1421 = vpop.f32.mrf.mxu0
    %v1422 = vadd.f32 0.0, %v1421
    %1423 = vmatmul.f32.gmra.mxu0 %v568
    %v1424 = vpop.f32.mrf.mxu0
    %v1425 = vadd.f32 0.0, %v1424
    %1426 = vdwg.mxu0
    %1427 = vmatpush.msra.mxu0 0.0
    %1428 = vmatpush.msra.mxu0 0.0
    %1429 = vmatpush.msra.mxu0 0.0
    %1430 = vmatpush.msra.mxu0 0.0
    %1431 = vmatpush.msra.mxu0 0.0
    %1432 = vmatpush.msra.mxu0 0.0
    %1433 = vmatpush.msra.mxu0 0.0
    %1434 = vmatpush.msra.mxu0 0.0
    %1435 = vmatpush.msra.mxu0 0.0
    %1436 = vmatpush.msra.mxu0 0.0
    %1437 = vmatpush.msra.mxu0 0.0
    %1438 = vmatpush.msra.mxu0 0.0
    %1439 = vmatpush.msra.mxu0 0.0
    %1440 = vmatpush.msra.mxu0 %v638
    %1441 = vmatpush.msra.mxu0 %v467
    %1442 = vmatpush.msra.mxu0 %v415
    %1443 = vmatmul.f32.gmra.mxu0 %v556
    %v1444 = vpop.f32.mrf.mxu0
    %v1445 = vadd.f32 0.0, %v1444
    %1446 = vmatmul.f32.gmra.mxu0 %v559
    %v1447 = vpop.f32.mrf.mxu0
    %v1448 = vadd.f32 0.0, %v1447
    %1449 = vmatmul.f32.gmra.mxu0 %v562
    %v1450 = vpop.f32.mrf.mxu0
    %v1451 = vadd.f32 0.0, %v1450
    %1452 = vmatmul.f32.gmra.mxu0 %v565
    %v1453 = vpop.f32.mrf.mxu0
    %v1454 = vadd.f32 0.0, %v1453
    %1455 = vmatmul.f32.gmra.mxu0 %v568
    %v1456 = vpop.f32.mrf.mxu0
    %v1457 = vadd.f32 0.0, %v1456
    %1458 = vdwg.mxu0
    %1459 = vmatpush.msra.mxu0 0.0
    %1460 = vmatpush.msra.mxu0 0.0
    %1461 = vmatpush.msra.mxu0 0.0
    %1462 = vmatpush.msra.mxu0 0.0
    %1463 = vmatpush.msra.mxu0 0.0
    %1464 = vmatpush.msra.mxu0 0.0
    %1465 = vmatpush.msra.mxu0 0.0
    %1466 = vmatpush.msra.mxu0 0.0
    %1467 = vmatpush.msra.mxu0 0.0
    %1468 = vmatpush.msra.mxu0 0.0
    %1469 = vmatpush.msra.mxu0 0.0
    %1470 = vmatpush.msra.mxu0 0.0
    %1471 = vmatpush.msra.mxu0 0.0
    %1472 = vmatpush.msra.mxu0 %v641
    %1473 = vmatpush.msra.mxu0 %v468
    %1474 = vmatpush.msra.mxu0 %v416
    %1475 = vmatmul.f32.gmra.mxu0 %v556
    %v1476 = vpop.f32.mrf.mxu0
    %v1477 = vadd.f32 0.0, %v1476
    %1478 = vmatmul.f32.gmra.mxu0 %v559
    %v1479 = vpop.f32.mrf.mxu0
    %v1480 = vadd.f32 0.0, %v1479
    %1481 = vmatmul.f32.gmra.mxu0 %v562
    %v1482 = vpop.f32.mrf.mxu0
    %v1483 = vadd.f32 0.0, %v1482
    %1484 = vmatmul.f32.gmra.mxu0 %v565
    %v1485 = vpop.f32.mrf.mxu0
    %v1486 = vadd.f32 0.0, %v1485
    %1487 = vmatmul.f32.gmra.mxu0 %v568
    %v1488 = vpop.f32.mrf.mxu0
    %v1489 = vadd.f32 0.0, %v1488
    %1490 = vdwg.mxu0
    %1491 = vmatpush.msra.mxu0 0.0
    %1492 = vmatpush.msra.mxu0 0.0
    %1493 = vmatpush.msra.mxu0 0.0
    %1494 = vmatpush.msra.mxu0 0.0
    %1495 = vmatpush.msra.mxu0 0.0
    %1496 = vmatpush.msra.mxu0 0.0
    %1497 = vmatpush.msra.mxu0 0.0
    %1498 = vmatpush.msra.mxu0 0.0
    %1499 = vmatpush.msra.mxu0 0.0
    %1500 = vmatpush.msra.mxu0 0.0
    %1501 = vmatpush.msra.mxu0 0.0
    %1502 = vmatpush.msra.mxu0 0.0
    %1503 = vmatpush.msra.mxu0 0.0
    %1504 = vmatpush.msra.mxu0 %v644
    %1505 = vmatpush.msra.mxu0 %v469
    %1506 = vmatpush.msra.mxu0 %v417
    %1507 = vmatmul.f32.gmra.mxu0 %v556
    %v1508 = vpop.f32.mrf.mxu0
    %v1509 = vadd.f32 0.0, %v1508
    %1510 = vmatmul.f32.gmra.mxu0 %v559
    %v1511 = vpop.f32.mrf.mxu0
    %v1512 = vadd.f32 0.0, %v1511
    %1513 = vmatmul.f32.gmra.mxu0 %v562
    %v1514 = vpop.f32.mrf.mxu0
    %v1515 = vadd.f32 0.0, %v1514
    %1516 = vmatmul.f32.gmra.mxu0 %v565
    %v1517 = vpop.f32.mrf.mxu0
    %v1518 = vadd.f32 0.0, %v1517
    %1519 = vmatmul.f32.gmra.mxu0 %v568
    %v1520 = vpop.f32.mrf.mxu0
    %v1521 = vadd.f32 0.0, %v1520
    %1522 = vdwg.mxu0
    %1523 = vmatpush.msra.mxu0 0.0
    %1524 = vmatpush.msra.mxu0 0.0
    %1525 = vmatpush.msra.mxu0 0.0
    %1526 = vmatpush.msra.mxu0 0.0
    %1527 = vmatpush.msra.mxu0 0.0
    %1528 = vmatpush.msra.mxu0 0.0
    %1529 = vmatpush.msra.mxu0 0.0
    %1530 = vmatpush.msra.mxu0 0.0
    %1531 = vmatpush.msra.mxu0 0.0
    %1532 = vmatpush.msra.mxu0 0.0
    %1533 = vmatpush.msra.mxu0 0.0
    %1534 = vmatpush.msra.mxu0 0.0
    %1535 = vmatpush.msra.mxu0 0.0
    %1536 = vmatpush.msra.mxu0 %v647
    %1537 = vmatpush.msra.mxu0 %v470
    %1538 = vmatpush.msra.mxu0 %v418
    %1539 = vmatmul.f32.gmra.mxu0 %v556
    %v1540 = vpop.f32.mrf.mxu0
    %v1541 = vadd.f32 0.0, %v1540
    %1542 = vmatmul.f32.gmra.mxu0 %v559
    %v1543 = vpop.f32.mrf.mxu0
    %v1544 = vadd.f32 0.0, %v1543
    %1545 = vmatmul.f32.gmra.mxu0 %v562
    %v1546 = vpop.f32.mrf.mxu0
    %v1547 = vadd.f32 0.0, %v1546
    %1548 = vmatmul.f32.gmra.mxu0 %v565
    %v1549 = vpop.f32.mrf.mxu0
    %v1550 = vadd.f32 0.0, %v1549
    %1551 = vmatmul.f32.gmra.mxu0 %v568
    %v1552 = vpop.f32.mrf.mxu0
    %v1553 = vadd.f32 0.0, %v1552
    %1554 = vdwg.mxu0
    %1555 = vmatpush.msra.mxu0 0.0
    %1556 = vmatpush.msra.mxu0 0.0
    %1557 = vmatpush.msra.mxu0 0.0
    %1558 = vmatpush.msra.mxu0 0.0
    %1559 = vmatpush.msra.mxu0 0.0
    %1560 = vmatpush.msra.mxu0 0.0
    %1561 = vmatpush.msra.mxu0 0.0
    %1562 = vmatpush.msra.mxu0 0.0
    %1563 = vmatpush.msra.mxu0 0.0
    %1564 = vmatpush.msra.mxu0 0.0
    %1565 = vmatpush.msra.mxu0 0.0
    %1566 = vmatpush.msra.mxu0 0.0
    %1567 = vmatpush.msra.mxu0 0.0
    %1568 = vmatpush.msra.mxu0 %v650
    %1569 = vmatpush.msra.mxu0 %v471
    %1570 = vmatpush.msra.mxu0 %v419
    %1571 = vmatmul.f32.gmra.mxu0 %v556
    %v1572 = vpop.f32.mrf.mxu0
    %v1573 = vadd.f32 0.0, %v1572
    %1574 = vmatmul.f32.gmra.mxu0 %v559
    %v1575 = vpop.f32.mrf.mxu0
    %v1576 = vadd.f32 0.0, %v1575
    %1577 = vmatmul.f32.gmra.mxu0 %v562
    %v1578 = vpop.f32.mrf.mxu0
    %v1579 = vadd.f32 0.0, %v1578
    %1580 = vmatmul.f32.gmra.mxu0 %v565
    %v1581 = vpop.f32.mrf.mxu0
    %v1582 = vadd.f32 0.0, %v1581
    %1583 = vmatmul.f32.gmra.mxu0 %v568
    %v1584 = vpop.f32.mrf.mxu0
    %v1585 = vadd.f32 0.0, %v1584
    %1586 = vdwg.mxu0
    %1587 = vmatpush.msra.mxu0 0.0
    %1588 = vmatpush.msra.mxu0 0.0
    %1589 = vmatpush.msra.mxu0 0.0
    %1590 = vmatpush.msra.mxu0 0.0
    %1591 = vmatpush.msra.mxu0 0.0
    %1592 = vmatpush.msra.mxu0 0.0
    %1593 = vmatpush.msra.mxu0 0.0
    %1594 = vmatpush.msra.mxu0 0.0
    %1595 = vmatpush.msra.mxu0 0.0
    %1596 = vmatpush.msra.mxu0 0.0
    %1597 = vmatpush.msra.mxu0 0.0
    %1598 = vmatpush.msra.mxu0 0.0
    %1599 = vmatpush.msra.mxu0 0.0
    %1600 = vmatpush.msra.mxu0 %v653
    %1601 = vmatpush.msra.mxu0 %v472
    %1602 = vmatpush.msra.mxu0 %v420
    %1603 = vmatmul.f32.gmra.mxu0 %v556
    %v1604 = vpop.f32.mrf.mxu0
    %v1605 = vadd.f32 0.0, %v1604
    %1606 = vmatmul.f32.gmra.mxu0 %v559
    %v1607 = vpop.f32.mrf.mxu0
    %v1608 = vadd.f32 0.0, %v1607
    %1609 = vmatmul.f32.gmra.mxu0 %v562
    %v1610 = vpop.f32.mrf.mxu0
    %v1611 = vadd.f32 0.0, %v1610
    %1612 = vmatmul.f32.gmra.mxu0 %v565
    %v1613 = vpop.f32.mrf.mxu0
    %v1614 = vadd.f32 0.0, %v1613
    %1615 = vmatmul.f32.gmra.mxu0 %v568
    %v1616 = vpop.f32.mrf.mxu0
    %v1617 = vadd.f32 0.0, %v1616
    %1618 = vdwg.mxu0
    %1619 = vmatpush.msra.mxu0 0.0
    %1620 = vmatpush.msra.mxu0 0.0
    %1621 = vmatpush.msra.mxu0 0.0
    %1622 = vmatpush.msra.mxu0 0.0
    %1623 = vmatpush.msra.mxu0 0.0
    %1624 = vmatpush.msra.mxu0 0.0
    %1625 = vmatpush.msra.mxu0 0.0
    %1626 = vmatpush.msra.mxu0 0.0
    %1627 = vmatpush.msra.mxu0 0.0
    %1628 = vmatpush.msra.mxu0 0.0
    %1629 = vmatpush.msra.mxu0 0.0
    %1630 = vmatpush.msra.mxu0 0.0
    %1631 = vmatpush.msra.mxu0 0.0
    %1632 = vmatpush.msra.mxu0 %v656
    %1633 = vmatpush.msra.mxu0 %v473
    %1634 = vmatpush.msra.mxu0 %v421
    %1635 = vmatmul.f32.gmra.mxu0 %v556
    %v1636 = vpop.f32.mrf.mxu0
    %v1637 = vadd.f32 0.0, %v1636
    %1638 = vmatmul.f32.gmra.mxu0 %v559
    %v1639 = vpop.f32.mrf.mxu0
    %v1640 = vadd.f32 0.0, %v1639
    %1641 = vmatmul.f32.gmra.mxu0 %v562
    %v1642 = vpop.f32.mrf.mxu0
    %v1643 = vadd.f32 0.0, %v1642
    %1644 = vmatmul.f32.gmra.mxu0 %v565
    %v1645 = vpop.f32.mrf.mxu0
    %v1646 = vadd.f32 0.0, %v1645
    %1647 = vmatmul.f32.gmra.mxu0 %v568
    %v1648 = vpop.f32.mrf.mxu0
    %v1649 = vadd.f32 0.0, %v1648
    %1650 = vdwg.mxu0
    %1651 = vmatpush.msra.mxu0 0.0
    %1652 = vmatpush.msra.mxu0 0.0
    %1653 = vmatpush.msra.mxu0 0.0
    %1654 = vmatpush.msra.mxu0 0.0
    %1655 = vmatpush.msra.mxu0 0.0
    %1656 = vmatpush.msra.mxu0 0.0
    %1657 = vmatpush.msra.mxu0 0.0
    %1658 = vmatpush.msra.mxu0 0.0
    %1659 = vmatpush.msra.mxu0 0.0
    %1660 = vmatpush.msra.mxu0 0.0
    %1661 = vmatpush.msra.mxu0 0.0
    %1662 = vmatpush.msra.mxu0 0.0
    %1663 = vmatpush.msra.mxu0 0.0
    %1664 = vmatpush.msra.mxu0 %v659
    %1665 = vmatpush.msra.mxu0 %v474
    %1666 = vmatpush.msra.mxu0 %v422
    %1667 = vmatmul.f32.gmra.mxu0 %v556
    %v1668 = vpop.f32.mrf.mxu0
    %v1669 = vadd.f32 0.0, %v1668
    %1670 = vmatmul.f32.gmra.mxu0 %v559
    %v1671 = vpop.f32.mrf.mxu0
    %v1672 = vadd.f32 0.0, %v1671
    %1673 = vmatmul.f32.gmra.mxu0 %v562
    %v1674 = vpop.f32.mrf.mxu0
    %v1675 = vadd.f32 0.0, %v1674
    %1676 = vmatmul.f32.gmra.mxu0 %v565
    %v1677 = vpop.f32.mrf.mxu0
    %v1678 = vadd.f32 0.0, %v1677
    %1679 = vmatmul.f32.gmra.mxu0 %v568
    %v1680 = vpop.f32.mrf.mxu0
    %v1681 = vadd.f32 0.0, %v1680
    %1682 = vdwg.mxu0
    %1683 = vmatpush.msra.mxu0 0.0
    %1684 = vmatpush.msra.mxu0 0.0
    %1685 = vmatpush.msra.mxu0 0.0
    %1686 = vmatpush.msra.mxu0 0.0
    %1687 = vmatpush.msra.mxu0 0.0
    %1688 = vmatpush.msra.mxu0 0.0
    %1689 = vmatpush.msra.mxu0 0.0
    %1690 = vmatpush.msra.mxu0 0.0
    %1691 = vmatpush.msra.mxu0 0.0
    %1692 = vmatpush.msra.mxu0 0.0
    %1693 = vmatpush.msra.mxu0 0.0
    %1694 = vmatpush.msra.mxu0 0.0
    %1695 = vmatpush.msra.mxu0 0.0
    %1696 = vmatpush.msra.mxu0 %v662
    %1697 = vmatpush.msra.mxu0 %v475
    %1698 = vmatpush.msra.mxu0 %v423
    %1699 = vmatmul.f32.gmra.mxu0 %v556
    %v1700 = vpop.f32.mrf.mxu0
    %v1701 = vadd.f32 0.0, %v1700
    %1702 = vmatmul.f32.gmra.mxu0 %v559
    %v1703 = vpop.f32.mrf.mxu0
    %v1704 = vadd.f32 0.0, %v1703
    %1705 = vmatmul.f32.gmra.mxu0 %v562
    %v1706 = vpop.f32.mrf.mxu0
    %v1707 = vadd.f32 0.0, %v1706
    %1708 = vmatmul.f32.gmra.mxu0 %v565
    %v1709 = vpop.f32.mrf.mxu0
    %v1710 = vadd.f32 0.0, %v1709
    %1711 = vmatmul.f32.gmra.mxu0 %v568
    %v1712 = vpop.f32.mrf.mxu0
    %v1713 = vadd.f32 0.0, %v1712
    %1714 = vdwg.mxu0
    %1715 = vmatpush.msra.mxu0 0.0
    %1716 = vmatpush.msra.mxu0 0.0
    %1717 = vmatpush.msra.mxu0 0.0
    %1718 = vmatpush.msra.mxu0 0.0
    %1719 = vmatpush.msra.mxu0 0.0
    %1720 = vmatpush.msra.mxu0 0.0
    %1721 = vmatpush.msra.mxu0 0.0
    %1722 = vmatpush.msra.mxu0 0.0
    %1723 = vmatpush.msra.mxu0 0.0
    %1724 = vmatpush.msra.mxu0 0.0
    %1725 = vmatpush.msra.mxu0 0.0
    %1726 = vmatpush.msra.mxu0 0.0
    %1727 = vmatpush.msra.mxu0 0.0
    %1728 = vmatpush.msra.mxu0 %v665
    %1729 = vmatpush.msra.mxu0 %v476
    %1730 = vmatpush.msra.mxu0 %v424
    %1731 = vmatmul.f32.gmra.mxu0 %v556
    %v1732 = vpop.f32.mrf.mxu0
    %v1733 = vadd.f32 0.0, %v1732
    %1734 = vmatmul.f32.gmra.mxu0 %v559
    %v1735 = vpop.f32.mrf.mxu0
    %v1736 = vadd.f32 0.0, %v1735
    %1737 = vmatmul.f32.gmra.mxu0 %v562
    %v1738 = vpop.f32.mrf.mxu0
    %v1739 = vadd.f32 0.0, %v1738
    %1740 = vmatmul.f32.gmra.mxu0 %v565
    %v1741 = vpop.f32.mrf.mxu0
    %v1742 = vadd.f32 0.0, %v1741
    %1743 = vmatmul.f32.gmra.mxu0 %v568
    %v1744 = vpop.f32.mrf.mxu0
    %v1745 = vadd.f32 0.0, %v1744
    %1746 = vdwg.mxu0
    %1747 = vmatpush.msra.mxu0 0.0
    %1748 = vmatpush.msra.mxu0 0.0
    %1749 = vmatpush.msra.mxu0 0.0
    %1750 = vmatpush.msra.mxu0 0.0
    %1751 = vmatpush.msra.mxu0 0.0
    %1752 = vmatpush.msra.mxu0 0.0
    %1753 = vmatpush.msra.mxu0 0.0
    %1754 = vmatpush.msra.mxu0 0.0
    %1755 = vmatpush.msra.mxu0 0.0
    %1756 = vmatpush.msra.mxu0 0.0
    %1757 = vmatpush.msra.mxu0 0.0
    %1758 = vmatpush.msra.mxu0 0.0
    %1759 = vmatpush.msra.mxu0 0.0
    %1760 = vmatpush.msra.mxu0 %v668
    %1761 = vmatpush.msra.mxu0 %v477
    %1762 = vmatpush.msra.mxu0 %v425
    %1763 = vmatmul.f32.gmra.mxu0 %v556
    %v1764 = vpop.f32.mrf.mxu0
    %v1765 = vadd.f32 0.0, %v1764
    %1766 = vmatmul.f32.gmra.mxu0 %v559
    %v1767 = vpop.f32.mrf.mxu0
    %v1768 = vadd.f32 0.0, %v1767
    %1769 = vmatmul.f32.gmra.mxu0 %v562
    %v1770 = vpop.f32.mrf.mxu0
    %v1771 = vadd.f32 0.0, %v1770
    %1772 = vmatmul.f32.gmra.mxu0 %v565
    %v1773 = vpop.f32.mrf.mxu0
    %v1774 = vadd.f32 0.0, %v1773
    %1775 = vmatmul.f32.gmra.mxu0 %v568
    %v1776 = vpop.f32.mrf.mxu0
    %v1777 = vadd.f32 0.0, %v1776
    %1778 = vdwg.mxu0
    %1779 = vmatpush.msra.mxu0 0.0
    %1780 = vmatpush.msra.mxu0 0.0
    %1781 = vmatpush.msra.mxu0 0.0
    %1782 = vmatpush.msra.mxu0 0.0
    %1783 = vmatpush.msra.mxu0 0.0
    %1784 = vmatpush.msra.mxu0 0.0
    %1785 = vmatpush.msra.mxu0 0.0
    %1786 = vmatpush.msra.mxu0 0.0
    %1787 = vmatpush.msra.mxu0 0.0
    %1788 = vmatpush.msra.mxu0 0.0
    %1789 = vmatpush.msra.mxu0 0.0
    %1790 = vmatpush.msra.mxu0 0.0
    %1791 = vmatpush.msra.mxu0 0.0
    %1792 = vmatpush.msra.mxu0 %v671
    %1793 = vmatpush.msra.mxu0 %v478
    %1794 = vmatpush.msra.mxu0 %v426
    %1795 = vmatmul.f32.gmra.mxu0 %v556
    %v1796 = vpop.f32.mrf.mxu0
    %v1797 = vadd.f32 0.0, %v1796
    %1798 = vmatmul.f32.gmra.mxu0 %v559
    %v1799 = vpop.f32.mrf.mxu0
    %v1800 = vadd.f32 0.0, %v1799
    %1801 = vmatmul.f32.gmra.mxu0 %v562
    %v1802 = vpop.f32.mrf.mxu0
    %v1803 = vadd.f32 0.0, %v1802
    %1804 = vmatmul.f32.gmra.mxu0 %v565
    %v1805 = vpop.f32.mrf.mxu0
    %v1806 = vadd.f32 0.0, %v1805
    %1807 = vmatmul.f32.gmra.mxu0 %v568
    %v1808 = vpop.f32.mrf.mxu0
    %v1809 = vadd.f32 0.0, %v1808
    %1810 = vdwg.mxu0
    %1811 = vmatpush.msra.mxu0 0.0
    %1812 = vmatpush.msra.mxu0 0.0
    %1813 = vmatpush.msra.mxu0 0.0
    %1814 = vmatpush.msra.mxu0 0.0
    %1815 = vmatpush.msra.mxu0 0.0
    %1816 = vmatpush.msra.mxu0 0.0
    %1817 = vmatpush.msra.mxu0 0.0
    %1818 = vmatpush.msra.mxu0 0.0
    %1819 = vmatpush.msra.mxu0 0.0
    %1820 = vmatpush.msra.mxu0 0.0
    %1821 = vmatpush.msra.mxu0 0.0
    %1822 = vmatpush.msra.mxu0 0.0
    %1823 = vmatpush.msra.mxu0 0.0
    %1824 = vmatpush.msra.mxu0 %v674
    %1825 = vmatpush.msra.mxu0 %v479
    %1826 = vmatpush.msra.mxu0 %v427
    %1827 = vmatmul.f32.gmra.mxu0 %v556
    %v1828 = vpop.f32.mrf.mxu0
    %v1829 = vadd.f32 0.0, %v1828
    %1830 = vmatmul.f32.gmra.mxu0 %v559
    %v1831 = vpop.f32.mrf.mxu0
    %v1832 = vadd.f32 0.0, %v1831
    %1833 = vmatmul.f32.gmra.mxu0 %v562
    %v1834 = vpop.f32.mrf.mxu0
    %v1835 = vadd.f32 0.0, %v1834
    %1836 = vmatmul.f32.gmra.mxu0 %v565
    %v1837 = vpop.f32.mrf.mxu0
    %v1838 = vadd.f32 0.0, %v1837
    %1839 = vmatmul.f32.gmra.mxu0 %v568
    %v1840 = vpop.f32.mrf.mxu0
    %v1841 = vadd.f32 0.0, %v1840
    %1842 = vdwg.mxu0
    %1843 = vmatpush.msra.mxu0 0.0
    %1844 = vmatpush.msra.mxu0 0.0
    %1845 = vmatpush.msra.mxu0 0.0
    %1846 = vmatpush.msra.mxu0 0.0
    %1847 = vmatpush.msra.mxu0 0.0
    %1848 = vmatpush.msra.mxu0 0.0
    %1849 = vmatpush.msra.mxu0 0.0
    %1850 = vmatpush.msra.mxu0 0.0
    %1851 = vmatpush.msra.mxu0 0.0
    %1852 = vmatpush.msra.mxu0 0.0
    %1853 = vmatpush.msra.mxu0 0.0
    %1854 = vmatpush.msra.mxu0 0.0
    %1855 = vmatpush.msra.mxu0 0.0
    %1856 = vmatpush.msra.mxu0 %v677
    %1857 = vmatpush.msra.mxu0 %v480
    %1858 = vmatpush.msra.mxu0 %v428
    %1859 = vmatmul.f32.gmra.mxu0 %v556
    %v1860 = vpop.f32.mrf.mxu0
    %v1861 = vadd.f32 0.0, %v1860
    %1862 = vmatmul.f32.gmra.mxu0 %v559
    %v1863 = vpop.f32.mrf.mxu0
    %v1864 = vadd.f32 0.0, %v1863
    %1865 = vmatmul.f32.gmra.mxu0 %v562
    %v1866 = vpop.f32.mrf.mxu0
    %v1867 = vadd.f32 0.0, %v1866
    %1868 = vmatmul.f32.gmra.mxu0 %v565
    %v1869 = vpop.f32.mrf.mxu0
    %v1870 = vadd.f32 0.0, %v1869
    %1871 = vmatmul.f32.gmra.mxu0 %v568
    %v1872 = vpop.f32.mrf.mxu0
    %v1873 = vadd.f32 0.0, %v1872
    %1874 = vdwg.mxu0
    %1875 = vmatpush.msra.mxu0 0.0
    %1876 = vmatpush.msra.mxu0 0.0
    %1877 = vmatpush.msra.mxu0 0.0
    %1878 = vmatpush.msra.mxu0 0.0
    %1879 = vmatpush.msra.mxu0 0.0
    %1880 = vmatpush.msra.mxu0 0.0
    %1881 = vmatpush.msra.mxu0 0.0
    %1882 = vmatpush.msra.mxu0 0.0
    %1883 = vmatpush.msra.mxu0 0.0
    %1884 = vmatpush.msra.mxu0 0.0
    %1885 = vmatpush.msra.mxu0 0.0
    %1886 = vmatpush.msra.mxu0 0.0
    %1887 = vmatpush.msra.mxu0 0.0
    %1888 = vmatpush.msra.mxu0 %v680
    %1889 = vmatpush.msra.mxu0 %v481
    %1890 = vmatpush.msra.mxu0 %v429
    %1891 = vmatmul.f32.gmra.mxu0 %v556
    %v1892 = vpop.f32.mrf.mxu0
    %v1893 = vadd.f32 0.0, %v1892
    %1894 = vmatmul.f32.gmra.mxu0 %v559
    %v1895 = vpop.f32.mrf.mxu0
    %v1896 = vadd.f32 0.0, %v1895
    %1897 = vmatmul.f32.gmra.mxu0 %v562
    %v1898 = vpop.f32.mrf.mxu0
    %v1899 = vadd.f32 0.0, %v1898
    %1900 = vmatmul.f32.gmra.mxu0 %v565
    %v1901 = vpop.f32.mrf.mxu0
    %v1902 = vadd.f32 0.0, %v1901
    %1903 = vmatmul.f32.gmra.mxu0 %v568
    %v1904 = vpop.f32.mrf.mxu0
    %v1905 = vadd.f32 0.0, %v1904
    %1906 = vdwg.mxu0
    %1907 = vmatpush.msra.mxu0 0.0
    %1908 = vmatpush.msra.mxu0 0.0
    %1909 = vmatpush.msra.mxu0 0.0
    %1910 = vmatpush.msra.mxu0 0.0
    %1911 = vmatpush.msra.mxu0 0.0
    %1912 = vmatpush.msra.mxu0 0.0
    %1913 = vmatpush.msra.mxu0 0.0
    %1914 = vmatpush.msra.mxu0 0.0
    %1915 = vmatpush.msra.mxu0 0.0
    %1916 = vmatpush.msra.mxu0 0.0
    %1917 = vmatpush.msra.mxu0 0.0
    %1918 = vmatpush.msra.mxu0 0.0
    %1919 = vmatpush.msra.mxu0 0.0
    %1920 = vmatpush.msra.mxu0 %v683
    %1921 = vmatpush.msra.mxu0 %v482
    %1922 = vmatpush.msra.mxu0 %v430
    %1923 = vmatmul.f32.gmra.mxu0 %v556
    %v1924 = vpop.f32.mrf.mxu0
    %v1925 = vadd.f32 0.0, %v1924
    %1926 = vmatmul.f32.gmra.mxu0 %v559
    %v1927 = vpop.f32.mrf.mxu0
    %v1928 = vadd.f32 0.0, %v1927
    %1929 = vmatmul.f32.gmra.mxu0 %v562
    %v1930 = vpop.f32.mrf.mxu0
    %v1931 = vadd.f32 0.0, %v1930
    %1932 = vmatmul.f32.gmra.mxu0 %v565
    %v1933 = vpop.f32.mrf.mxu0
    %v1934 = vadd.f32 0.0, %v1933
    %1935 = vmatmul.f32.gmra.mxu0 %v568
    %v1936 = vpop.f32.mrf.mxu0
    %v1937 = vadd.f32 0.0, %v1936
    %1938 = vdwg.mxu0
    %1939 = vmatpush.msra.mxu0 0.0
    %1940 = vmatpush.msra.mxu0 0.0
    %1941 = vmatpush.msra.mxu0 0.0
    %1942 = vmatpush.msra.mxu0 0.0
    %1943 = vmatpush.msra.mxu0 0.0
    %1944 = vmatpush.msra.mxu0 0.0
    %1945 = vmatpush.msra.mxu0 0.0
    %1946 = vmatpush.msra.mxu0 0.0
    %1947 = vmatpush.msra.mxu0 0.0
    %1948 = vmatpush.msra.mxu0 0.0
    %1949 = vmatpush.msra.mxu0 0.0
    %1950 = vmatpush.msra.mxu0 0.0
    %1951 = vmatpush.msra.mxu0 0.0
    %1952 = vmatpush.msra.mxu0 %v686
    %1953 = vmatpush.msra.mxu0 %v483
    %1954 = vmatpush.msra.mxu0 %v431
    %1955 = vmatmul.f32.gmra.mxu0 %v556
    %v1956 = vpop.f32.mrf.mxu0
    %v1957 = vadd.f32 0.0, %v1956
    %1958 = vmatmul.f32.gmra.mxu0 %v559
    %v1959 = vpop.f32.mrf.mxu0
    %v1960 = vadd.f32 0.0, %v1959
    %1961 = vmatmul.f32.gmra.mxu0 %v562
    %v1962 = vpop.f32.mrf.mxu0
    %v1963 = vadd.f32 0.0, %v1962
    %1964 = vmatmul.f32.gmra.mxu0 %v565
    %v1965 = vpop.f32.mrf.mxu0
    %v1966 = vadd.f32 0.0, %v1965
    %1967 = vmatmul.f32.gmra.mxu0 %v568
    %v1968 = vpop.f32.mrf.mxu0
    %v1969 = vadd.f32 0.0, %v1968
    %1970 = vdwg.mxu0
    %1971 = vmatpush.msra.mxu0 0.0
    %1972 = vmatpush.msra.mxu0 0.0
    %1973 = vmatpush.msra.mxu0 0.0
    %1974 = vmatpush.msra.mxu0 0.0
    %1975 = vmatpush.msra.mxu0 0.0
    %1976 = vmatpush.msra.mxu0 0.0
    %1977 = vmatpush.msra.mxu0 0.0
    %1978 = vmatpush.msra.mxu0 0.0
    %1979 = vmatpush.msra.mxu0 0.0
    %1980 = vmatpush.msra.mxu0 0.0
    %1981 = vmatpush.msra.mxu0 0.0
    %1982 = vmatpush.msra.mxu0 0.0
    %1983 = vmatpush.msra.mxu0 0.0
    %1984 = vmatpush.msra.mxu0 %v689
    %1985 = vmatpush.msra.mxu0 %v484
    %1986 = vmatpush.msra.mxu0 %v432
    %1987 = vmatmul.f32.gmra.mxu0 %v556
    %v1988 = vpop.f32.mrf.mxu0
    %v1989 = vadd.f32 0.0, %v1988
    %1990 = vmatmul.f32.gmra.mxu0 %v559
    %v1991 = vpop.f32.mrf.mxu0
    %v1992 = vadd.f32 0.0, %v1991
    %1993 = vmatmul.f32.gmra.mxu0 %v562
    %v1994 = vpop.f32.mrf.mxu0
    %v1995 = vadd.f32 0.0, %v1994
    %1996 = vmatmul.f32.gmra.mxu0 %v565
    %v1997 = vpop.f32.mrf.mxu0
    %v1998 = vadd.f32 0.0, %v1997
    %1999 = vmatmul.f32.gmra.mxu0 %v568
    %v2000 = vpop.f32.mrf.mxu0
    %v2001 = vadd.f32 0.0, %v2000
    %2002 = vdwg.mxu0
    %2003 = vmatpush.msra.mxu0 0.0
    %2004 = vmatpush.msra.mxu0 0.0
    %2005 = vmatpush.msra.mxu0 0.0
    %2006 = vmatpush.msra.mxu0 0.0
    %2007 = vmatpush.msra.mxu0 0.0
    %2008 = vmatpush.msra.mxu0 0.0
    %2009 = vmatpush.msra.mxu0 0.0
    %2010 = vmatpush.msra.mxu0 0.0
    %2011 = vmatpush.msra.mxu0 0.0
    %2012 = vmatpush.msra.mxu0 0.0
    %2013 = vmatpush.msra.mxu0 0.0
    %2014 = vmatpush.msra.mxu0 0.0
    %2015 = vmatpush.msra.mxu0 0.0
    %2016 = vmatpush.msra.mxu0 %v692
    %2017 = vmatpush.msra.mxu0 %v485
    %2018 = vmatpush.msra.mxu0 %v433
    %2019 = vmatmul.f32.gmra.mxu0 %v556
    %v2020 = vpop.f32.mrf.mxu0
    %v2021 = vadd.f32 0.0, %v2020
    %2022 = vmatmul.f32.gmra.mxu0 %v559
    %v2023 = vpop.f32.mrf.mxu0
    %v2024 = vadd.f32 0.0, %v2023
    %2025 = vmatmul.f32.gmra.mxu0 %v562
    %v2026 = vpop.f32.mrf.mxu0
    %v2027 = vadd.f32 0.0, %v2026
    %2028 = vmatmul.f32.gmra.mxu0 %v565
    %v2029 = vpop.f32.mrf.mxu0
    %v2030 = vadd.f32 0.0, %v2029
    %2031 = vmatmul.f32.gmra.mxu0 %v568
    %v2032 = vpop.f32.mrf.mxu0
    %v2033 = vadd.f32 0.0, %v2032
    %2034 = vdwg.mxu0
    %2035 = vmatpush.msra.mxu0 0.0
    %2036 = vmatpush.msra.mxu0 0.0
    %2037 = vmatpush.msra.mxu0 0.0
    %2038 = vmatpush.msra.mxu0 0.0
    %2039 = vmatpush.msra.mxu0 0.0
    %2040 = vmatpush.msra.mxu0 0.0
    %2041 = vmatpush.msra.mxu0 0.0
    %2042 = vmatpush.msra.mxu0 0.0
    %2043 = vmatpush.msra.mxu0 0.0
    %2044 = vmatpush.msra.mxu0 0.0
    %2045 = vmatpush.msra.mxu0 0.0
    %2046 = vmatpush.msra.mxu0 0.0
    %2047 = vmatpush.msra.mxu0 0.0
    %2048 = vmatpush.msra.mxu0 %v695
    %2049 = vmatpush.msra.mxu0 %v486
    %2050 = vmatpush.msra.mxu0 %v434
    %2051 = vmatmul.f32.gmra.mxu0 %v556
    %v2052 = vpop.f32.mrf.mxu0
    %v2053 = vadd.f32 0.0, %v2052
    %2054 = vmatmul.f32.gmra.mxu0 %v559
    %v2055 = vpop.f32.mrf.mxu0
    %v2056 = vadd.f32 0.0, %v2055
    %2057 = vmatmul.f32.gmra.mxu0 %v562
    %v2058 = vpop.f32.mrf.mxu0
    %v2059 = vadd.f32 0.0, %v2058
    %2060 = vmatmul.f32.gmra.mxu0 %v565
    %v2061 = vpop.f32.mrf.mxu0
    %v2062 = vadd.f32 0.0, %v2061
    %2063 = vmatmul.f32.gmra.mxu0 %v568
    %v2064 = vpop.f32.mrf.mxu0
    %v2065 = vadd.f32 0.0, %v2064
    %2066 = vdwg.mxu0
    %2067 = vmatpush.msra.mxu0 0.0
    %2068 = vmatpush.msra.mxu0 0.0
    %2069 = vmatpush.msra.mxu0 0.0
    %2070 = vmatpush.msra.mxu0 0.0
    %2071 = vmatpush.msra.mxu0 0.0
    %2072 = vmatpush.msra.mxu0 0.0
    %2073 = vmatpush.msra.mxu0 0.0
    %2074 = vmatpush.msra.mxu0 0.0
    %2075 = vmatpush.msra.mxu0 0.0
    %2076 = vmatpush.msra.mxu0 0.0
    %2077 = vmatpush.msra.mxu0 0.0
    %2078 = vmatpush.msra.mxu0 0.0
    %2079 = vmatpush.msra.mxu0 0.0
    %2080 = vmatpush.msra.mxu0 %v698
    %2081 = vmatpush.msra.mxu0 %v487
    %2082 = vmatpush.msra.mxu0 %v435
    %2083 = vmatmul.f32.gmra.mxu0 %v556
    %v2084 = vpop.f32.mrf.mxu0
    %v2085 = vadd.f32 0.0, %v2084
    %2086 = vmatmul.f32.gmra.mxu0 %v559
    %v2087 = vpop.f32.mrf.mxu0
    %v2088 = vadd.f32 0.0, %v2087
    %2089 = vmatmul.f32.gmra.mxu0 %v562
    %v2090 = vpop.f32.mrf.mxu0
    %v2091 = vadd.f32 0.0, %v2090
    %2092 = vmatmul.f32.gmra.mxu0 %v565
    %v2093 = vpop.f32.mrf.mxu0
    %v2094 = vadd.f32 0.0, %v2093
    %2095 = vmatmul.f32.gmra.mxu0 %v568
    %v2096 = vpop.f32.mrf.mxu0
    %v2097 = vadd.f32 0.0, %v2096
    %2098 = vdwg.mxu0
    %2099 = vmatpush.msra.mxu0 0.0
    %2100 = vmatpush.msra.mxu0 0.0
    %2101 = vmatpush.msra.mxu0 0.0
    %2102 = vmatpush.msra.mxu0 0.0
    %2103 = vmatpush.msra.mxu0 0.0
    %2104 = vmatpush.msra.mxu0 0.0
    %2105 = vmatpush.msra.mxu0 0.0
    %2106 = vmatpush.msra.mxu0 0.0
    %2107 = vmatpush.msra.mxu0 0.0
    %2108 = vmatpush.msra.mxu0 0.0
    %2109 = vmatpush.msra.mxu0 0.0
    %2110 = vmatpush.msra.mxu0 0.0
    %2111 = vmatpush.msra.mxu0 0.0
    %2112 = vmatpush.msra.mxu0 %v701
    %2113 = vmatpush.msra.mxu0 %v488
    %2114 = vmatpush.msra.mxu0 %v436
    %2115 = vmatmul.f32.gmra.mxu0 %v556
    %v2116 = vpop.f32.mrf.mxu0
    %v2117 = vadd.f32 0.0, %v2116
    %2118 = vmatmul.f32.gmra.mxu0 %v559
    %v2119 = vpop.f32.mrf.mxu0
    %v2120 = vadd.f32 0.0, %v2119
    %2121 = vmatmul.f32.gmra.mxu0 %v562
    %v2122 = vpop.f32.mrf.mxu0
    %v2123 = vadd.f32 0.0, %v2122
    %2124 = vmatmul.f32.gmra.mxu0 %v565
    %v2125 = vpop.f32.mrf.mxu0
    %v2126 = vadd.f32 0.0, %v2125
    %2127 = vmatmul.f32.gmra.mxu0 %v568
    %v2128 = vpop.f32.mrf.mxu0
    %v2129 = vadd.f32 0.0, %v2128
    %2130 = vdwg.mxu0
    %2131 = vmatpush.msra.mxu0 0.0
    %2132 = vmatpush.msra.mxu0 0.0
    %2133 = vmatpush.msra.mxu0 0.0
    %2134 = vmatpush.msra.mxu0 0.0
    %2135 = vmatpush.msra.mxu0 0.0
    %2136 = vmatpush.msra.mxu0 0.0
    %2137 = vmatpush.msra.mxu0 0.0
    %2138 = vmatpush.msra.mxu0 0.0
    %2139 = vmatpush.msra.mxu0 0.0
    %2140 = vmatpush.msra.mxu0 0.0
    %2141 = vmatpush.msra.mxu0 0.0
    %2142 = vmatpush.msra.mxu0 0.0
    %2143 = vmatpush.msra.mxu0 0.0
    %2144 = vmatpush.msra.mxu0 %v704
    %2145 = vmatpush.msra.mxu0 %v489
    %2146 = vmatpush.msra.mxu0 %v437
    %2147 = vmatmul.f32.gmra.mxu0 %v556
    %v2148 = vpop.f32.mrf.mxu0
    %v2149 = vadd.f32 0.0, %v2148
    %2150 = vmatmul.f32.gmra.mxu0 %v559
    %v2151 = vpop.f32.mrf.mxu0
    %v2152 = vadd.f32 0.0, %v2151
    %2153 = vmatmul.f32.gmra.mxu0 %v562
    %v2154 = vpop.f32.mrf.mxu0
    %v2155 = vadd.f32 0.0, %v2154
    %2156 = vmatmul.f32.gmra.mxu0 %v565
    %v2157 = vpop.f32.mrf.mxu0
    %v2158 = vadd.f32 0.0, %v2157
    %2159 = vmatmul.f32.gmra.mxu0 %v568
    %v2160 = vpop.f32.mrf.mxu0
    %v2161 = vadd.f32 0.0, %v2160
    %2162 = vdwg.mxu0
    %2163 = vmatpush.msra.mxu0 0.0
    %2164 = vmatpush.msra.mxu0 0.0
    %2165 = vmatpush.msra.mxu0 0.0
    %2166 = vmatpush.msra.mxu0 0.0
    %2167 = vmatpush.msra.mxu0 0.0
    %2168 = vmatpush.msra.mxu0 0.0
    %2169 = vmatpush.msra.mxu0 0.0
    %2170 = vmatpush.msra.mxu0 0.0
    %2171 = vmatpush.msra.mxu0 0.0
    %2172 = vmatpush.msra.mxu0 0.0
    %2173 = vmatpush.msra.mxu0 0.0
    %2174 = vmatpush.msra.mxu0 0.0
    %2175 = vmatpush.msra.mxu0 0.0
    %2176 = vmatpush.msra.mxu0 %v707
    %2177 = vmatpush.msra.mxu0 %v490
    %2178 = vmatpush.msra.mxu0 %v438
    %2179 = vmatmul.f32.gmra.mxu0 %v556
    %v2180 = vpop.f32.mrf.mxu0
    %v2181 = vadd.f32 0.0, %v2180
    %2182 = vmatmul.f32.gmra.mxu0 %v559
    %v2183 = vpop.f32.mrf.mxu0
    %v2184 = vadd.f32 0.0, %v2183
    %2185 = vmatmul.f32.gmra.mxu0 %v562
    %v2186 = vpop.f32.mrf.mxu0
    %v2187 = vadd.f32 0.0, %v2186
    %2188 = vmatmul.f32.gmra.mxu0 %v565
    %v2189 = vpop.f32.mrf.mxu0
    %v2190 = vadd.f32 0.0, %v2189
    %2191 = vmatmul.f32.gmra.mxu0 %v568
    %v2192 = vpop.f32.mrf.mxu0
    %v2193 = vadd.f32 0.0, %v2192
    %2194 = vdwg.mxu0
    %2195 = vmatpush.msra.mxu0 0.0
    %2196 = vmatpush.msra.mxu0 0.0
    %2197 = vmatpush.msra.mxu0 0.0
    %2198 = vmatpush.msra.mxu0 0.0
    %2199 = vmatpush.msra.mxu0 0.0
    %2200 = vmatpush.msra.mxu0 0.0
    %2201 = vmatpush.msra.mxu0 0.0
    %2202 = vmatpush.msra.mxu0 0.0
    %2203 = vmatpush.msra.mxu0 0.0
    %2204 = vmatpush.msra.mxu0 0.0
    %2205 = vmatpush.msra.mxu0 0.0
    %2206 = vmatpush.msra.mxu0 0.0
    %2207 = vmatpush.msra.mxu0 0.0
    %2208 = vmatpush.msra.mxu0 %v710
    %2209 = vmatpush.msra.mxu0 %v491
    %2210 = vmatpush.msra.mxu0 %v439
    %2211 = vmatmul.f32.gmra.mxu0 %v556
    %v2212 = vpop.f32.mrf.mxu0
    %v2213 = vadd.f32 0.0, %v2212
    %2214 = vmatmul.f32.gmra.mxu0 %v559
    %v2215 = vpop.f32.mrf.mxu0
    %v2216 = vadd.f32 0.0, %v2215
    %2217 = vmatmul.f32.gmra.mxu0 %v562
    %v2218 = vpop.f32.mrf.mxu0
    %v2219 = vadd.f32 0.0, %v2218
    %2220 = vmatmul.f32.gmra.mxu0 %v565
    %v2221 = vpop.f32.mrf.mxu0
    %v2222 = vadd.f32 0.0, %v2221
    %2223 = vmatmul.f32.gmra.mxu0 %v568
    %v2224 = vpop.f32.mrf.mxu0
    %v2225 = vadd.f32 0.0, %v2224
    %2226 = vdwg.mxu0
    %2227 = vmatpush.msra.mxu0 0.0
    %2228 = vmatpush.msra.mxu0 0.0
    %2229 = vmatpush.msra.mxu0 0.0
    %2230 = vmatpush.msra.mxu0 0.0
    %2231 = vmatpush.msra.mxu0 0.0
    %2232 = vmatpush.msra.mxu0 0.0
    %2233 = vmatpush.msra.mxu0 0.0
    %2234 = vmatpush.msra.mxu0 0.0
    %2235 = vmatpush.msra.mxu0 0.0
    %2236 = vmatpush.msra.mxu0 0.0
    %2237 = vmatpush.msra.mxu0 0.0
    %2238 = vmatpush.msra.mxu0 0.0
    %2239 = vmatpush.msra.mxu0 0.0
    %2240 = vmatpush.msra.mxu0 %v713
    %2241 = vmatpush.msra.mxu0 %v492
    %2242 = vmatpush.msra.mxu0 %v440
    %2243 = vmatmul.f32.gmra.mxu0 %v556
    %v2244 = vpop.f32.mrf.mxu0
    %v2245 = vadd.f32 0.0, %v2244
    %2246 = vmatmul.f32.gmra.mxu0 %v559
    %v2247 = vpop.f32.mrf.mxu0
    %v2248 = vadd.f32 0.0, %v2247
    %2249 = vmatmul.f32.gmra.mxu0 %v562
    %v2250 = vpop.f32.mrf.mxu0
    %v2251 = vadd.f32 0.0, %v2250
    %2252 = vmatmul.f32.gmra.mxu0 %v565
    %v2253 = vpop.f32.mrf.mxu0
    %v2254 = vadd.f32 0.0, %v2253
    %2255 = vmatmul.f32.gmra.mxu0 %v568
    %v2256 = vpop.f32.mrf.mxu0
    %v2257 = vadd.f32 0.0, %v2256
    %2258 = vdwg.mxu0
    %2259 = vmatpush.msra.mxu0 0.0
    %2260 = vmatpush.msra.mxu0 0.0
    %2261 = vmatpush.msra.mxu0 0.0
    %2262 = vmatpush.msra.mxu0 0.0
    %2263 = vmatpush.msra.mxu0 0.0
    %2264 = vmatpush.msra.mxu0 0.0
    %2265 = vmatpush.msra.mxu0 0.0
    %2266 = vmatpush.msra.mxu0 0.0
    %2267 = vmatpush.msra.mxu0 0.0
    %2268 = vmatpush.msra.mxu0 0.0
    %2269 = vmatpush.msra.mxu0 0.0
    %2270 = vmatpush.msra.mxu0 0.0
    %2271 = vmatpush.msra.mxu0 0.0
    %2272 = vmatpush.msra.mxu0 %v716
    %2273 = vmatpush.msra.mxu0 %v493
    %2274 = vmatpush.msra.mxu0 %v441
    %2275 = vmatmul.f32.gmra.mxu0 %v556
    %v2276 = vpop.f32.mrf.mxu0
    %v2277 = vadd.f32 0.0, %v2276
    %2278 = vmatmul.f32.gmra.mxu0 %v559
    %v2279 = vpop.f32.mrf.mxu0
    %v2280 = vadd.f32 0.0, %v2279
    %2281 = vmatmul.f32.gmra.mxu0 %v562
    %v2282 = vpop.f32.mrf.mxu0
    %v2283 = vadd.f32 0.0, %v2282
    %2284 = vmatmul.f32.gmra.mxu0 %v565
    %v2285 = vpop.f32.mrf.mxu0
    %v2286 = vadd.f32 0.0, %v2285
    %2287 = vmatmul.f32.gmra.mxu0 %v568
    %v2288 = vpop.f32.mrf.mxu0
    %v2289 = vadd.f32 0.0, %v2288
    %2290 = vdwg.mxu0
    %2291 = vmatpush.msra.mxu0 0.0
    %2292 = vmatpush.msra.mxu0 0.0
    %2293 = vmatpush.msra.mxu0 0.0
    %2294 = vmatpush.msra.mxu0 0.0
    %2295 = vmatpush.msra.mxu0 0.0
    %2296 = vmatpush.msra.mxu0 0.0
    %2297 = vmatpush.msra.mxu0 0.0
    %2298 = vmatpush.msra.mxu0 0.0
    %2299 = vmatpush.msra.mxu0 0.0
    %2300 = vmatpush.msra.mxu0 0.0
    %2301 = vmatpush.msra.mxu0 0.0
    %2302 = vmatpush.msra.mxu0 0.0
    %2303 = vmatpush.msra.mxu0 0.0
    %2304 = vmatpush.msra.mxu0 %v719
    %2305 = vmatpush.msra.mxu0 %v494
    %2306 = vmatpush.msra.mxu0 %v442
    %2307 = vmatmul.f32.gmra.mxu0 %v556
    %v2308 = vpop.f32.mrf.mxu0
    %v2309 = vadd.f32 0.0, %v2308
    %2310 = vmatmul.f32.gmra.mxu0 %v559
    %v2311 = vpop.f32.mrf.mxu0
    %v2312 = vadd.f32 0.0, %v2311
    %2313 = vmatmul.f32.gmra.mxu0 %v562
    %v2314 = vpop.f32.mrf.mxu0
    %v2315 = vadd.f32 0.0, %v2314
    %2316 = vmatmul.f32.gmra.mxu0 %v565
    %v2317 = vpop.f32.mrf.mxu0
    %v2318 = vadd.f32 0.0, %v2317
    %2319 = vmatmul.f32.gmra.mxu0 %v568
    %v2320 = vpop.f32.mrf.mxu0
    %v2321 = vadd.f32 0.0, %v2320
    %2322 = vdwg.mxu0
    %2323 = vmatpush.msra.mxu0 0.0
    %2324 = vmatpush.msra.mxu0 0.0
    %2325 = vmatpush.msra.mxu0 0.0
    %2326 = vmatpush.msra.mxu0 0.0
    %2327 = vmatpush.msra.mxu0 0.0
    %2328 = vmatpush.msra.mxu0 0.0
    %2329 = vmatpush.msra.mxu0 0.0
    %2330 = vmatpush.msra.mxu0 0.0
    %2331 = vmatpush.msra.mxu0 0.0
    %2332 = vmatpush.msra.mxu0 0.0
    %2333 = vmatpush.msra.mxu0 0.0
    %2334 = vmatpush.msra.mxu0 0.0
    %2335 = vmatpush.msra.mxu0 0.0
    %2336 = vmatpush.msra.mxu0 %v722
    %2337 = vmatpush.msra.mxu0 %v495
    %2338 = vmatpush.msra.mxu0 %v443
    %2339 = vmatmul.f32.gmra.mxu0 %v556
    %v2340 = vpop.f32.mrf.mxu0
    %v2341 = vadd.f32 0.0, %v2340
    %2342 = vmatmul.f32.gmra.mxu0 %v559
    %v2343 = vpop.f32.mrf.mxu0
    %v2344 = vadd.f32 0.0, %v2343
    %2345 = vmatmul.f32.gmra.mxu0 %v562
    %v2346 = vpop.f32.mrf.mxu0
    %v2347 = vadd.f32 0.0, %v2346
    %2348 = vmatmul.f32.gmra.mxu0 %v565
    %v2349 = vpop.f32.mrf.mxu0
    %v2350 = vadd.f32 0.0, %v2349
    %2351 = vmatmul.f32.gmra.mxu0 %v568
    %v2352 = vpop.f32.mrf.mxu0
    %v2353 = vadd.f32 0.0, %v2352
    %2354 = vdwg.mxu0
    %2355 = vmatpush.msra.mxu0 0.0
    %2356 = vmatpush.msra.mxu0 0.0
    %2357 = vmatpush.msra.mxu0 0.0
    %2358 = vmatpush.msra.mxu0 0.0
    %2359 = vmatpush.msra.mxu0 0.0
    %2360 = vmatpush.msra.mxu0 0.0
    %2361 = vmatpush.msra.mxu0 0.0
    %2362 = vmatpush.msra.mxu0 0.0
    %2363 = vmatpush.msra.mxu0 0.0
    %2364 = vmatpush.msra.mxu0 0.0
    %2365 = vmatpush.msra.mxu0 0.0
    %2366 = vmatpush.msra.mxu0 0.0
    %2367 = vmatpush.msra.mxu0 0.0
    %2368 = vmatpush.msra.mxu0 %v725
    %2369 = vmatpush.msra.mxu0 %v496
    %2370 = vmatpush.msra.mxu0 %v444
    %2371 = vmatmul.f32.gmra.mxu0 %v556
    %v2372 = vpop.f32.mrf.mxu0
    %v2373 = vadd.f32 0.0, %v2372
    %2374 = vmatmul.f32.gmra.mxu0 %v559
    %v2375 = vpop.f32.mrf.mxu0
    %v2376 = vadd.f32 0.0, %v2375
    %2377 = vmatmul.f32.gmra.mxu0 %v562
    %v2378 = vpop.f32.mrf.mxu0
    %v2379 = vadd.f32 0.0, %v2378
    %2380 = vmatmul.f32.gmra.mxu0 %v565
    %v2381 = vpop.f32.mrf.mxu0
    %v2382 = vadd.f32 0.0, %v2381
    %2383 = vmatmul.f32.gmra.mxu0 %v568
    %v2384 = vpop.f32.mrf.mxu0
    %v2385 = vadd.f32 0.0, %v2384
    %2386 = vdwg.mxu0
    %v2387 = vld [vmem:[%s3] sm:$0xff]
    %v2388 = vld [vmem:[%s3 + $0x8] sm:$0xf]
    %v2389 = vperm.slane %v2387, 0
    %v2390 = vperm.slane %v2387, 1
    %v2391 = vperm.slane %v2387, 2
    %v2392 = vperm.slane %v2387, 3
    %v2393 = vperm.slane %v2387, 4
    %v2394 = vperm.slane %v2387, 5
    %v2395 = vperm.slane %v2387, 6
    %v2396 = vperm.slane %v2387, 7
    %v2397 = vperm.slane %v2388, 0
    %v2398 = vperm.slane %v2388, 1
    %v2399 = vperm.slane %v2388, 2
    %v2400 = vperm.slane %v2388, 3
    %vm2401 = vcmp.eq.s32.totalorder %v26, %v2389
    %vm2402 = vcmp.eq.s32.totalorder %v26, %v2390
    %vm2403 = vcmp.eq.s32.totalorder %v26, %v2391
    %vm2404 = vcmp.eq.s32.totalorder %v26, %v2392
    %vm2405 = vcmp.eq.s32.totalorder %v26, %v2393
    %vm2406 = vcmp.eq.s32.totalorder %v26, %v2394
    %vm2407 = vcmp.eq.s32.totalorder %v26, %v2395
    %vm2408 = vcmp.eq.s32.totalorder %v26, %v2396
    %vm2409 = vcmp.eq.s32.totalorder %v26, %v2397
    %vm2410 = vcmp.eq.s32.totalorder %v26, %v2398
    %vm2411 = vcmp.eq.s32.totalorder %v26, %v2399
    %vm2412 = vcmp.eq.s32.totalorder %v26, %v2400
    %v2413 = vsel %vm2401, 1, 0
    %v2414 = vsel %vm2402, 1, 0
    %v2415 = vsel %vm2403, 1, 0
    %v2416 = vsel %vm2404, 1, 0
    %v2417 = vsel %vm2405, 1, 0
    %v2418 = vsel %vm2406, 1, 0
    %v2419 = vsel %vm2407, 1, 0
    %v2420 = vsel %vm2408, 1, 0
    %v2421 = vsel %vm2409, 1, 0
    %v2422 = vsel %vm2410, 1, 0
    %v2423 = vsel %vm2411, 1, 0
    %v2424 = vsel %vm2412, 1, 0
    %v2425 = vcvt.s32.f32 %v2413
    %v2426 = vcvt.s32.f32 %v2414
    %v2427 = vcvt.s32.f32 %v2415
    %v2428 = vcvt.s32.f32 %v2416
    %v2429 = vcvt.s32.f32 %v2417
    %v2430 = vcvt.s32.f32 %v2418
    %v2431 = vcvt.s32.f32 %v2419
    %v2432 = vcvt.s32.f32 %v2420
    %v2433 = vcvt.s32.f32 %v2421
    %v2434 = vcvt.s32.f32 %v2422
    %v2435 = vcvt.s32.f32 %v2423
    %v2436 = vcvt.s32.f32 %v2424
    %v2437 = vld [vmem:[%s1] sm:$0xff]
    %v2438 = vld [vmem:[%s1 + $0x8] sm:$0xff]
    %v2439 = vld [vmem:[%s1 + $0x10] sm:$0xff]
    %v2440 = vld [vmem:[%s1 + $0x18] sm:$0xff]
    %vm2441 = vcmask 39936
    %v2443 = vsel %vm2441, %v2437, 0
    %v2446 = vsel %vm2441, %v2438, 0
    %v2449 = vsel %vm2441, %v2439, 0
    %v2452 = vsel %vm2441, %v2440, 0
    %vm2454 = vcmask 1044480
    %v2456 = vsel %vm2454, %v2425, 0
    %v2459 = vsel %vm2454, %v2426, 0
    %v2462 = vsel %vm2454, %v2427, 0
    %v2465 = vsel %vm2454, %v2428, 0
    %v2468 = vsel %vm2454, %v2429, 0
    %v2471 = vsel %vm2454, %v2430, 0
    %v2474 = vsel %vm2454, %v2431, 0
    %v2477 = vsel %vm2454, %v2432, 0
    %v2480 = vsel %vm2454, %v2433, 0
    %v2483 = vsel %vm2454, %v2434, 0
    %v2486 = vsel %vm2454, %v2435, 0
    %v2489 = vsel %vm2454, %v2436, 0
    %2491 = vmatpush.msra.mxu0 0.0
    %2492 = vmatpush.msra.mxu0 0.0
    %2493 = vmatpush.msra.mxu0 0.0
    %2494 = vmatpush.msra.mxu0 0.0
    %2495 = vmatpush.msra.mxu0 0.0
    %2496 = vmatpush.msra.mxu0 0.0
    %2497 = vmatpush.msra.mxu0 0.0
    %2498 = vmatpush.msra.mxu0 0.0
    %2499 = vmatpush.msra.mxu0 0.0
    %2500 = vmatpush.msra.mxu0 0.0
    %2501 = vmatpush.msra.mxu0 0.0
    %2502 = vmatpush.msra.mxu0 0.0
    %2503 = vmatpush.msra.mxu0 0.0
    %2504 = vmatpush.msra.mxu0 0.0
    %2505 = vmatpush.msra.mxu0 0.0
    %2506 = vmatpush.msra.mxu0 %v2456
    %2507 = vmatmul.f32.gmra.mxu0 %v2443
    %v2508 = vpop.f32.mrf.mxu0
    %v2509 = vadd.f32 0.0, %v2508
    %2510 = vmatmul.f32.gmra.mxu0 %v2446
    %v2511 = vpop.f32.mrf.mxu0
    %v2512 = vadd.f32 0.0, %v2511
    %2513 = vmatmul.f32.gmra.mxu0 %v2449
    %v2514 = vpop.f32.mrf.mxu0
    %v2515 = vadd.f32 0.0, %v2514
    %2516 = vmatmul.f32.gmra.mxu0 %v2452
    %v2517 = vpop.f32.mrf.mxu0
    %v2518 = vadd.f32 0.0, %v2517
    %2519 = vdwg.mxu0
    %2520 = vmatpush.msra.mxu0 0.0
    %2521 = vmatpush.msra.mxu0 0.0
    %2522 = vmatpush.msra.mxu0 0.0
    %2523 = vmatpush.msra.mxu0 0.0
    %2524 = vmatpush.msra.mxu0 0.0
    %2525 = vmatpush.msra.mxu0 0.0
    %2526 = vmatpush.msra.mxu0 0.0
    %2527 = vmatpush.msra.mxu0 0.0
    %2528 = vmatpush.msra.mxu0 0.0
    %2529 = vmatpush.msra.mxu0 0.0
    %2530 = vmatpush.msra.mxu0 0.0
    %2531 = vmatpush.msra.mxu0 0.0
    %2532 = vmatpush.msra.mxu0 0.0
    %2533 = vmatpush.msra.mxu0 0.0
    %2534 = vmatpush.msra.mxu0 0.0
    %2535 = vmatpush.msra.mxu0 %v2459
    %2536 = vmatmul.f32.gmra.mxu0 %v2443
    %v2537 = vpop.f32.mrf.mxu0
    %v2538 = vadd.f32 0.0, %v2537
    %2539 = vmatmul.f32.gmra.mxu0 %v2446
    %v2540 = vpop.f32.mrf.mxu0
    %v2541 = vadd.f32 0.0, %v2540
    %2542 = vmatmul.f32.gmra.mxu0 %v2449
    %v2543 = vpop.f32.mrf.mxu0
    %v2544 = vadd.f32 0.0, %v2543
    %2545 = vmatmul.f32.gmra.mxu0 %v2452
    %v2546 = vpop.f32.mrf.mxu0
    %v2547 = vadd.f32 0.0, %v2546
    %2548 = vdwg.mxu0
    %2549 = vmatpush.msra.mxu0 0.0
    %2550 = vmatpush.msra.mxu0 0.0
    %2551 = vmatpush.msra.mxu0 0.0
    %2552 = vmatpush.msra.mxu0 0.0
    %2553 = vmatpush.msra.mxu0 0.0
    %2554 = vmatpush.msra.mxu0 0.0
    %2555 = vmatpush.msra.mxu0 0.0
    %2556 = vmatpush.msra.mxu0 0.0
    %2557 = vmatpush.msra.mxu0 0.0
    %2558 = vmatpush.msra.mxu0 0.0
    %2559 = vmatpush.msra.mxu0 0.0
    %2560 = vmatpush.msra.mxu0 0.0
    %2561 = vmatpush.msra.mxu0 0.0
    %2562 = vmatpush.msra.mxu0 0.0
    %2563 = vmatpush.msra.mxu0 0.0
    %2564 = vmatpush.msra.mxu0 %v2462
    %2565 = vmatmul.f32.gmra.mxu0 %v2443
    %v2566 = vpop.f32.mrf.mxu0
    %v2567 = vadd.f32 0.0, %v2566
    %2568 = vmatmul.f32.gmra.mxu0 %v2446
    %v2569 = vpop.f32.mrf.mxu0
    %v2570 = vadd.f32 0.0, %v2569
    %2571 = vmatmul.f32.gmra.mxu0 %v2449
    %v2572 = vpop.f32.mrf.mxu0
    %v2573 = vadd.f32 0.0, %v2572
    %2574 = vmatmul.f32.gmra.mxu0 %v2452
    %v2575 = vpop.f32.mrf.mxu0
    %v2576 = vadd.f32 0.0, %v2575
    %2577 = vdwg.mxu0
    %2578 = vmatpush.msra.mxu0 0.0
    %2579 = vmatpush.msra.mxu0 0.0
    %2580 = vmatpush.msra.mxu0 0.0
    %2581 = vmatpush.msra.mxu0 0.0
    %2582 = vmatpush.msra.mxu0 0.0
    %2583 = vmatpush.msra.mxu0 0.0
    %2584 = vmatpush.msra.mxu0 0.0
    %2585 = vmatpush.msra.mxu0 0.0
    %2586 = vmatpush.msra.mxu0 0.0
    %2587 = vmatpush.msra.mxu0 0.0
    %2588 = vmatpush.msra.mxu0 0.0
    %2589 = vmatpush.msra.mxu0 0.0
    %2590 = vmatpush.msra.mxu0 0.0
    %2591 = vmatpush.msra.mxu0 0.0
    %2592 = vmatpush.msra.mxu0 0.0
    %2593 = vmatpush.msra.mxu0 %v2465
    %2594 = vmatmul.f32.gmra.mxu0 %v2443
    %v2595 = vpop.f32.mrf.mxu0
    %v2596 = vadd.f32 0.0, %v2595
    %2597 = vmatmul.f32.gmra.mxu0 %v2446
    %v2598 = vpop.f32.mrf.mxu0
    %v2599 = vadd.f32 0.0, %v2598
    %2600 = vmatmul.f32.gmra.mxu0 %v2449
    %v2601 = vpop.f32.mrf.mxu0
    %v2602 = vadd.f32 0.0, %v2601
    %2603 = vmatmul.f32.gmra.mxu0 %v2452
    %v2604 = vpop.f32.mrf.mxu0
    %v2605 = vadd.f32 0.0, %v2604
    %2606 = vdwg.mxu0
    %2607 = vmatpush.msra.mxu0 0.0
    %2608 = vmatpush.msra.mxu0 0.0
    %2609 = vmatpush.msra.mxu0 0.0
    %2610 = vmatpush.msra.mxu0 0.0
    %2611 = vmatpush.msra.mxu0 0.0
    %2612 = vmatpush.msra.mxu0 0.0
    %2613 = vmatpush.msra.mxu0 0.0
    %2614 = vmatpush.msra.mxu0 0.0
    %2615 = vmatpush.msra.mxu0 0.0
    %2616 = vmatpush.msra.mxu0 0.0
    %2617 = vmatpush.msra.mxu0 0.0
    %2618 = vmatpush.msra.mxu0 0.0
    %2619 = vmatpush.msra.mxu0 0.0
    %2620 = vmatpush.msra.mxu0 0.0
    %2621 = vmatpush.msra.mxu0 0.0
    %2622 = vmatpush.msra.mxu0 %v2468
    %2623 = vmatmul.f32.gmra.mxu0 %v2443
    %v2624 = vpop.f32.mrf.mxu0
    %v2625 = vadd.f32 0.0, %v2624
    %2626 = vmatmul.f32.gmra.mxu0 %v2446
    %v2627 = vpop.f32.mrf.mxu0
    %v2628 = vadd.f32 0.0, %v2627
    %2629 = vmatmul.f32.gmra.mxu0 %v2449
    %v2630 = vpop.f32.mrf.mxu0
    %v2631 = vadd.f32 0.0, %v2630
    %2632 = vmatmul.f32.gmra.mxu0 %v2452
    %v2633 = vpop.f32.mrf.mxu0
    %v2634 = vadd.f32 0.0, %v2633
    %2635 = vdwg.mxu0
    %2636 = vmatpush.msra.mxu0 0.0
    %2637 = vmatpush.msra.mxu0 0.0
    %2638 = vmatpush.msra.mxu0 0.0
    %2639 = vmatpush.msra.mxu0 0.0
    %2640 = vmatpush.msra.mxu0 0.0
    %2641 = vmatpush.msra.mxu0 0.0
    %2642 = vmatpush.msra.mxu0 0.0
    %2643 = vmatpush.msra.mxu0 0.0
    %2644 = vmatpush.msra.mxu0 0.0
    %2645 = vmatpush.msra.mxu0 0.0
    %2646 = vmatpush.msra.mxu0 0.0
    %2647 = vmatpush.msra.mxu0 0.0
    %2648 = vmatpush.msra.mxu0 0.0
    %2649 = vmatpush.msra.mxu0 0.0
    %2650 = vmatpush.msra.mxu0 0.0
    %2651 = vmatpush.msra.mxu0 %v2471
    %2652 = vmatmul.f32.gmra.mxu0 %v2443
    %v2653 = vpop.f32.mrf.mxu0
    %v2654 = vadd.f32 0.0, %v2653
    %2655 = vmatmul.f32.gmra.mxu0 %v2446
    %v2656 = vpop.f32.mrf.mxu0
    %v2657 = vadd.f32 0.0, %v2656
    %2658 = vmatmul.f32.gmra.mxu0 %v2449
    %v2659 = vpop.f32.mrf.mxu0
    %v2660 = vadd.f32 0.0, %v2659
    %2661 = vmatmul.f32.gmra.mxu0 %v2452
    %v2662 = vpop.f32.mrf.mxu0
    %v2663 = vadd.f32 0.0, %v2662
    %2664 = vdwg.mxu0
    %2665 = vmatpush.msra.mxu0 0.0
    %2666 = vmatpush.msra.mxu0 0.0
    %2667 = vmatpush.msra.mxu0 0.0
    %2668 = vmatpush.msra.mxu0 0.0
    %2669 = vmatpush.msra.mxu0 0.0
    %2670 = vmatpush.msra.mxu0 0.0
    %2671 = vmatpush.msra.mxu0 0.0
    %2672 = vmatpush.msra.mxu0 0.0
    %2673 = vmatpush.msra.mxu0 0.0
    %2674 = vmatpush.msra.mxu0 0.0
    %2675 = vmatpush.msra.mxu0 0.0
    %2676 = vmatpush.msra.mxu0 0.0
    %2677 = vmatpush.msra.mxu0 0.0
    %2678 = vmatpush.msra.mxu0 0.0
    %2679 = vmatpush.msra.mxu0 0.0
    %2680 = vmatpush.msra.mxu0 %v2474
    %2681 = vmatmul.f32.gmra.mxu0 %v2443
    %v2682 = vpop.f32.mrf.mxu0
    %v2683 = vadd.f32 0.0, %v2682
    %2684 = vmatmul.f32.gmra.mxu0 %v2446
    %v2685 = vpop.f32.mrf.mxu0
    %v2686 = vadd.f32 0.0, %v2685
    %2687 = vmatmul.f32.gmra.mxu0 %v2449
    %v2688 = vpop.f32.mrf.mxu0
    %v2689 = vadd.f32 0.0, %v2688
    %2690 = vmatmul.f32.gmra.mxu0 %v2452
    %v2691 = vpop.f32.mrf.mxu0
    %v2692 = vadd.f32 0.0, %v2691
    %2693 = vdwg.mxu0
    %2694 = vmatpush.msra.mxu0 0.0
    %2695 = vmatpush.msra.mxu0 0.0
    %2696 = vmatpush.msra.mxu0 0.0
    %2697 = vmatpush.msra.mxu0 0.0
    %2698 = vmatpush.msra.mxu0 0.0
    %2699 = vmatpush.msra.mxu0 0.0
    %2700 = vmatpush.msra.mxu0 0.0
    %2701 = vmatpush.msra.mxu0 0.0
    %2702 = vmatpush.msra.mxu0 0.0
    %2703 = vmatpush.msra.mxu0 0.0
    %2704 = vmatpush.msra.mxu0 0.0
    %2705 = vmatpush.msra.mxu0 0.0
    %2706 = vmatpush.msra.mxu0 0.0
    %2707 = vmatpush.msra.mxu0 0.0
    %2708 = vmatpush.msra.mxu0 0.0
    %2709 = vmatpush.msra.mxu0 %v2477
    %2710 = vmatmul.f32.gmra.mxu0 %v2443
    %v2711 = vpop.f32.mrf.mxu0
    %v2712 = vadd.f32 0.0, %v2711
    %2713 = vmatmul.f32.gmra.mxu0 %v2446
    %v2714 = vpop.f32.mrf.mxu0
    %v2715 = vadd.f32 0.0, %v2714
    %2716 = vmatmul.f32.gmra.mxu0 %v2449
    %v2717 = vpop.f32.mrf.mxu0
    %v2718 = vadd.f32 0.0, %v2717
    %2719 = vmatmul.f32.gmra.mxu0 %v2452
    %v2720 = vpop.f32.mrf.mxu0
    %v2721 = vadd.f32 0.0, %v2720
    %2722 = vdwg.mxu0
    %2723 = vmatpush.msra.mxu0 0.0
    %2724 = vmatpush.msra.mxu0 0.0
    %2725 = vmatpush.msra.mxu0 0.0
    %2726 = vmatpush.msra.mxu0 0.0
    %2727 = vmatpush.msra.mxu0 0.0
    %2728 = vmatpush.msra.mxu0 0.0
    %2729 = vmatpush.msra.mxu0 0.0
    %2730 = vmatpush.msra.mxu0 0.0
    %2731 = vmatpush.msra.mxu0 0.0
    %2732 = vmatpush.msra.mxu0 0.0
    %2733 = vmatpush.msra.mxu0 0.0
    %2734 = vmatpush.msra.mxu0 0.0
    %2735 = vmatpush.msra.mxu0 0.0
    %2736 = vmatpush.msra.mxu0 0.0
    %2737 = vmatpush.msra.mxu0 0.0
    %2738 = vmatpush.msra.mxu0 %v2480
    %2739 = vmatmul.f32.gmra.mxu0 %v2443
    %v2740 = vpop.f32.mrf.mxu0
    %v2741 = vadd.f32 0.0, %v2740
    %2742 = vmatmul.f32.gmra.mxu0 %v2446
    %v2743 = vpop.f32.mrf.mxu0
    %v2744 = vadd.f32 0.0, %v2743
    %2745 = vmatmul.f32.gmra.mxu0 %v2449
    %v2746 = vpop.f32.mrf.mxu0
    %v2747 = vadd.f32 0.0, %v2746
    %2748 = vmatmul.f32.gmra.mxu0 %v2452
    %v2749 = vpop.f32.mrf.mxu0
    %v2750 = vadd.f32 0.0, %v2749
    %2751 = vdwg.mxu0
    %2752 = vmatpush.msra.mxu0 0.0
    %2753 = vmatpush.msra.mxu0 0.0
    %2754 = vmatpush.msra.mxu0 0.0
    %2755 = vmatpush.msra.mxu0 0.0
    %2756 = vmatpush.msra.mxu0 0.0
    %2757 = vmatpush.msra.mxu0 0.0
    %2758 = vmatpush.msra.mxu0 0.0
    %2759 = vmatpush.msra.mxu0 0.0
    %2760 = vmatpush.msra.mxu0 0.0
    %2761 = vmatpush.msra.mxu0 0.0
    %2762 = vmatpush.msra.mxu0 0.0
    %2763 = vmatpush.msra.mxu0 0.0
    %2764 = vmatpush.msra.mxu0 0.0
    %2765 = vmatpush.msra.mxu0 0.0
    %2766 = vmatpush.msra.mxu0 0.0
    %2767 = vmatpush.msra.mxu0 %v2483
    %2768 = vmatmul.f32.gmra.mxu0 %v2443
    %v2769 = vpop.f32.mrf.mxu0
    %v2770 = vadd.f32 0.0, %v2769
    %2771 = vmatmul.f32.gmra.mxu0 %v2446
    %v2772 = vpop.f32.mrf.mxu0
    %v2773 = vadd.f32 0.0, %v2772
    %2774 = vmatmul.f32.gmra.mxu0 %v2449
    %v2775 = vpop.f32.mrf.mxu0
    %v2776 = vadd.f32 0.0, %v2775
    %2777 = vmatmul.f32.gmra.mxu0 %v2452
    %v2778 = vpop.f32.mrf.mxu0
    %v2779 = vadd.f32 0.0, %v2778
    %2780 = vdwg.mxu0
    %2781 = vmatpush.msra.mxu0 0.0
    %2782 = vmatpush.msra.mxu0 0.0
    %2783 = vmatpush.msra.mxu0 0.0
    %2784 = vmatpush.msra.mxu0 0.0
    %2785 = vmatpush.msra.mxu0 0.0
    %2786 = vmatpush.msra.mxu0 0.0
    %2787 = vmatpush.msra.mxu0 0.0
    %2788 = vmatpush.msra.mxu0 0.0
    %2789 = vmatpush.msra.mxu0 0.0
    %2790 = vmatpush.msra.mxu0 0.0
    %2791 = vmatpush.msra.mxu0 0.0
    %2792 = vmatpush.msra.mxu0 0.0
    %2793 = vmatpush.msra.mxu0 0.0
    %2794 = vmatpush.msra.mxu0 0.0
    %2795 = vmatpush.msra.mxu0 0.0
    %2796 = vmatpush.msra.mxu0 %v2486
    %2797 = vmatmul.f32.gmra.mxu0 %v2443
    %v2798 = vpop.f32.mrf.mxu0
    %v2799 = vadd.f32 0.0, %v2798
    %2800 = vmatmul.f32.gmra.mxu0 %v2446
    %v2801 = vpop.f32.mrf.mxu0
    %v2802 = vadd.f32 0.0, %v2801
    %2803 = vmatmul.f32.gmra.mxu0 %v2449
    %v2804 = vpop.f32.mrf.mxu0
    %v2805 = vadd.f32 0.0, %v2804
    %2806 = vmatmul.f32.gmra.mxu0 %v2452
    %v2807 = vpop.f32.mrf.mxu0
    %v2808 = vadd.f32 0.0, %v2807
    %2809 = vdwg.mxu0
    %2810 = vmatpush.msra.mxu0 0.0
    %2811 = vmatpush.msra.mxu0 0.0
    %2812 = vmatpush.msra.mxu0 0.0
    %2813 = vmatpush.msra.mxu0 0.0
    %2814 = vmatpush.msra.mxu0 0.0
    %2815 = vmatpush.msra.mxu0 0.0
    %2816 = vmatpush.msra.mxu0 0.0
    %2817 = vmatpush.msra.mxu0 0.0
    %2818 = vmatpush.msra.mxu0 0.0
    %2819 = vmatpush.msra.mxu0 0.0
    %2820 = vmatpush.msra.mxu0 0.0
    %2821 = vmatpush.msra.mxu0 0.0
    %2822 = vmatpush.msra.mxu0 0.0
    %2823 = vmatpush.msra.mxu0 0.0
    %2824 = vmatpush.msra.mxu0 0.0
    %2825 = vmatpush.msra.mxu0 %v2489
    %2826 = vmatmul.f32.gmra.mxu0 %v2443
    %v2827 = vpop.f32.mrf.mxu0
    %v2828 = vadd.f32 0.0, %v2827
    %2829 = vmatmul.f32.gmra.mxu0 %v2446
    %v2830 = vpop.f32.mrf.mxu0
    %v2831 = vadd.f32 0.0, %v2830
    %2832 = vmatmul.f32.gmra.mxu0 %v2449
    %v2833 = vpop.f32.mrf.mxu0
    %v2834 = vadd.f32 0.0, %v2833
    %2835 = vmatmul.f32.gmra.mxu0 %v2452
    %v2836 = vpop.f32.mrf.mxu0
    %v2837 = vadd.f32 0.0, %v2836
    %2838 = vdwg.mxu0
    %v2839 = vand.u32 2147483647, %v757
    %v2840 = vand.u32 2147483647, %v789
    %v2841 = vand.u32 2147483647, %v821
    %v2842 = vand.u32 2147483647, %v853
    %v2843 = vand.u32 2147483647, %v885
    %v2844 = vand.u32 2147483647, %v917
    %v2845 = vand.u32 2147483647, %v949
    %v2846 = vand.u32 2147483647, %v981
    %v2847 = vsub.f32 %v745, %v873
    %v2848 = vsub.f32 %v777, %v905
    %v2849 = vsub.f32 %v809, %v937
    %v2850 = vsub.f32 %v841, %v969
    %v2851 = vsub.f32 %v748, %v876
    %v2852 = vsub.f32 %v780, %v908
    %v2853 = vsub.f32 %v812, %v940
    %v2854 = vsub.f32 %v844, %v972
    %v2855 = vsub.f32 %v751, %v879
    %v2856 = vsub.f32 %v783, %v911
    %v2857 = vsub.f32 %v815, %v943
    %v2858 = vsub.f32 %v847, %v975
    %v2859 = vsub.f32 %v754, %v882
    %v2860 = vsub.f32 %v786, %v914
    %v2861 = vsub.f32 %v818, %v946
    %v2862 = vsub.f32 %v850, %v978
    %v2863 = vmul.f32 %v2847, %v2847
    %v2864 = vmul.f32 %v2848, %v2848
    %v2865 = vmul.f32 %v2849, %v2849
    %v2866 = vmul.f32 %v2850, %v2850
    %v2867 = vmul.f32 %v2851, %v2851
    %v2868 = vmul.f32 %v2852, %v2852
    %v2869 = vmul.f32 %v2853, %v2853
    %v2870 = vmul.f32 %v2854, %v2854
    %v2871 = vmul.f32 %v2855, %v2855
    %v2872 = vmul.f32 %v2856, %v2856
    %v2873 = vmul.f32 %v2857, %v2857
    %v2874 = vmul.f32 %v2858, %v2858
    %v2875 = vmul.f32 %v2859, %v2859
    %v2876 = vmul.f32 %v2860, %v2860
    %v2877 = vmul.f32 %v2861, %v2861
    %v2878 = vmul.f32 %v2862, %v2862
    %v2879 = vadd.f32 %v2863, %v2867
    %v2880 = vadd.f32 %v2879, %v2871
    %v2881 = vadd.f32 %v2880, %v2875
    %v2882 = vrot.slane %v2881, 4
    %v2883 = vadd.f32 %v2881, %v2882
    %v2884 = vrot.slane %v2883, 2
    %v2885 = vadd.f32 %v2883, %v2884
    %v2886 = vrot.slane %v2885, 1
    %v2887 = vadd.f32 %v2885, %v2886
    %v2888 = vadd.f32 %v2864, %v2868
    %v2889 = vadd.f32 %v2888, %v2872
    %v2890 = vadd.f32 %v2889, %v2876
    %v2891 = vrot.slane %v2890, 4
    %v2892 = vadd.f32 %v2890, %v2891
    %v2893 = vrot.slane %v2892, 2
    %v2894 = vadd.f32 %v2892, %v2893
    %v2895 = vrot.slane %v2894, 1
    %v2896 = vadd.f32 %v2894, %v2895
    %v2897 = vadd.f32 %v2865, %v2869
    %v2898 = vadd.f32 %v2897, %v2873
    %v2899 = vadd.f32 %v2898, %v2877
    %v2900 = vrot.slane %v2899, 4
    %v2901 = vadd.f32 %v2899, %v2900
    %v2902 = vrot.slane %v2901, 2
    %v2903 = vadd.f32 %v2901, %v2902
    %v2904 = vrot.slane %v2903, 1
    %v2905 = vadd.f32 %v2903, %v2904
    %v2906 = vadd.f32 %v2866, %v2870
    %v2907 = vadd.f32 %v2906, %v2874
    %v2908 = vadd.f32 %v2907, %v2878
    %v2909 = vrot.slane %v2908, 4
    %v2910 = vadd.f32 %v2908, %v2909
    %v2911 = vrot.slane %v2910, 2
    %v2912 = vadd.f32 %v2910, %v2911
    %v2913 = vrot.slane %v2912, 1
    %v2914 = vadd.f32 %v2912, %v2913
    %v2915 = vrsqrt.pop %v2887
    %v2916 = vmul.f32 %v2915, %v2887
    %v2917 = vmul.f32 %v2916, %v2915
    %v2918 = vmul.f32 0.5, %v2917
    %v2919 = vsub.f32 1.5, %v2918
    %v2920 = vmul.f32 %v2915, %v2919
    %v2921 = vmul.f32 %v2887, %v2920
    %vm2922 = vcmp.eq.f32.partialorder %v2887, inf
    %v2923 = vsel %vm2922, %v2887, %v2921
    %vm2924 = vcmp.eq.f32.partialorder %v2887, 0.0
    %v2925 = vand.u32 %v2887, 2147483648
    %v2926 = vsel %vm2924, %v2925, %v2923
    %v2927 = vrsqrt.pop %v2896
    %v2928 = vmul.f32 %v2927, %v2896
    %v2929 = vmul.f32 %v2928, %v2927
    %v2930 = vmul.f32 0.5, %v2929
    %v2931 = vsub.f32 1.5, %v2930
    %v2932 = vmul.f32 %v2927, %v2931
    %v2933 = vmul.f32 %v2896, %v2932
    %vm2934 = vcmp.eq.f32.partialorder %v2896, inf
    %v2935 = vsel %vm2934, %v2896, %v2933
    %vm2936 = vcmp.eq.f32.partialorder %v2896, 0.0
    %v2937 = vand.u32 %v2896, 2147483648
    %v2938 = vsel %vm2936, %v2937, %v2935
    %v2939 = vrsqrt.pop %v2905
    %v2940 = vmul.f32 %v2939, %v2905
    %v2941 = vmul.f32 %v2940, %v2939
    %v2942 = vmul.f32 0.5, %v2941
    %v2943 = vsub.f32 1.5, %v2942
    %v2944 = vmul.f32 %v2939, %v2943
    %v2945 = vmul.f32 %v2905, %v2944
    %vm2946 = vcmp.eq.f32.partialorder %v2905, inf
    %v2947 = vsel %vm2946, %v2905, %v2945
    %vm2948 = vcmp.eq.f32.partialorder %v2905, 0.0
    %v2949 = vand.u32 %v2905, 2147483648
    %v2950 = vsel %vm2948, %v2949, %v2947
    %v2951 = vrsqrt.pop %v2914
    %v2952 = vmul.f32 %v2951, %v2914
    %v2953 = vmul.f32 %v2952, %v2951
    %v2954 = vmul.f32 0.5, %v2953
    %v2955 = vsub.f32 1.5, %v2954
    %v2956 = vmul.f32 %v2951, %v2955
    %v2957 = vmul.f32 %v2914, %v2956
    %vm2958 = vcmp.eq.f32.partialorder %v2914, inf
    %v2959 = vsel %vm2958, %v2914, %v2957
    %vm2960 = vcmp.eq.f32.partialorder %v2914, 0.0
    %v2961 = vand.u32 %v2914, 2147483648
    %v2962 = vsel %vm2960, %v2961, %v2959
    %v2963 = vadd.f32 %v2926, %v2839
    %v2964 = vadd.f32 %v2938, %v2840
    %v2965 = vadd.f32 %v2950, %v2841
    %v2966 = vadd.f32 %v2962, %v2842
    %v2967 = vsub.f32 %v2963, %v2843
    %v2968 = vsub.f32 %v2964, %v2844
    %v2969 = vsub.f32 %v2965, %v2845
    %v2970 = vsub.f32 %v2966, %v2846
    %v2971 = vmax.f32 %v2967, 0.0
    %v2972 = vmax.f32 %v2968, 0.0
    %v2973 = vmax.f32 %v2969, 0.0
    %v2974 = vmax.f32 %v2970, 0.0
    %v2975 = vmul.f32 %v745, %v745
    %v2976 = vmul.f32 %v777, %v777
    %v2977 = vmul.f32 %v809, %v809
    %v2978 = vmul.f32 %v841, %v841
    %v2979 = vmul.f32 %v748, %v748
    %v2980 = vmul.f32 %v780, %v780
    %v2981 = vmul.f32 %v812, %v812
    %v2982 = vmul.f32 %v844, %v844
    %v2983 = vmul.f32 %v751, %v751
    %v2984 = vmul.f32 %v783, %v783
    %v2985 = vmul.f32 %v815, %v815
    %v2986 = vmul.f32 %v847, %v847
    %v2987 = vmul.f32 %v754, %v754
    %v2988 = vmul.f32 %v786, %v786
    %v2989 = vmul.f32 %v818, %v818
    %v2990 = vmul.f32 %v850, %v850
    %v2991 = vadd.f32 %v2975, %v2979
    %v2992 = vadd.f32 %v2991, %v2983
    %v2993 = vadd.f32 %v2992, %v2987
    %v2994 = vrot.slane %v2993, 4
    %v2995 = vadd.f32 %v2993, %v2994
    %v2996 = vrot.slane %v2995, 2
    %v2997 = vadd.f32 %v2995, %v2996
    %v2998 = vrot.slane %v2997, 1
    %v2999 = vadd.f32 %v2997, %v2998
    %v3000 = vadd.f32 %v2976, %v2980
    %v3001 = vadd.f32 %v3000, %v2984
    %v3002 = vadd.f32 %v3001, %v2988
    %v3003 = vrot.slane %v3002, 4
    %v3004 = vadd.f32 %v3002, %v3003
    %v3005 = vrot.slane %v3004, 2
    %v3006 = vadd.f32 %v3004, %v3005
    %v3007 = vrot.slane %v3006, 1
    %v3008 = vadd.f32 %v3006, %v3007
    %v3009 = vadd.f32 %v2977, %v2981
    %v3010 = vadd.f32 %v3009, %v2985
    %v3011 = vadd.f32 %v3010, %v2989
    %v3012 = vrot.slane %v3011, 4
    %v3013 = vadd.f32 %v3011, %v3012
    %v3014 = vrot.slane %v3013, 2
    %v3015 = vadd.f32 %v3013, %v3014
    %v3016 = vrot.slane %v3015, 1
    %v3017 = vadd.f32 %v3015, %v3016
    %v3018 = vadd.f32 %v2978, %v2982
    %v3019 = vadd.f32 %v3018, %v2986
    %v3020 = vadd.f32 %v3019, %v2990
    %v3021 = vrot.slane %v3020, 4
    %v3022 = vadd.f32 %v3020, %v3021
    %v3023 = vrot.slane %v3022, 2
    %v3024 = vadd.f32 %v3022, %v3023
    %v3025 = vrot.slane %v3024, 1
    %v3026 = vadd.f32 %v3024, %v3025
    %v3027 = vrsqrt.pop %v2999
    %v3028 = vmul.f32 %v3027, %v2999
    %v3029 = vmul.f32 %v3028, %v3027
    %v3030 = vmul.f32 0.5, %v3029
    %v3031 = vsub.f32 1.5, %v3030
    %v3032 = vmul.f32 %v3027, %v3031
    %v3033 = vmul.f32 %v2999, %v3032
    %vm3034 = vcmp.eq.f32.partialorder %v2999, inf
    %v3035 = vsel %vm3034, %v2999, %v3033
    %vm3036 = vcmp.eq.f32.partialorder %v2999, 0.0
    %v3037 = vand.u32 %v2999, 2147483648
    %v3038 = vsel %vm3036, %v3037, %v3035
    %v3039 = vrsqrt.pop %v3008
    %v3040 = vmul.f32 %v3039, %v3008
    %v3041 = vmul.f32 %v3040, %v3039
    %v3042 = vmul.f32 0.5, %v3041
    %v3043 = vsub.f32 1.5, %v3042
    %v3044 = vmul.f32 %v3039, %v3043
    %v3045 = vmul.f32 %v3008, %v3044
    %vm3046 = vcmp.eq.f32.partialorder %v3008, inf
    %v3047 = vsel %vm3046, %v3008, %v3045
    %vm3048 = vcmp.eq.f32.partialorder %v3008, 0.0
    %v3049 = vand.u32 %v3008, 2147483648
    %v3050 = vsel %vm3048, %v3049, %v3047
    %v3051 = vrsqrt.pop %v3017
    %v3052 = vmul.f32 %v3051, %v3017
    %v3053 = vmul.f32 %v3052, %v3051
    %v3054 = vmul.f32 0.5, %v3053
    %v3055 = vsub.f32 1.5, %v3054
    %v3056 = vmul.f32 %v3051, %v3055
    %v3057 = vmul.f32 %v3017, %v3056
    %vm3058 = vcmp.eq.f32.partialorder %v3017, inf
    %v3059 = vsel %vm3058, %v3017, %v3057
    %vm3060 = vcmp.eq.f32.partialorder %v3017, 0.0
    %v3061 = vand.u32 %v3017, 2147483648
    %v3062 = vsel %vm3060, %v3061, %v3059
    %v3063 = vrsqrt.pop %v3026
    %v3064 = vmul.f32 %v3063, %v3026
    %v3065 = vmul.f32 %v3064, %v3063
    %v3066 = vmul.f32 0.5, %v3065
    %v3067 = vsub.f32 1.5, %v3066
    %v3068 = vmul.f32 %v3063, %v3067
    %v3069 = vmul.f32 %v3026, %v3068
    %vm3070 = vcmp.eq.f32.partialorder %v3026, inf
    %v3071 = vsel %vm3070, %v3026, %v3069
    %vm3072 = vcmp.eq.f32.partialorder %v3026, 0.0
    %v3073 = vand.u32 %v3026, 2147483648
    %v3074 = vsel %vm3072, %v3073, %v3071
    %v3075 = vsub.f32 %v3038, 1.0
    %v3076 = vsub.f32 %v3050, 1.0
    %v3077 = vsub.f32 %v3062, 1.0
    %v3078 = vsub.f32 %v3074, 1.0
    %v3079 = vand.u32 2147483647, %v3075
    %v3080 = vand.u32 2147483647, %v3076
    %v3081 = vand.u32 2147483647, %v3077
    %v3082 = vand.u32 2147483647, %v3078
    %v3083 = vadd.f32 %v2971, %v3079
    %v3084 = vadd.f32 %v2972, %v3080
    %v3085 = vadd.f32 %v2973, %v3081
    %v3086 = vadd.f32 %v2974, %v3082
    %v3087 = vmul.f32 %v873, %v873
    %v3088 = vmul.f32 %v905, %v905
    %v3089 = vmul.f32 %v937, %v937
    %v3090 = vmul.f32 %v969, %v969
    %v3091 = vmul.f32 %v876, %v876
    %v3092 = vmul.f32 %v908, %v908
    %v3093 = vmul.f32 %v940, %v940
    %v3094 = vmul.f32 %v972, %v972
    %v3095 = vmul.f32 %v879, %v879
    %v3096 = vmul.f32 %v911, %v911
    %v3097 = vmul.f32 %v943, %v943
    %v3098 = vmul.f32 %v975, %v975
    %v3099 = vmul.f32 %v882, %v882
    %v3100 = vmul.f32 %v914, %v914
    %v3101 = vmul.f32 %v946, %v946
    %v3102 = vmul.f32 %v978, %v978
    %v3103 = vadd.f32 %v3087, %v3091
    %v3104 = vadd.f32 %v3103, %v3095
    %v3105 = vadd.f32 %v3104, %v3099
    %v3106 = vrot.slane %v3105, 4
    %v3107 = vadd.f32 %v3105, %v3106
    %v3108 = vrot.slane %v3107, 2
    %v3109 = vadd.f32 %v3107, %v3108
    %v3110 = vrot.slane %v3109, 1
    %v3111 = vadd.f32 %v3109, %v3110
    %v3112 = vadd.f32 %v3088, %v3092
    %v3113 = vadd.f32 %v3112, %v3096
    %v3114 = vadd.f32 %v3113, %v3100
    %v3115 = vrot.slane %v3114, 4
    %v3116 = vadd.f32 %v3114, %v3115
    %v3117 = vrot.slane %v3116, 2
    %v3118 = vadd.f32 %v3116, %v3117
    %v3119 = vrot.slane %v3118, 1
    %v3120 = vadd.f32 %v3118, %v3119
    %v3121 = vadd.f32 %v3089, %v3093
    %v3122 = vadd.f32 %v3121, %v3097
    %v3123 = vadd.f32 %v3122, %v3101
    %v3124 = vrot.slane %v3123, 4
    %v3125 = vadd.f32 %v3123, %v3124
    %v3126 = vrot.slane %v3125, 2
    %v3127 = vadd.f32 %v3125, %v3126
    %v3128 = vrot.slane %v3127, 1
    %v3129 = vadd.f32 %v3127, %v3128
    %v3130 = vadd.f32 %v3090, %v3094
    %v3131 = vadd.f32 %v3130, %v3098
    %v3132 = vadd.f32 %v3131, %v3102
    %v3133 = vrot.slane %v3132, 4
    %v3134 = vadd.f32 %v3132, %v3133
    %v3135 = vrot.slane %v3134, 2
    %v3136 = vadd.f32 %v3134, %v3135
    %v3137 = vrot.slane %v3136, 1
    %v3138 = vadd.f32 %v3136, %v3137
    %v3139 = vrsqrt.pop %v3111
    %v3140 = vmul.f32 %v3139, %v3111
    %v3141 = vmul.f32 %v3140, %v3139
    %v3142 = vmul.f32 0.5, %v3141
    %v3143 = vsub.f32 1.5, %v3142
    %v3144 = vmul.f32 %v3139, %v3143
    %v3145 = vmul.f32 %v3111, %v3144
    %vm3146 = vcmp.eq.f32.partialorder %v3111, inf
    %v3147 = vsel %vm3146, %v3111, %v3145
    %vm3148 = vcmp.eq.f32.partialorder %v3111, 0.0
    %v3149 = vand.u32 %v3111, 2147483648
    %v3150 = vsel %vm3148, %v3149, %v3147
    %v3151 = vrsqrt.pop %v3120
    %v3152 = vmul.f32 %v3151, %v3120
    %v3153 = vmul.f32 %v3152, %v3151
    %v3154 = vmul.f32 0.5, %v3153
    %v3155 = vsub.f32 1.5, %v3154
    %v3156 = vmul.f32 %v3151, %v3155
    %v3157 = vmul.f32 %v3120, %v3156
    %vm3158 = vcmp.eq.f32.partialorder %v3120, inf
    %v3159 = vsel %vm3158, %v3120, %v3157
    %vm3160 = vcmp.eq.f32.partialorder %v3120, 0.0
    %v3161 = vand.u32 %v3120, 2147483648
    %v3162 = vsel %vm3160, %v3161, %v3159
    %v3163 = vrsqrt.pop %v3129
    %v3164 = vmul.f32 %v3163, %v3129
    %v3165 = vmul.f32 %v3164, %v3163
    %v3166 = vmul.f32 0.5, %v3165
    %v3167 = vsub.f32 1.5, %v3166
    %v3168 = vmul.f32 %v3163, %v3167
    %v3169 = vmul.f32 %v3129, %v3168
    %vm3170 = vcmp.eq.f32.partialorder %v3129, inf
    %v3171 = vsel %vm3170, %v3129, %v3169
    %vm3172 = vcmp.eq.f32.partialorder %v3129, 0.0
    %v3173 = vand.u32 %v3129, 2147483648
    %v3174 = vsel %vm3172, %v3173, %v3171
    %v3175 = vrsqrt.pop %v3138
    %v3176 = vmul.f32 %v3175, %v3138
    %v3177 = vmul.f32 %v3176, %v3175
    %v3178 = vmul.f32 0.5, %v3177
    %v3179 = vsub.f32 1.5, %v3178
    %v3180 = vmul.f32 %v3175, %v3179
    %v3181 = vmul.f32 %v3138, %v3180
    %vm3182 = vcmp.eq.f32.partialorder %v3138, inf
    %v3183 = vsel %vm3182, %v3138, %v3181
    %vm3184 = vcmp.eq.f32.partialorder %v3138, 0.0
    %v3185 = vand.u32 %v3138, 2147483648
    %v3186 = vsel %vm3184, %v3185, %v3183
    %v3187 = vsub.f32 %v3150, 1.0
    %v3188 = vsub.f32 %v3162, 1.0
    %v3189 = vsub.f32 %v3174, 1.0
    %v3190 = vsub.f32 %v3186, 1.0
    %v3191 = vand.u32 2147483647, %v3187
    %v3192 = vand.u32 2147483647, %v3188
    %v3193 = vand.u32 2147483647, %v3189
    %v3194 = vand.u32 2147483647, %v3190
    %v3195 = vadd.f32 %v3083, %v3191
    %v3196 = vadd.f32 %v3084, %v3192
    %v3197 = vadd.f32 %v3085, %v3193
    %v3198 = vadd.f32 %v3086, %v3194
    %v3199 = vand.u32 2147483647, %v1013
    %v3200 = vand.u32 2147483647, %v1045
    %v3201 = vand.u32 2147483647, %v1077
    %v3202 = vand.u32 2147483647, %v1109
    %v3203 = vand.u32 2147483647, %v1141
    %v3204 = vand.u32 2147483647, %v1173
    %v3205 = vand.u32 2147483647, %v1205
    %v3206 = vand.u32 2147483647, %v1237
    %v3207 = vadd.f32 %v3199, %v3203
    %v3208 = vadd.f32 %v3200, %v3204
    %v3209 = vadd.f32 %v3201, %v3205
    %v3210 = vadd.f32 %v3202, %v3206
    %v3211 = vsub.f32 %v1129, %v1001
    %v3212 = vsub.f32 %v1161, %v1033
    %v3213 = vsub.f32 %v1193, %v1065
    %v3214 = vsub.f32 %v1225, %v1097
    %v3215 = vsub.f32 %v1132, %v1004
    %v3216 = vsub.f32 %v1164, %v1036
    %v3217 = vsub.f32 %v1196, %v1068
    %v3218 = vsub.f32 %v1228, %v1100
    %v3219 = vsub.f32 %v1135, %v1007
    %v3220 = vsub.f32 %v1167, %v1039
    %v3221 = vsub.f32 %v1199, %v1071
    %v3222 = vsub.f32 %v1231, %v1103
    %v3223 = vsub.f32 %v1138, %v1010
    %v3224 = vsub.f32 %v1170, %v1042
    %v3225 = vsub.f32 %v1202, %v1074
    %v3226 = vsub.f32 %v1234, %v1106
    %v3227 = vmul.f32 %v3211, %v3211
    %v3228 = vmul.f32 %v3212, %v3212
    %v3229 = vmul.f32 %v3213, %v3213
    %v3230 = vmul.f32 %v3214, %v3214
    %v3231 = vmul.f32 %v3215, %v3215
    %v3232 = vmul.f32 %v3216, %v3216
    %v3233 = vmul.f32 %v3217, %v3217
    %v3234 = vmul.f32 %v3218, %v3218
    %v3235 = vmul.f32 %v3219, %v3219
    %v3236 = vmul.f32 %v3220, %v3220
    %v3237 = vmul.f32 %v3221, %v3221
    %v3238 = vmul.f32 %v3222, %v3222
    %v3239 = vmul.f32 %v3223, %v3223
    %v3240 = vmul.f32 %v3224, %v3224
    %v3241 = vmul.f32 %v3225, %v3225
    %v3242 = vmul.f32 %v3226, %v3226
    %v3243 = vadd.f32 %v3227, %v3231
    %v3244 = vadd.f32 %v3243, %v3235
    %v3245 = vadd.f32 %v3244, %v3239
    %v3246 = vrot.slane %v3245, 4
    %v3247 = vadd.f32 %v3245, %v3246
    %v3248 = vrot.slane %v3247, 2
    %v3249 = vadd.f32 %v3247, %v3248
    %v3250 = vrot.slane %v3249, 1
    %v3251 = vadd.f32 %v3249, %v3250
    %v3252 = vadd.f32 %v3228, %v3232
    %v3253 = vadd.f32 %v3252, %v3236
    %v3254 = vadd.f32 %v3253, %v3240
    %v3255 = vrot.slane %v3254, 4
    %v3256 = vadd.f32 %v3254, %v3255
    %v3257 = vrot.slane %v3256, 2
    %v3258 = vadd.f32 %v3256, %v3257
    %v3259 = vrot.slane %v3258, 1
    %v3260 = vadd.f32 %v3258, %v3259
    %v3261 = vadd.f32 %v3229, %v3233
    %v3262 = vadd.f32 %v3261, %v3237
    %v3263 = vadd.f32 %v3262, %v3241
    %v3264 = vrot.slane %v3263, 4
    %v3265 = vadd.f32 %v3263, %v3264
    %v3266 = vrot.slane %v3265, 2
    %v3267 = vadd.f32 %v3265, %v3266
    %v3268 = vrot.slane %v3267, 1
    %v3269 = vadd.f32 %v3267, %v3268
    %v3270 = vadd.f32 %v3230, %v3234
    %v3271 = vadd.f32 %v3270, %v3238
    %v3272 = vadd.f32 %v3271, %v3242
    %v3273 = vrot.slane %v3272, 4
    %v3274 = vadd.f32 %v3272, %v3273
    %v3275 = vrot.slane %v3274, 2
    %v3276 = vadd.f32 %v3274, %v3275
    %v3277 = vrot.slane %v3276, 1
    %v3278 = vadd.f32 %v3276, %v3277
    %v3279 = vrsqrt.pop %v3251
    %v3280 = vmul.f32 %v3279, %v3251
    %v3281 = vmul.f32 %v3280, %v3279
    %v3282 = vmul.f32 0.5, %v3281
    %v3283 = vsub.f32 1.5, %v3282
    %v3284 = vmul.f32 %v3279, %v3283
    %v3285 = vmul.f32 %v3251, %v3284
    %vm3286 = vcmp.eq.f32.partialorder %v3251, inf
    %v3287 = vsel %vm3286, %v3251, %v3285
    %vm3288 = vcmp.eq.f32.partialorder %v3251, 0.0
    %v3289 = vand.u32 %v3251, 2147483648
    %v3290 = vsel %vm3288, %v3289, %v3287
    %v3291 = vrsqrt.pop %v3260
    %v3292 = vmul.f32 %v3291, %v3260
    %v3293 = vmul.f32 %v3292, %v3291
    %v3294 = vmul.f32 0.5, %v3293
    %v3295 = vsub.f32 1.5, %v3294
    %v3296 = vmul.f32 %v3291, %v3295
    %v3297 = vmul.f32 %v3260, %v3296
    %vm3298 = vcmp.eq.f32.partialorder %v3260, inf
    %v3299 = vsel %vm3298, %v3260, %v3297
    %vm3300 = vcmp.eq.f32.partialorder %v3260, 0.0
    %v3301 = vand.u32 %v3260, 2147483648
    %v3302 = vsel %vm3300, %v3301, %v3299
    %v3303 = vrsqrt.pop %v3269
    %v3304 = vmul.f32 %v3303, %v3269
    %v3305 = vmul.f32 %v3304, %v3303
    %v3306 = vmul.f32 0.5, %v3305
    %v3307 = vsub.f32 1.5, %v3306
    %v3308 = vmul.f32 %v3303, %v3307
    %v3309 = vmul.f32 %v3269, %v3308
    %vm3310 = vcmp.eq.f32.partialorder %v3269, inf
    %v3311 = vsel %vm3310, %v3269, %v3309
    %vm3312 = vcmp.eq.f32.partialorder %v3269, 0.0
    %v3313 = vand.u32 %v3269, 2147483648
    %v3314 = vsel %vm3312, %v3313, %v3311
    %v3315 = vrsqrt.pop %v3278
    %v3316 = vmul.f32 %v3315, %v3278
    %v3317 = vmul.f32 %v3316, %v3315
    %v3318 = vmul.f32 0.5, %v3317
    %v3319 = vsub.f32 1.5, %v3318
    %v3320 = vmul.f32 %v3315, %v3319
    %v3321 = vmul.f32 %v3278, %v3320
    %vm3322 = vcmp.eq.f32.partialorder %v3278, inf
    %v3323 = vsel %vm3322, %v3278, %v3321
    %vm3324 = vcmp.eq.f32.partialorder %v3278, 0.0
    %v3325 = vand.u32 %v3278, 2147483648
    %v3326 = vsel %vm3324, %v3325, %v3323
    %v3327 = vsub.f32 %v3290, %v3207
    %v3328 = vsub.f32 %v3302, %v3208
    %v3329 = vsub.f32 %v3314, %v3209
    %v3330 = vsub.f32 %v3326, %v3210
    %v3331 = vmax.f32 %v3327, 0.0
    %v3332 = vmax.f32 %v3328, 0.0
    %v3333 = vmax.f32 %v3329, 0.0
    %v3334 = vmax.f32 %v3330, 0.0
    %v3335 = vsub.f32 %v1257, %v1001
    %v3336 = vsub.f32 %v1288, %v1033
    %v3337 = vsub.f32 %v1319, %v1065
    %v3338 = vsub.f32 %v1350, %v1097
    %v3339 = vsub.f32 %v1260, %v1004
    %v3340 = vsub.f32 %v1291, %v1036
    %v3341 = vsub.f32 %v1322, %v1068
    %v3342 = vsub.f32 %v1353, %v1100
    %v3343 = vsub.f32 %v1263, %v1007
    %v3344 = vsub.f32 %v1294, %v1039
    %v3345 = vsub.f32 %v1325, %v1071
    %v3346 = vsub.f32 %v1356, %v1103
    %v3347 = vsub.f32 %v1266, %v1010
    %v3348 = vsub.f32 %v1297, %v1042
    %v3349 = vsub.f32 %v1328, %v1074
    %v3350 = vsub.f32 %v1359, %v1106
    %v3351 = vmul.f32 %v3335, %v3335
    %v3352 = vmul.f32 %v3336, %v3336
    %v3353 = vmul.f32 %v3337, %v3337
    %v3354 = vmul.f32 %v3338, %v3338
    %v3355 = vmul.f32 %v3339, %v3339
    %v3356 = vmul.f32 %v3340, %v3340
    %v3357 = vmul.f32 %v3341, %v3341
    %v3358 = vmul.f32 %v3342, %v3342
    %v3359 = vmul.f32 %v3343, %v3343
    %v3360 = vmul.f32 %v3344, %v3344
    %v3361 = vmul.f32 %v3345, %v3345
    %v3362 = vmul.f32 %v3346, %v3346
    %v3363 = vmul.f32 %v3347, %v3347
    %v3364 = vmul.f32 %v3348, %v3348
    %v3365 = vmul.f32 %v3349, %v3349
    %v3366 = vmul.f32 %v3350, %v3350
    %v3367 = vadd.f32 %v3351, %v3355
    %v3368 = vadd.f32 %v3367, %v3359
    %v3369 = vadd.f32 %v3368, %v3363
    %v3370 = vrot.slane %v3369, 4
    %v3371 = vadd.f32 %v3369, %v3370
    %v3372 = vrot.slane %v3371, 2
    %v3373 = vadd.f32 %v3371, %v3372
    %v3374 = vrot.slane %v3373, 1
    %v3375 = vadd.f32 %v3373, %v3374
    %v3376 = vadd.f32 %v3352, %v3356
    %v3377 = vadd.f32 %v3376, %v3360
    %v3378 = vadd.f32 %v3377, %v3364
    %v3379 = vrot.slane %v3378, 4
    %v3380 = vadd.f32 %v3378, %v3379
    %v3381 = vrot.slane %v3380, 2
    %v3382 = vadd.f32 %v3380, %v3381
    %v3383 = vrot.slane %v3382, 1
    %v3384 = vadd.f32 %v3382, %v3383
    %v3385 = vadd.f32 %v3353, %v3357
    %v3386 = vadd.f32 %v3385, %v3361
    %v3387 = vadd.f32 %v3386, %v3365
    %v3388 = vrot.slane %v3387, 4
    %v3389 = vadd.f32 %v3387, %v3388
    %v3390 = vrot.slane %v3389, 2
    %v3391 = vadd.f32 %v3389, %v3390
    %v3392 = vrot.slane %v3391, 1
    %v3393 = vadd.f32 %v3391, %v3392
    %v3394 = vadd.f32 %v3354, %v3358
    %v3395 = vadd.f32 %v3394, %v3362
    %v3396 = vadd.f32 %v3395, %v3366
    %v3397 = vrot.slane %v3396, 4
    %v3398 = vadd.f32 %v3396, %v3397
    %v3399 = vrot.slane %v3398, 2
    %v3400 = vadd.f32 %v3398, %v3399
    %v3401 = vrot.slane %v3400, 1
    %v3402 = vadd.f32 %v3400, %v3401
    %v3403 = vrsqrt.pop %v3375
    %v3404 = vmul.f32 %v3403, %v3375
    %v3405 = vmul.f32 %v3404, %v3403
    %v3406 = vmul.f32 0.5, %v3405
    %v3407 = vsub.f32 1.5, %v3406
    %v3408 = vmul.f32 %v3403, %v3407
    %v3409 = vmul.f32 %v3375, %v3408
    %vm3410 = vcmp.eq.f32.partialorder %v3375, inf
    %v3411 = vsel %vm3410, %v3375, %v3409
    %vm3412 = vcmp.eq.f32.partialorder %v3375, 0.0
    %v3413 = vand.u32 %v3375, 2147483648
    %v3414 = vsel %vm3412, %v3413, %v3411
    %v3415 = vrsqrt.pop %v3384
    %v3416 = vmul.f32 %v3415, %v3384
    %v3417 = vmul.f32 %v3416, %v3415
    %v3418 = vmul.f32 0.5, %v3417
    %v3419 = vsub.f32 1.5, %v3418
    %v3420 = vmul.f32 %v3415, %v3419
    %v3421 = vmul.f32 %v3384, %v3420
    %vm3422 = vcmp.eq.f32.partialorder %v3384, inf
    %v3423 = vsel %vm3422, %v3384, %v3421
    %vm3424 = vcmp.eq.f32.partialorder %v3384, 0.0
    %v3425 = vand.u32 %v3384, 2147483648
    %v3426 = vsel %vm3424, %v3425, %v3423
    %v3427 = vrsqrt.pop %v3393
    %v3428 = vmul.f32 %v3427, %v3393
    %v3429 = vmul.f32 %v3428, %v3427
    %v3430 = vmul.f32 0.5, %v3429
    %v3431 = vsub.f32 1.5, %v3430
    %v3432 = vmul.f32 %v3427, %v3431
    %v3433 = vmul.f32 %v3393, %v3432
    %vm3434 = vcmp.eq.f32.partialorder %v3393, inf
    %v3435 = vsel %vm3434, %v3393, %v3433
    %vm3436 = vcmp.eq.f32.partialorder %v3393, 0.0
    %v3437 = vand.u32 %v3393, 2147483648
    %v3438 = vsel %vm3436, %v3437, %v3435
    %v3439 = vrsqrt.pop %v3402
    %v3440 = vmul.f32 %v3439, %v3402
    %v3441 = vmul.f32 %v3440, %v3439
    %v3442 = vmul.f32 0.5, %v3441
    %v3443 = vsub.f32 1.5, %v3442
    %v3444 = vmul.f32 %v3439, %v3443
    %v3445 = vmul.f32 %v3402, %v3444
    %vm3446 = vcmp.eq.f32.partialorder %v3402, inf
    %v3447 = vsel %vm3446, %v3402, %v3445
    %vm3448 = vcmp.eq.f32.partialorder %v3402, 0.0
    %v3449 = vand.u32 %v3402, 2147483648
    %v3450 = vsel %vm3448, %v3449, %v3447
    %v3451 = vsub.f32 %v3414, %v3199
    %v3452 = vsub.f32 %v3426, %v3200
    %v3453 = vsub.f32 %v3438, %v3201
    %v3454 = vsub.f32 %v3450, %v3202
    %v3455 = vmax.f32 %v3451, 0.0
    %v3456 = vmax.f32 %v3452, 0.0
    %v3457 = vmax.f32 %v3453, 0.0
    %v3458 = vmax.f32 %v3454, 0.0
    %v3459 = vadd.f32 %v3331, %v3455
    %v3460 = vadd.f32 %v3332, %v3456
    %v3461 = vadd.f32 %v3333, %v3457
    %v3462 = vadd.f32 %v3334, %v3458
    %v3463 = vsub.f32 %v1257, %v1129
    %v3464 = vsub.f32 %v1288, %v1161
    %v3465 = vsub.f32 %v1319, %v1193
    %v3466 = vsub.f32 %v1350, %v1225
    %v3467 = vsub.f32 %v1260, %v1132
    %v3468 = vsub.f32 %v1291, %v1164
    %v3469 = vsub.f32 %v1322, %v1196
    %v3470 = vsub.f32 %v1353, %v1228
    %v3471 = vsub.f32 %v1263, %v1135
    %v3472 = vsub.f32 %v1294, %v1167
    %v3473 = vsub.f32 %v1325, %v1199
    %v3474 = vsub.f32 %v1356, %v1231
    %v3475 = vsub.f32 %v1266, %v1138
    %v3476 = vsub.f32 %v1297, %v1170
    %v3477 = vsub.f32 %v1328, %v1202
    %v3478 = vsub.f32 %v1359, %v1234
    %v3479 = vmul.f32 %v3463, %v3463
    %v3480 = vmul.f32 %v3464, %v3464
    %v3481 = vmul.f32 %v3465, %v3465
    %v3482 = vmul.f32 %v3466, %v3466
    %v3483 = vmul.f32 %v3467, %v3467
    %v3484 = vmul.f32 %v3468, %v3468
    %v3485 = vmul.f32 %v3469, %v3469
    %v3486 = vmul.f32 %v3470, %v3470
    %v3487 = vmul.f32 %v3471, %v3471
    %v3488 = vmul.f32 %v3472, %v3472
    %v3489 = vmul.f32 %v3473, %v3473
    %v3490 = vmul.f32 %v3474, %v3474
    %v3491 = vmul.f32 %v3475, %v3475
    %v3492 = vmul.f32 %v3476, %v3476
    %v3493 = vmul.f32 %v3477, %v3477
    %v3494 = vmul.f32 %v3478, %v3478
    %v3495 = vadd.f32 %v3479, %v3483
    %v3496 = vadd.f32 %v3495, %v3487
    %v3497 = vadd.f32 %v3496, %v3491
    %v3498 = vrot.slane %v3497, 4
    %v3499 = vadd.f32 %v3497, %v3498
    %v3500 = vrot.slane %v3499, 2
    %v3501 = vadd.f32 %v3499, %v3500
    %v3502 = vrot.slane %v3501, 1
    %v3503 = vadd.f32 %v3501, %v3502
    %v3504 = vadd.f32 %v3480, %v3484
    %v3505 = vadd.f32 %v3504, %v3488
    %v3506 = vadd.f32 %v3505, %v3492
    %v3507 = vrot.slane %v3506, 4
    %v3508 = vadd.f32 %v3506, %v3507
    %v3509 = vrot.slane %v3508, 2
    %v3510 = vadd.f32 %v3508, %v3509
    %v3511 = vrot.slane %v3510, 1
    %v3512 = vadd.f32 %v3510, %v3511
    %v3513 = vadd.f32 %v3481, %v3485
    %v3514 = vadd.f32 %v3513, %v3489
    %v3515 = vadd.f32 %v3514, %v3493
    %v3516 = vrot.slane %v3515, 4
    %v3517 = vadd.f32 %v3515, %v3516
    %v3518 = vrot.slane %v3517, 2
    %v3519 = vadd.f32 %v3517, %v3518
    %v3520 = vrot.slane %v3519, 1
    %v3521 = vadd.f32 %v3519, %v3520
    %v3522 = vadd.f32 %v3482, %v3486
    %v3523 = vadd.f32 %v3522, %v3490
    %v3524 = vadd.f32 %v3523, %v3494
    %v3525 = vrot.slane %v3524, 4
    %v3526 = vadd.f32 %v3524, %v3525
    %v3527 = vrot.slane %v3526, 2
    %v3528 = vadd.f32 %v3526, %v3527
    %v3529 = vrot.slane %v3528, 1
    %v3530 = vadd.f32 %v3528, %v3529
    %v3531 = vrsqrt.pop %v3503
    %v3532 = vmul.f32 %v3531, %v3503
    %v3533 = vmul.f32 %v3532, %v3531
    %v3534 = vmul.f32 0.5, %v3533
    %v3535 = vsub.f32 1.5, %v3534
    %v3536 = vmul.f32 %v3531, %v3535
    %v3537 = vmul.f32 %v3503, %v3536
    %vm3538 = vcmp.eq.f32.partialorder %v3503, inf
    %v3539 = vsel %vm3538, %v3503, %v3537
    %vm3540 = vcmp.eq.f32.partialorder %v3503, 0.0
    %v3541 = vand.u32 %v3503, 2147483648
    %v3542 = vsel %vm3540, %v3541, %v3539
    %v3543 = vrsqrt.pop %v3512
    %v3544 = vmul.f32 %v3543, %v3512
    %v3545 = vmul.f32 %v3544, %v3543
    %v3546 = vmul.f32 0.5, %v3545
    %v3547 = vsub.f32 1.5, %v3546
    %v3548 = vmul.f32 %v3543, %v3547
    %v3549 = vmul.f32 %v3512, %v3548
    %vm3550 = vcmp.eq.f32.partialorder %v3512, inf
    %v3551 = vsel %vm3550, %v3512, %v3549
    %vm3552 = vcmp.eq.f32.partialorder %v3512, 0.0
    %v3553 = vand.u32 %v3512, 2147483648
    %v3554 = vsel %vm3552, %v3553, %v3551
    %v3555 = vrsqrt.pop %v3521
    %v3556 = vmul.f32 %v3555, %v3521
    %v3557 = vmul.f32 %v3556, %v3555
    %v3558 = vmul.f32 0.5, %v3557
    %v3559 = vsub.f32 1.5, %v3558
    %v3560 = vmul.f32 %v3555, %v3559
    %v3561 = vmul.f32 %v3521, %v3560
    %vm3562 = vcmp.eq.f32.partialorder %v3521, inf
    %v3563 = vsel %vm3562, %v3521, %v3561
    %vm3564 = vcmp.eq.f32.partialorder %v3521, 0.0
    %v3565 = vand.u32 %v3521, 2147483648
    %v3566 = vsel %vm3564, %v3565, %v3563
    %v3567 = vrsqrt.pop %v3530
    %v3568 = vmul.f32 %v3567, %v3530
    %v3569 = vmul.f32 %v3568, %v3567
    %v3570 = vmul.f32 0.5, %v3569
    %v3571 = vsub.f32 1.5, %v3570
    %v3572 = vmul.f32 %v3567, %v3571
    %v3573 = vmul.f32 %v3530, %v3572
    %vm3574 = vcmp.eq.f32.partialorder %v3530, inf
    %v3575 = vsel %vm3574, %v3530, %v3573
    %vm3576 = vcmp.eq.f32.partialorder %v3530, 0.0
    %v3577 = vand.u32 %v3530, 2147483648
    %v3578 = vsel %vm3576, %v3577, %v3575
    %v3579 = vsub.f32 %v3542, %v3203
    %v3580 = vsub.f32 %v3554, %v3204
    %v3581 = vsub.f32 %v3566, %v3205
    %v3582 = vsub.f32 %v3578, %v3206
    %v3583 = vmax.f32 %v3579, 0.0
    %v3584 = vmax.f32 %v3580, 0.0
    %v3585 = vmax.f32 %v3581, 0.0
    %v3586 = vmax.f32 %v3582, 0.0
    %v3587 = vadd.f32 %v3459, %v3583
    %v3588 = vadd.f32 %v3460, %v3584
    %v3589 = vadd.f32 %v3461, %v3585
    %v3590 = vadd.f32 %v3462, %v3586
    %v3591 = vmul.f32 %v1001, %v1001
    %v3592 = vmul.f32 %v1033, %v1033
    %v3593 = vmul.f32 %v1065, %v1065
    %v3594 = vmul.f32 %v1097, %v1097
    %v3595 = vmul.f32 %v1004, %v1004
    %v3596 = vmul.f32 %v1036, %v1036
    %v3597 = vmul.f32 %v1068, %v1068
    %v3598 = vmul.f32 %v1100, %v1100
    %v3599 = vmul.f32 %v1007, %v1007
    %v3600 = vmul.f32 %v1039, %v1039
    %v3601 = vmul.f32 %v1071, %v1071
    %v3602 = vmul.f32 %v1103, %v1103
    %v3603 = vmul.f32 %v1010, %v1010
    %v3604 = vmul.f32 %v1042, %v1042
    %v3605 = vmul.f32 %v1074, %v1074
    %v3606 = vmul.f32 %v1106, %v1106
    %v3607 = vadd.f32 %v3591, %v3595
    %v3608 = vadd.f32 %v3607, %v3599
    %v3609 = vadd.f32 %v3608, %v3603
    %v3610 = vrot.slane %v3609, 4
    %v3611 = vadd.f32 %v3609, %v3610
    %v3612 = vrot.slane %v3611, 2
    %v3613 = vadd.f32 %v3611, %v3612
    %v3614 = vrot.slane %v3613, 1
    %v3615 = vadd.f32 %v3613, %v3614
    %v3616 = vadd.f32 %v3592, %v3596
    %v3617 = vadd.f32 %v3616, %v3600
    %v3618 = vadd.f32 %v3617, %v3604
    %v3619 = vrot.slane %v3618, 4
    %v3620 = vadd.f32 %v3618, %v3619
    %v3621 = vrot.slane %v3620, 2
    %v3622 = vadd.f32 %v3620, %v3621
    %v3623 = vrot.slane %v3622, 1
    %v3624 = vadd.f32 %v3622, %v3623
    %v3625 = vadd.f32 %v3593, %v3597
    %v3626 = vadd.f32 %v3625, %v3601
    %v3627 = vadd.f32 %v3626, %v3605
    %v3628 = vrot.slane %v3627, 4
    %v3629 = vadd.f32 %v3627, %v3628
    %v3630 = vrot.slane %v3629, 2
    %v3631 = vadd.f32 %v3629, %v3630
    %v3632 = vrot.slane %v3631, 1
    %v3633 = vadd.f32 %v3631, %v3632
    %v3634 = vadd.f32 %v3594, %v3598
    %v3635 = vadd.f32 %v3634, %v3602
    %v3636 = vadd.f32 %v3635, %v3606
    %v3637 = vrot.slane %v3636, 4
    %v3638 = vadd.f32 %v3636, %v3637
    %v3639 = vrot.slane %v3638, 2
    %v3640 = vadd.f32 %v3638, %v3639
    %v3641 = vrot.slane %v3640, 1
    %v3642 = vadd.f32 %v3640, %v3641
    %v3643 = vrsqrt.pop %v3615
    %v3644 = vmul.f32 %v3643, %v3615
    %v3645 = vmul.f32 %v3644, %v3643
    %v3646 = vmul.f32 0.5, %v3645
    %v3647 = vsub.f32 1.5, %v3646
    %v3648 = vmul.f32 %v3643, %v3647
    %v3649 = vmul.f32 %v3615, %v3648
    %vm3650 = vcmp.eq.f32.partialorder %v3615, inf
    %v3651 = vsel %vm3650, %v3615, %v3649
    %vm3652 = vcmp.eq.f32.partialorder %v3615, 0.0
    %v3653 = vand.u32 %v3615, 2147483648
    %v3654 = vsel %vm3652, %v3653, %v3651
    %v3655 = vrsqrt.pop %v3624
    %v3656 = vmul.f32 %v3655, %v3624
    %v3657 = vmul.f32 %v3656, %v3655
    %v3658 = vmul.f32 0.5, %v3657
    %v3659 = vsub.f32 1.5, %v3658
    %v3660 = vmul.f32 %v3655, %v3659
    %v3661 = vmul.f32 %v3624, %v3660
    %vm3662 = vcmp.eq.f32.partialorder %v3624, inf
    %v3663 = vsel %vm3662, %v3624, %v3661
    %vm3664 = vcmp.eq.f32.partialorder %v3624, 0.0
    %v3665 = vand.u32 %v3624, 2147483648
    %v3666 = vsel %vm3664, %v3665, %v3663
    %v3667 = vrsqrt.pop %v3633
    %v3668 = vmul.f32 %v3667, %v3633
    %v3669 = vmul.f32 %v3668, %v3667
    %v3670 = vmul.f32 0.5, %v3669
    %v3671 = vsub.f32 1.5, %v3670
    %v3672 = vmul.f32 %v3667, %v3671
    %v3673 = vmul.f32 %v3633, %v3672
    %vm3674 = vcmp.eq.f32.partialorder %v3633, inf
    %v3675 = vsel %vm3674, %v3633, %v3673
    %vm3676 = vcmp.eq.f32.partialorder %v3633, 0.0
    %v3677 = vand.u32 %v3633, 2147483648
    %v3678 = vsel %vm3676, %v3677, %v3675
    %v3679 = vrsqrt.pop %v3642
    %v3680 = vmul.f32 %v3679, %v3642
    %v3681 = vmul.f32 %v3680, %v3679
    %v3682 = vmul.f32 0.5, %v3681
    %v3683 = vsub.f32 1.5, %v3682
    %v3684 = vmul.f32 %v3679, %v3683
    %v3685 = vmul.f32 %v3642, %v3684
    %vm3686 = vcmp.eq.f32.partialorder %v3642, inf
    %v3687 = vsel %vm3686, %v3642, %v3685
    %vm3688 = vcmp.eq.f32.partialorder %v3642, 0.0
    %v3689 = vand.u32 %v3642, 2147483648
    %v3690 = vsel %vm3688, %v3689, %v3687
    %v3691 = vsub.f32 %v3654, 1.0
    %v3692 = vsub.f32 %v3666, 1.0
    %v3693 = vsub.f32 %v3678, 1.0
    %v3694 = vsub.f32 %v3690, 1.0
    %v3695 = vand.u32 2147483647, %v3691
    %v3696 = vand.u32 2147483647, %v3692
    %v3697 = vand.u32 2147483647, %v3693
    %v3698 = vand.u32 2147483647, %v3694
    %v3699 = vadd.f32 %v3587, %v3695
    %v3700 = vadd.f32 %v3588, %v3696
    %v3701 = vadd.f32 %v3589, %v3697
    %v3702 = vadd.f32 %v3590, %v3698
    %v3703 = vmul.f32 %v1129, %v1129
    %v3704 = vmul.f32 %v1161, %v1161
    %v3705 = vmul.f32 %v1193, %v1193
    %v3706 = vmul.f32 %v1225, %v1225
    %v3707 = vmul.f32 %v1132, %v1132
    %v3708 = vmul.f32 %v1164, %v1164
    %v3709 = vmul.f32 %v1196, %v1196
    %v3710 = vmul.f32 %v1228, %v1228
    %v3711 = vmul.f32 %v1135, %v1135
    %v3712 = vmul.f32 %v1167, %v1167
    %v3713 = vmul.f32 %v1199, %v1199
    %v3714 = vmul.f32 %v1231, %v1231
    %v3715 = vmul.f32 %v1138, %v1138
    %v3716 = vmul.f32 %v1170, %v1170
    %v3717 = vmul.f32 %v1202, %v1202
    %v3718 = vmul.f32 %v1234, %v1234
    %v3719 = vadd.f32 %v3703, %v3707
    %v3720 = vadd.f32 %v3719, %v3711
    %v3721 = vadd.f32 %v3720, %v3715
    %v3722 = vrot.slane %v3721, 4
    %v3723 = vadd.f32 %v3721, %v3722
    %v3724 = vrot.slane %v3723, 2
    %v3725 = vadd.f32 %v3723, %v3724
    %v3726 = vrot.slane %v3725, 1
    %v3727 = vadd.f32 %v3725, %v3726
    %v3728 = vadd.f32 %v3704, %v3708
    %v3729 = vadd.f32 %v3728, %v3712
    %v3730 = vadd.f32 %v3729, %v3716
    %v3731 = vrot.slane %v3730, 4
    %v3732 = vadd.f32 %v3730, %v3731
    %v3733 = vrot.slane %v3732, 2
    %v3734 = vadd.f32 %v3732, %v3733
    %v3735 = vrot.slane %v3734, 1
    %v3736 = vadd.f32 %v3734, %v3735
    %v3737 = vadd.f32 %v3705, %v3709
    %v3738 = vadd.f32 %v3737, %v3713
    %v3739 = vadd.f32 %v3738, %v3717
    %v3740 = vrot.slane %v3739, 4
    %v3741 = vadd.f32 %v3739, %v3740
    %v3742 = vrot.slane %v3741, 2
    %v3743 = vadd.f32 %v3741, %v3742
    %v3744 = vrot.slane %v3743, 1
    %v3745 = vadd.f32 %v3743, %v3744
    %v3746 = vadd.f32 %v3706, %v3710
    %v3747 = vadd.f32 %v3746, %v3714
    %v3748 = vadd.f32 %v3747, %v3718
    %v3749 = vrot.slane %v3748, 4
    %v3750 = vadd.f32 %v3748, %v3749
    %v3751 = vrot.slane %v3750, 2
    %v3752 = vadd.f32 %v3750, %v3751
    %v3753 = vrot.slane %v3752, 1
    %v3754 = vadd.f32 %v3752, %v3753
    %v3755 = vrsqrt.pop %v3727
    %v3756 = vmul.f32 %v3755, %v3727
    %v3757 = vmul.f32 %v3756, %v3755
    %v3758 = vmul.f32 0.5, %v3757
    %v3759 = vsub.f32 1.5, %v3758
    %v3760 = vmul.f32 %v3755, %v3759
    %v3761 = vmul.f32 %v3727, %v3760
    %vm3762 = vcmp.eq.f32.partialorder %v3727, inf
    %v3763 = vsel %vm3762, %v3727, %v3761
    %vm3764 = vcmp.eq.f32.partialorder %v3727, 0.0
    %v3765 = vand.u32 %v3727, 2147483648
    %v3766 = vsel %vm3764, %v3765, %v3763
    %v3767 = vrsqrt.pop %v3736
    %v3768 = vmul.f32 %v3767, %v3736
    %v3769 = vmul.f32 %v3768, %v3767
    %v3770 = vmul.f32 0.5, %v3769
    %v3771 = vsub.f32 1.5, %v3770
    %v3772 = vmul.f32 %v3767, %v3771
    %v3773 = vmul.f32 %v3736, %v3772
    %vm3774 = vcmp.eq.f32.partialorder %v3736, inf
    %v3775 = vsel %vm3774, %v3736, %v3773
    %vm3776 = vcmp.eq.f32.partialorder %v3736, 0.0
    %v3777 = vand.u32 %v3736, 2147483648
    %v3778 = vsel %vm3776, %v3777, %v3775
    %v3779 = vrsqrt.pop %v3745
    %v3780 = vmul.f32 %v3779, %v3745
    %v3781 = vmul.f32 %v3780, %v3779
    %v3782 = vmul.f32 0.5, %v3781
    %v3783 = vsub.f32 1.5, %v3782
    %v3784 = vmul.f32 %v3779, %v3783
    %v3785 = vmul.f32 %v3745, %v3784
    %vm3786 = vcmp.eq.f32.partialorder %v3745, inf
    %v3787 = vsel %vm3786, %v3745, %v3785
    %vm3788 = vcmp.eq.f32.partialorder %v3745, 0.0
    %v3789 = vand.u32 %v3745, 2147483648
    %v3790 = vsel %vm3788, %v3789, %v3787
    %v3791 = vrsqrt.pop %v3754
    %v3792 = vmul.f32 %v3791, %v3754
    %v3793 = vmul.f32 %v3792, %v3791
    %v3794 = vmul.f32 0.5, %v3793
    %v3795 = vsub.f32 1.5, %v3794
    %v3796 = vmul.f32 %v3791, %v3795
    %v3797 = vmul.f32 %v3754, %v3796
    %vm3798 = vcmp.eq.f32.partialorder %v3754, inf
    %v3799 = vsel %vm3798, %v3754, %v3797
    %vm3800 = vcmp.eq.f32.partialorder %v3754, 0.0
    %v3801 = vand.u32 %v3754, 2147483648
    %v3802 = vsel %vm3800, %v3801, %v3799
    %v3803 = vsub.f32 %v3766, 1.0
    %v3804 = vsub.f32 %v3778, 1.0
    %v3805 = vsub.f32 %v3790, 1.0
    %v3806 = vsub.f32 %v3802, 1.0
    %v3807 = vand.u32 2147483647, %v3803
    %v3808 = vand.u32 2147483647, %v3804
    %v3809 = vand.u32 2147483647, %v3805
    %v3810 = vand.u32 2147483647, %v3806
    %v3811 = vadd.f32 %v3699, %v3807
    %v3812 = vadd.f32 %v3700, %v3808
    %v3813 = vadd.f32 %v3701, %v3809
    %v3814 = vadd.f32 %v3702, %v3810
    %v3815 = vmul.f32 %v1257, %v1257
    %v3816 = vmul.f32 %v1288, %v1288
    %v3817 = vmul.f32 %v1319, %v1319
    %v3818 = vmul.f32 %v1350, %v1350
    %v3819 = vmul.f32 %v1260, %v1260
    %v3820 = vmul.f32 %v1291, %v1291
    %v3821 = vmul.f32 %v1322, %v1322
    %v3822 = vmul.f32 %v1353, %v1353
    %v3823 = vmul.f32 %v1263, %v1263
    %v3824 = vmul.f32 %v1294, %v1294
    %v3825 = vmul.f32 %v1325, %v1325
    %v3826 = vmul.f32 %v1356, %v1356
    %v3827 = vmul.f32 %v1266, %v1266
    %v3828 = vmul.f32 %v1297, %v1297
    %v3829 = vmul.f32 %v1328, %v1328
    %v3830 = vmul.f32 %v1359, %v1359
    %v3831 = vadd.f32 %v3815, %v3819
    %v3832 = vadd.f32 %v3831, %v3823
    %v3833 = vadd.f32 %v3832, %v3827
    %v3834 = vrot.slane %v3833, 4
    %v3835 = vadd.f32 %v3833, %v3834
    %v3836 = vrot.slane %v3835, 2
    %v3837 = vadd.f32 %v3835, %v3836
    %v3838 = vrot.slane %v3837, 1
    %v3839 = vadd.f32 %v3837, %v3838
    %v3840 = vadd.f32 %v3816, %v3820
    %v3841 = vadd.f32 %v3840, %v3824
    %v3842 = vadd.f32 %v3841, %v3828
    %v3843 = vrot.slane %v3842, 4
    %v3844 = vadd.f32 %v3842, %v3843
    %v3845 = vrot.slane %v3844, 2
    %v3846 = vadd.f32 %v3844, %v3845
    %v3847 = vrot.slane %v3846, 1
    %v3848 = vadd.f32 %v3846, %v3847
    %v3849 = vadd.f32 %v3817, %v3821
    %v3850 = vadd.f32 %v3849, %v3825
    %v3851 = vadd.f32 %v3850, %v3829
    %v3852 = vrot.slane %v3851, 4
    %v3853 = vadd.f32 %v3851, %v3852
    %v3854 = vrot.slane %v3853, 2
    %v3855 = vadd.f32 %v3853, %v3854
    %v3856 = vrot.slane %v3855, 1
    %v3857 = vadd.f32 %v3855, %v3856
    %v3858 = vadd.f32 %v3818, %v3822
    %v3859 = vadd.f32 %v3858, %v3826
    %v3860 = vadd.f32 %v3859, %v3830
    %v3861 = vrot.slane %v3860, 4
    %v3862 = vadd.f32 %v3860, %v3861
    %v3863 = vrot.slane %v3862, 2
    %v3864 = vadd.f32 %v3862, %v3863
    %v3865 = vrot.slane %v3864, 1
    %v3866 = vadd.f32 %v3864, %v3865
    %v3867 = vrsqrt.pop %v3839
    %v3868 = vmul.f32 %v3867, %v3839
    %v3869 = vmul.f32 %v3868, %v3867
    %v3870 = vmul.f32 0.5, %v3869
    %v3871 = vsub.f32 1.5, %v3870
    %v3872 = vmul.f32 %v3867, %v3871
    %v3873 = vmul.f32 %v3839, %v3872
    %vm3874 = vcmp.eq.f32.partialorder %v3839, inf
    %v3875 = vsel %vm3874, %v3839, %v3873
    %vm3876 = vcmp.eq.f32.partialorder %v3839, 0.0
    %v3877 = vand.u32 %v3839, 2147483648
    %v3878 = vsel %vm3876, %v3877, %v3875
    %v3879 = vrsqrt.pop %v3848
    %v3880 = vmul.f32 %v3879, %v3848
    %v3881 = vmul.f32 %v3880, %v3879
    %v3882 = vmul.f32 0.5, %v3881
    %v3883 = vsub.f32 1.5, %v3882
    %v3884 = vmul.f32 %v3879, %v3883
    %v3885 = vmul.f32 %v3848, %v3884
    %vm3886 = vcmp.eq.f32.partialorder %v3848, inf
    %v3887 = vsel %vm3886, %v3848, %v3885
    %vm3888 = vcmp.eq.f32.partialorder %v3848, 0.0
    %v3889 = vand.u32 %v3848, 2147483648
    %v3890 = vsel %vm3888, %v3889, %v3887
    %v3891 = vrsqrt.pop %v3857
    %v3892 = vmul.f32 %v3891, %v3857
    %v3893 = vmul.f32 %v3892, %v3891
    %v3894 = vmul.f32 0.5, %v3893
    %v3895 = vsub.f32 1.5, %v3894
    %v3896 = vmul.f32 %v3891, %v3895
    %v3897 = vmul.f32 %v3857, %v3896
    %vm3898 = vcmp.eq.f32.partialorder %v3857, inf
    %v3899 = vsel %vm3898, %v3857, %v3897
    %vm3900 = vcmp.eq.f32.partialorder %v3857, 0.0
    %v3901 = vand.u32 %v3857, 2147483648
    %v3902 = vsel %vm3900, %v3901, %v3899
    %v3903 = vrsqrt.pop %v3866
    %v3904 = vmul.f32 %v3903, %v3866
    %v3905 = vmul.f32 %v3904, %v3903
    %v3906 = vmul.f32 0.5, %v3905
    %v3907 = vsub.f32 1.5, %v3906
    %v3908 = vmul.f32 %v3903, %v3907
    %v3909 = vmul.f32 %v3866, %v3908
    %vm3910 = vcmp.eq.f32.partialorder %v3866, inf
    %v3911 = vsel %vm3910, %v3866, %v3909
    %vm3912 = vcmp.eq.f32.partialorder %v3866, 0.0
    %v3913 = vand.u32 %v3866, 2147483648
    %v3914 = vsel %vm3912, %v3913, %v3911
    %v3915 = vsub.f32 %v3878, 1.0
    %v3916 = vsub.f32 %v3890, 1.0
    %v3917 = vsub.f32 %v3902, 1.0
    %v3918 = vsub.f32 %v3914, 1.0
    %v3919 = vand.u32 2147483647, %v3915
    %v3920 = vand.u32 2147483647, %v3916
    %v3921 = vand.u32 2147483647, %v3917
    %v3922 = vand.u32 2147483647, %v3918
    %v3923 = vadd.f32 %v3811, %v3919
    %v3924 = vadd.f32 %v3812, %v3920
    %v3925 = vadd.f32 %v3813, %v3921
    %v3926 = vadd.f32 %v3814, %v3922
    %v3927 = vand.u32 2147483647, %v1393
    %v3928 = vand.u32 2147483647, %v1425
    %v3929 = vand.u32 2147483647, %v1457
    %v3930 = vand.u32 2147483647, %v1489
    %v3931 = vand.u32 2147483647, %v1521
    %v3932 = vand.u32 2147483647, %v1553
    %v3933 = vand.u32 2147483647, %v1585
    %v3934 = vand.u32 2147483647, %v1617
    %v3935 = vadd.f32 %v1381, %v2509
    %v3936 = vadd.f32 %v1413, %v2538
    %v3937 = vadd.f32 %v1445, %v2567
    %v3938 = vadd.f32 %v1477, %v2596
    %v3939 = vadd.f32 %v1384, %v2512
    %v3940 = vadd.f32 %v1416, %v2541
    %v3941 = vadd.f32 %v1448, %v2570
    %v3942 = vadd.f32 %v1480, %v2599
    %v3943 = vadd.f32 %v1387, %v2515
    %v3944 = vadd.f32 %v1419, %v2544
    %v3945 = vadd.f32 %v1451, %v2573
    %v3946 = vadd.f32 %v1483, %v2602
    %v3947 = vadd.f32 %v1390, %v2518
    %v3948 = vadd.f32 %v1422, %v2547
    %v3949 = vadd.f32 %v1454, %v2576
    %v3950 = vadd.f32 %v1486, %v2605
    %v3951 = vsub.f32 %v3935, %v1509
    %v3952 = vsub.f32 %v3936, %v1541
    %v3953 = vsub.f32 %v3937, %v1573
    %v3954 = vsub.f32 %v3938, %v1605
    %v3955 = vsub.f32 %v3939, %v1512
    %v3956 = vsub.f32 %v3940, %v1544
    %v3957 = vsub.f32 %v3941, %v1576
    %v3958 = vsub.f32 %v3942, %v1608
    %v3959 = vsub.f32 %v3943, %v1515
    %v3960 = vsub.f32 %v3944, %v1547
    %v3961 = vsub.f32 %v3945, %v1579
    %v3962 = vsub.f32 %v3946, %v1611
    %v3963 = vsub.f32 %v3947, %v1518
    %v3964 = vsub.f32 %v3948, %v1550
    %v3965 = vsub.f32 %v3949, %v1582
    %v3966 = vsub.f32 %v3950, %v1614
    %v3967 = vmul.f32 %v3951, %v3951
    %v3968 = vmul.f32 %v3952, %v3952
    %v3969 = vmul.f32 %v3953, %v3953
    %v3970 = vmul.f32 %v3954, %v3954
    %v3971 = vmul.f32 %v3955, %v3955
    %v3972 = vmul.f32 %v3956, %v3956
    %v3973 = vmul.f32 %v3957, %v3957
    %v3974 = vmul.f32 %v3958, %v3958
    %v3975 = vmul.f32 %v3959, %v3959
    %v3976 = vmul.f32 %v3960, %v3960
    %v3977 = vmul.f32 %v3961, %v3961
    %v3978 = vmul.f32 %v3962, %v3962
    %v3979 = vmul.f32 %v3963, %v3963
    %v3980 = vmul.f32 %v3964, %v3964
    %v3981 = vmul.f32 %v3965, %v3965
    %v3982 = vmul.f32 %v3966, %v3966
    %v3983 = vadd.f32 %v3967, %v3971
    %v3984 = vadd.f32 %v3983, %v3975
    %v3985 = vadd.f32 %v3984, %v3979
    %v3986 = vrot.slane %v3985, 4
    %v3987 = vadd.f32 %v3985, %v3986
    %v3988 = vrot.slane %v3987, 2
    %v3989 = vadd.f32 %v3987, %v3988
    %v3990 = vrot.slane %v3989, 1
    %v3991 = vadd.f32 %v3989, %v3990
    %v3992 = vadd.f32 %v3968, %v3972
    %v3993 = vadd.f32 %v3992, %v3976
    %v3994 = vadd.f32 %v3993, %v3980
    %v3995 = vrot.slane %v3994, 4
    %v3996 = vadd.f32 %v3994, %v3995
    %v3997 = vrot.slane %v3996, 2
    %v3998 = vadd.f32 %v3996, %v3997
    %v3999 = vrot.slane %v3998, 1
    %v4000 = vadd.f32 %v3998, %v3999
    %v4001 = vadd.f32 %v3969, %v3973
    %v4002 = vadd.f32 %v4001, %v3977
    %v4003 = vadd.f32 %v4002, %v3981
    %v4004 = vrot.slane %v4003, 4
    %v4005 = vadd.f32 %v4003, %v4004
    %v4006 = vrot.slane %v4005, 2
    %v4007 = vadd.f32 %v4005, %v4006
    %v4008 = vrot.slane %v4007, 1
    %v4009 = vadd.f32 %v4007, %v4008
    %v4010 = vadd.f32 %v3970, %v3974
    %v4011 = vadd.f32 %v4010, %v3978
    %v4012 = vadd.f32 %v4011, %v3982
    %v4013 = vrot.slane %v4012, 4
    %v4014 = vadd.f32 %v4012, %v4013
    %v4015 = vrot.slane %v4014, 2
    %v4016 = vadd.f32 %v4014, %v4015
    %v4017 = vrot.slane %v4016, 1
    %v4018 = vadd.f32 %v4016, %v4017
    %v4019 = vrsqrt.pop %v3991
    %v4020 = vmul.f32 %v4019, %v3991
    %v4021 = vmul.f32 %v4020, %v4019
    %v4022 = vmul.f32 0.5, %v4021
    %v4023 = vsub.f32 1.5, %v4022
    %v4024 = vmul.f32 %v4019, %v4023
    %v4025 = vmul.f32 %v3991, %v4024
    %vm4026 = vcmp.eq.f32.partialorder %v3991, inf
    %v4027 = vsel %vm4026, %v3991, %v4025
    %vm4028 = vcmp.eq.f32.partialorder %v3991, 0.0
    %v4029 = vand.u32 %v3991, 2147483648
    %v4030 = vsel %vm4028, %v4029, %v4027
    %v4031 = vrsqrt.pop %v4000
    %v4032 = vmul.f32 %v4031, %v4000
    %v4033 = vmul.f32 %v4032, %v4031
    %v4034 = vmul.f32 0.5, %v4033
    %v4035 = vsub.f32 1.5, %v4034
    %v4036 = vmul.f32 %v4031, %v4035
    %v4037 = vmul.f32 %v4000, %v4036
    %vm4038 = vcmp.eq.f32.partialorder %v4000, inf
    %v4039 = vsel %vm4038, %v4000, %v4037
    %vm4040 = vcmp.eq.f32.partialorder %v4000, 0.0
    %v4041 = vand.u32 %v4000, 2147483648
    %v4042 = vsel %vm4040, %v4041, %v4039
    %v4043 = vrsqrt.pop %v4009
    %v4044 = vmul.f32 %v4043, %v4009
    %v4045 = vmul.f32 %v4044, %v4043
    %v4046 = vmul.f32 0.5, %v4045
    %v4047 = vsub.f32 1.5, %v4046
    %v4048 = vmul.f32 %v4043, %v4047
    %v4049 = vmul.f32 %v4009, %v4048
    %vm4050 = vcmp.eq.f32.partialorder %v4009, inf
    %v4051 = vsel %vm4050, %v4009, %v4049
    %vm4052 = vcmp.eq.f32.partialorder %v4009, 0.0
    %v4053 = vand.u32 %v4009, 2147483648
    %v4054 = vsel %vm4052, %v4053, %v4051
    %v4055 = vrsqrt.pop %v4018
    %v4056 = vmul.f32 %v4055, %v4018
    %v4057 = vmul.f32 %v4056, %v4055
    %v4058 = vmul.f32 0.5, %v4057
    %v4059 = vsub.f32 1.5, %v4058
    %v4060 = vmul.f32 %v4055, %v4059
    %v4061 = vmul.f32 %v4018, %v4060
    %vm4062 = vcmp.eq.f32.partialorder %v4018, inf
    %v4063 = vsel %vm4062, %v4018, %v4061
    %vm4064 = vcmp.eq.f32.partialorder %v4018, 0.0
    %v4065 = vand.u32 %v4018, 2147483648
    %v4066 = vsel %vm4064, %v4065, %v4063
    %v4067 = vadd.f32 %v4030, %v3927
    %v4068 = vadd.f32 %v4042, %v3928
    %v4069 = vadd.f32 %v4054, %v3929
    %v4070 = vadd.f32 %v4066, %v3930
    %v4071 = vsub.f32 %v4067, %v3931
    %v4072 = vsub.f32 %v4068, %v3932
    %v4073 = vsub.f32 %v4069, %v3933
    %v4074 = vsub.f32 %v4070, %v3934
    %v4075 = vmax.f32 %v4071, 0.0
    %v4076 = vmax.f32 %v4072, 0.0
    %v4077 = vmax.f32 %v4073, 0.0
    %v4078 = vmax.f32 %v4074, 0.0
    %v4079 = vmul.f32 %v1381, %v1381
    %v4080 = vmul.f32 %v1413, %v1413
    %v4081 = vmul.f32 %v1445, %v1445
    %v4082 = vmul.f32 %v1477, %v1477
    %v4083 = vmul.f32 %v1384, %v1384
    %v4084 = vmul.f32 %v1416, %v1416
    %v4085 = vmul.f32 %v1448, %v1448
    %v4086 = vmul.f32 %v1480, %v1480
    %v4087 = vmul.f32 %v1387, %v1387
    %v4088 = vmul.f32 %v1419, %v1419
    %v4089 = vmul.f32 %v1451, %v1451
    %v4090 = vmul.f32 %v1483, %v1483
    %v4091 = vmul.f32 %v1390, %v1390
    %v4092 = vmul.f32 %v1422, %v1422
    %v4093 = vmul.f32 %v1454, %v1454
    %v4094 = vmul.f32 %v1486, %v1486
    %v4095 = vadd.f32 %v4079, %v4083
    %v4096 = vadd.f32 %v4095, %v4087
    %v4097 = vadd.f32 %v4096, %v4091
    %v4098 = vrot.slane %v4097, 4
    %v4099 = vadd.f32 %v4097, %v4098
    %v4100 = vrot.slane %v4099, 2
    %v4101 = vadd.f32 %v4099, %v4100
    %v4102 = vrot.slane %v4101, 1
    %v4103 = vadd.f32 %v4101, %v4102
    %v4104 = vadd.f32 %v4080, %v4084
    %v4105 = vadd.f32 %v4104, %v4088
    %v4106 = vadd.f32 %v4105, %v4092
    %v4107 = vrot.slane %v4106, 4
    %v4108 = vadd.f32 %v4106, %v4107
    %v4109 = vrot.slane %v4108, 2
    %v4110 = vadd.f32 %v4108, %v4109
    %v4111 = vrot.slane %v4110, 1
    %v4112 = vadd.f32 %v4110, %v4111
    %v4113 = vadd.f32 %v4081, %v4085
    %v4114 = vadd.f32 %v4113, %v4089
    %v4115 = vadd.f32 %v4114, %v4093
    %v4116 = vrot.slane %v4115, 4
    %v4117 = vadd.f32 %v4115, %v4116
    %v4118 = vrot.slane %v4117, 2
    %v4119 = vadd.f32 %v4117, %v4118
    %v4120 = vrot.slane %v4119, 1
    %v4121 = vadd.f32 %v4119, %v4120
    %v4122 = vadd.f32 %v4082, %v4086
    %v4123 = vadd.f32 %v4122, %v4090
    %v4124 = vadd.f32 %v4123, %v4094
    %v4125 = vrot.slane %v4124, 4
    %v4126 = vadd.f32 %v4124, %v4125
    %v4127 = vrot.slane %v4126, 2
    %v4128 = vadd.f32 %v4126, %v4127
    %v4129 = vrot.slane %v4128, 1
    %v4130 = vadd.f32 %v4128, %v4129
    %v4131 = vrsqrt.pop %v4103
    %v4132 = vmul.f32 %v4131, %v4103
    %v4133 = vmul.f32 %v4132, %v4131
    %v4134 = vmul.f32 0.5, %v4133
    %v4135 = vsub.f32 1.5, %v4134
    %v4136 = vmul.f32 %v4131, %v4135
    %v4137 = vmul.f32 %v4103, %v4136
    %vm4138 = vcmp.eq.f32.partialorder %v4103, inf
    %v4139 = vsel %vm4138, %v4103, %v4137
    %vm4140 = vcmp.eq.f32.partialorder %v4103, 0.0
    %v4141 = vand.u32 %v4103, 2147483648
    %v4142 = vsel %vm4140, %v4141, %v4139
    %v4143 = vrsqrt.pop %v4112
    %v4144 = vmul.f32 %v4143, %v4112
    %v4145 = vmul.f32 %v4144, %v4143
    %v4146 = vmul.f32 0.5, %v4145
    %v4147 = vsub.f32 1.5, %v4146
    %v4148 = vmul.f32 %v4143, %v4147
    %v4149 = vmul.f32 %v4112, %v4148
    %vm4150 = vcmp.eq.f32.partialorder %v4112, inf
    %v4151 = vsel %vm4150, %v4112, %v4149
    %vm4152 = vcmp.eq.f32.partialorder %v4112, 0.0
    %v4153 = vand.u32 %v4112, 2147483648
    %v4154 = vsel %vm4152, %v4153, %v4151
    %v4155 = vrsqrt.pop %v4121
    %v4156 = vmul.f32 %v4155, %v4121
    %v4157 = vmul.f32 %v4156, %v4155
    %v4158 = vmul.f32 0.5, %v4157
    %v4159 = vsub.f32 1.5, %v4158
    %v4160 = vmul.f32 %v4155, %v4159
    %v4161 = vmul.f32 %v4121, %v4160
    %vm4162 = vcmp.eq.f32.partialorder %v4121, inf
    %v4163 = vsel %vm4162, %v4121, %v4161
    %vm4164 = vcmp.eq.f32.partialorder %v4121, 0.0
    %v4165 = vand.u32 %v4121, 2147483648
    %v4166 = vsel %vm4164, %v4165, %v4163
    %v4167 = vrsqrt.pop %v4130
    %v4168 = vmul.f32 %v4167, %v4130
    %v4169 = vmul.f32 %v4168, %v4167
    %v4170 = vmul.f32 0.5, %v4169
    %v4171 = vsub.f32 1.5, %v4170
    %v4172 = vmul.f32 %v4167, %v4171
    %v4173 = vmul.f32 %v4130, %v4172
    %vm4174 = vcmp.eq.f32.partialorder %v4130, inf
    %v4175 = vsel %vm4174, %v4130, %v4173
    %vm4176 = vcmp.eq.f32.partialorder %v4130, 0.0
    %v4177 = vand.u32 %v4130, 2147483648
    %v4178 = vsel %vm4176, %v4177, %v4175
    %v4179 = vsub.f32 %v4142, 1.0
    %v4180 = vsub.f32 %v4154, 1.0
    %v4181 = vsub.f32 %v4166, 1.0
    %v4182 = vsub.f32 %v4178, 1.0
    %v4183 = vand.u32 2147483647, %v4179
    %v4184 = vand.u32 2147483647, %v4180
    %v4185 = vand.u32 2147483647, %v4181
    %v4186 = vand.u32 2147483647, %v4182
    %v4187 = vadd.f32 %v4075, %v4183
    %v4188 = vadd.f32 %v4076, %v4184
    %v4189 = vadd.f32 %v4077, %v4185
    %v4190 = vadd.f32 %v4078, %v4186
    %v4191 = vmul.f32 %v1509, %v1509
    %v4192 = vmul.f32 %v1541, %v1541
    %v4193 = vmul.f32 %v1573, %v1573
    %v4194 = vmul.f32 %v1605, %v1605
    %v4195 = vmul.f32 %v1512, %v1512
    %v4196 = vmul.f32 %v1544, %v1544
    %v4197 = vmul.f32 %v1576, %v1576
    %v4198 = vmul.f32 %v1608, %v1608
    %v4199 = vmul.f32 %v1515, %v1515
    %v4200 = vmul.f32 %v1547, %v1547
    %v4201 = vmul.f32 %v1579, %v1579
    %v4202 = vmul.f32 %v1611, %v1611
    %v4203 = vmul.f32 %v1518, %v1518
    %v4204 = vmul.f32 %v1550, %v1550
    %v4205 = vmul.f32 %v1582, %v1582
    %v4206 = vmul.f32 %v1614, %v1614
    %v4207 = vadd.f32 %v4191, %v4195
    %v4208 = vadd.f32 %v4207, %v4199
    %v4209 = vadd.f32 %v4208, %v4203
    %v4210 = vrot.slane %v4209, 4
    %v4211 = vadd.f32 %v4209, %v4210
    %v4212 = vrot.slane %v4211, 2
    %v4213 = vadd.f32 %v4211, %v4212
    %v4214 = vrot.slane %v4213, 1
    %v4215 = vadd.f32 %v4213, %v4214
    %v4216 = vadd.f32 %v4192, %v4196
    %v4217 = vadd.f32 %v4216, %v4200
    %v4218 = vadd.f32 %v4217, %v4204
    %v4219 = vrot.slane %v4218, 4
    %v4220 = vadd.f32 %v4218, %v4219
    %v4221 = vrot.slane %v4220, 2
    %v4222 = vadd.f32 %v4220, %v4221
    %v4223 = vrot.slane %v4222, 1
    %v4224 = vadd.f32 %v4222, %v4223
    %v4225 = vadd.f32 %v4193, %v4197
    %v4226 = vadd.f32 %v4225, %v4201
    %v4227 = vadd.f32 %v4226, %v4205
    %v4228 = vrot.slane %v4227, 4
    %v4229 = vadd.f32 %v4227, %v4228
    %v4230 = vrot.slane %v4229, 2
    %v4231 = vadd.f32 %v4229, %v4230
    %v4232 = vrot.slane %v4231, 1
    %v4233 = vadd.f32 %v4231, %v4232
    %v4234 = vadd.f32 %v4194, %v4198
    %v4235 = vadd.f32 %v4234, %v4202
    %v4236 = vadd.f32 %v4235, %v4206
    %v4237 = vrot.slane %v4236, 4
    %v4238 = vadd.f32 %v4236, %v4237
    %v4239 = vrot.slane %v4238, 2
    %v4240 = vadd.f32 %v4238, %v4239
    %v4241 = vrot.slane %v4240, 1
    %v4242 = vadd.f32 %v4240, %v4241
    %v4243 = vrsqrt.pop %v4215
    %v4244 = vmul.f32 %v4243, %v4215
    %v4245 = vmul.f32 %v4244, %v4243
    %v4246 = vmul.f32 0.5, %v4245
    %v4247 = vsub.f32 1.5, %v4246
    %v4248 = vmul.f32 %v4243, %v4247
    %v4249 = vmul.f32 %v4215, %v4248
    %vm4250 = vcmp.eq.f32.partialorder %v4215, inf
    %v4251 = vsel %vm4250, %v4215, %v4249
    %vm4252 = vcmp.eq.f32.partialorder %v4215, 0.0
    %v4253 = vand.u32 %v4215, 2147483648
    %v4254 = vsel %vm4252, %v4253, %v4251
    %v4255 = vrsqrt.pop %v4224
    %v4256 = vmul.f32 %v4255, %v4224
    %v4257 = vmul.f32 %v4256, %v4255
    %v4258 = vmul.f32 0.5, %v4257
    %v4259 = vsub.f32 1.5, %v4258
    %v4260 = vmul.f32 %v4255, %v4259
    %v4261 = vmul.f32 %v4224, %v4260
    %vm4262 = vcmp.eq.f32.partialorder %v4224, inf
    %v4263 = vsel %vm4262, %v4224, %v4261
    %vm4264 = vcmp.eq.f32.partialorder %v4224, 0.0
    %v4265 = vand.u32 %v4224, 2147483648
    %v4266 = vsel %vm4264, %v4265, %v4263
    %v4267 = vrsqrt.pop %v4233
    %v4268 = vmul.f32 %v4267, %v4233
    %v4269 = vmul.f32 %v4268, %v4267
    %v4270 = vmul.f32 0.5, %v4269
    %v4271 = vsub.f32 1.5, %v4270
    %v4272 = vmul.f32 %v4267, %v4271
    %v4273 = vmul.f32 %v4233, %v4272
    %vm4274 = vcmp.eq.f32.partialorder %v4233, inf
    %v4275 = vsel %vm4274, %v4233, %v4273
    %vm4276 = vcmp.eq.f32.partialorder %v4233, 0.0
    %v4277 = vand.u32 %v4233, 2147483648
    %v4278 = vsel %vm4276, %v4277, %v4275
    %v4279 = vrsqrt.pop %v4242
    %v4280 = vmul.f32 %v4279, %v4242
    %v4281 = vmul.f32 %v4280, %v4279
    %v4282 = vmul.f32 0.5, %v4281
    %v4283 = vsub.f32 1.5, %v4282
    %v4284 = vmul.f32 %v4279, %v4283
    %v4285 = vmul.f32 %v4242, %v4284
    %vm4286 = vcmp.eq.f32.partialorder %v4242, inf
    %v4287 = vsel %vm4286, %v4242, %v4285
    %vm4288 = vcmp.eq.f32.partialorder %v4242, 0.0
    %v4289 = vand.u32 %v4242, 2147483648
    %v4290 = vsel %vm4288, %v4289, %v4287
    %v4291 = vsub.f32 %v4254, 1.0
    %v4292 = vsub.f32 %v4266, 1.0
    %v4293 = vsub.f32 %v4278, 1.0
    %v4294 = vsub.f32 %v4290, 1.0
    %v4295 = vand.u32 2147483647, %v4291
    %v4296 = vand.u32 2147483647, %v4292
    %v4297 = vand.u32 2147483647, %v4293
    %v4298 = vand.u32 2147483647, %v4294
    %v4299 = vadd.f32 %v4187, %v4295
    %v4300 = vadd.f32 %v4188, %v4296
    %v4301 = vadd.f32 %v4189, %v4297
    %v4302 = vadd.f32 %v4190, %v4298
    %v4303 = vand.u32 2147483647, %v1649
    %v4304 = vand.u32 2147483647, %v1681
    %v4305 = vand.u32 2147483647, %v1713
    %v4306 = vand.u32 2147483647, %v1745
    %v4307 = vand.u32 2147483647, %v1777
    %v4308 = vand.u32 2147483647, %v1809
    %v4309 = vand.u32 2147483647, %v1841
    %v4310 = vand.u32 2147483647, %v1873
    %v4311 = vsub.f32 %v1637, %v2625
    %v4312 = vsub.f32 %v1669, %v2654
    %v4313 = vsub.f32 %v1701, %v2683
    %v4314 = vsub.f32 %v1733, %v2712
    %v4315 = vsub.f32 %v1640, %v2628
    %v4316 = vsub.f32 %v1672, %v2657
    %v4317 = vsub.f32 %v1704, %v2686
    %v4318 = vsub.f32 %v1736, %v2715
    %v4319 = vsub.f32 %v1643, %v2631
    %v4320 = vsub.f32 %v1675, %v2660
    %v4321 = vsub.f32 %v1707, %v2689
    %v4322 = vsub.f32 %v1739, %v2718
    %v4323 = vsub.f32 %v1646, %v2634
    %v4324 = vsub.f32 %v1678, %v2663
    %v4325 = vsub.f32 %v1710, %v2692
    %v4326 = vsub.f32 %v1742, %v2721
    %v4327 = vsub.f32 %v4311, %v1765
    %v4328 = vsub.f32 %v4312, %v1797
    %v4329 = vsub.f32 %v4313, %v1829
    %v4330 = vsub.f32 %v4314, %v1861
    %v4331 = vsub.f32 %v4315, %v1768
    %v4332 = vsub.f32 %v4316, %v1800
    %v4333 = vsub.f32 %v4317, %v1832
    %v4334 = vsub.f32 %v4318, %v1864
    %v4335 = vsub.f32 %v4319, %v1771
    %v4336 = vsub.f32 %v4320, %v1803
    %v4337 = vsub.f32 %v4321, %v1835
    %v4338 = vsub.f32 %v4322, %v1867
    %v4339 = vsub.f32 %v4323, %v1774
    %v4340 = vsub.f32 %v4324, %v1806
    %v4341 = vsub.f32 %v4325, %v1838
    %v4342 = vsub.f32 %v4326, %v1870
    %v4343 = vmul.f32 %v4327, %v4327
    %v4344 = vmul.f32 %v4328, %v4328
    %v4345 = vmul.f32 %v4329, %v4329
    %v4346 = vmul.f32 %v4330, %v4330
    %v4347 = vmul.f32 %v4331, %v4331
    %v4348 = vmul.f32 %v4332, %v4332
    %v4349 = vmul.f32 %v4333, %v4333
    %v4350 = vmul.f32 %v4334, %v4334
    %v4351 = vmul.f32 %v4335, %v4335
    %v4352 = vmul.f32 %v4336, %v4336
    %v4353 = vmul.f32 %v4337, %v4337
    %v4354 = vmul.f32 %v4338, %v4338
    %v4355 = vmul.f32 %v4339, %v4339
    %v4356 = vmul.f32 %v4340, %v4340
    %v4357 = vmul.f32 %v4341, %v4341
    %v4358 = vmul.f32 %v4342, %v4342
    %v4359 = vadd.f32 %v4343, %v4347
    %v4360 = vadd.f32 %v4359, %v4351
    %v4361 = vadd.f32 %v4360, %v4355
    %v4362 = vrot.slane %v4361, 4
    %v4363 = vadd.f32 %v4361, %v4362
    %v4364 = vrot.slane %v4363, 2
    %v4365 = vadd.f32 %v4363, %v4364
    %v4366 = vrot.slane %v4365, 1
    %v4367 = vadd.f32 %v4365, %v4366
    %v4368 = vadd.f32 %v4344, %v4348
    %v4369 = vadd.f32 %v4368, %v4352
    %v4370 = vadd.f32 %v4369, %v4356
    %v4371 = vrot.slane %v4370, 4
    %v4372 = vadd.f32 %v4370, %v4371
    %v4373 = vrot.slane %v4372, 2
    %v4374 = vadd.f32 %v4372, %v4373
    %v4375 = vrot.slane %v4374, 1
    %v4376 = vadd.f32 %v4374, %v4375
    %v4377 = vadd.f32 %v4345, %v4349
    %v4378 = vadd.f32 %v4377, %v4353
    %v4379 = vadd.f32 %v4378, %v4357
    %v4380 = vrot.slane %v4379, 4
    %v4381 = vadd.f32 %v4379, %v4380
    %v4382 = vrot.slane %v4381, 2
    %v4383 = vadd.f32 %v4381, %v4382
    %v4384 = vrot.slane %v4383, 1
    %v4385 = vadd.f32 %v4383, %v4384
    %v4386 = vadd.f32 %v4346, %v4350
    %v4387 = vadd.f32 %v4386, %v4354
    %v4388 = vadd.f32 %v4387, %v4358
    %v4389 = vrot.slane %v4388, 4
    %v4390 = vadd.f32 %v4388, %v4389
    %v4391 = vrot.slane %v4390, 2
    %v4392 = vadd.f32 %v4390, %v4391
    %v4393 = vrot.slane %v4392, 1
    %v4394 = vadd.f32 %v4392, %v4393
    %v4395 = vrsqrt.pop %v4367
    %v4396 = vmul.f32 %v4395, %v4367
    %v4397 = vmul.f32 %v4396, %v4395
    %v4398 = vmul.f32 0.5, %v4397
    %v4399 = vsub.f32 1.5, %v4398
    %v4400 = vmul.f32 %v4395, %v4399
    %v4401 = vmul.f32 %v4367, %v4400
    %vm4402 = vcmp.eq.f32.partialorder %v4367, inf
    %v4403 = vsel %vm4402, %v4367, %v4401
    %vm4404 = vcmp.eq.f32.partialorder %v4367, 0.0
    %v4405 = vand.u32 %v4367, 2147483648
    %v4406 = vsel %vm4404, %v4405, %v4403
    %v4407 = vrsqrt.pop %v4376
    %v4408 = vmul.f32 %v4407, %v4376
    %v4409 = vmul.f32 %v4408, %v4407
    %v4410 = vmul.f32 0.5, %v4409
    %v4411 = vsub.f32 1.5, %v4410
    %v4412 = vmul.f32 %v4407, %v4411
    %v4413 = vmul.f32 %v4376, %v4412
    %vm4414 = vcmp.eq.f32.partialorder %v4376, inf
    %v4415 = vsel %vm4414, %v4376, %v4413
    %vm4416 = vcmp.eq.f32.partialorder %v4376, 0.0
    %v4417 = vand.u32 %v4376, 2147483648
    %v4418 = vsel %vm4416, %v4417, %v4415
    %v4419 = vrsqrt.pop %v4385
    %v4420 = vmul.f32 %v4419, %v4385
    %v4421 = vmul.f32 %v4420, %v4419
    %v4422 = vmul.f32 0.5, %v4421
    %v4423 = vsub.f32 1.5, %v4422
    %v4424 = vmul.f32 %v4419, %v4423
    %v4425 = vmul.f32 %v4385, %v4424
    %vm4426 = vcmp.eq.f32.partialorder %v4385, inf
    %v4427 = vsel %vm4426, %v4385, %v4425
    %vm4428 = vcmp.eq.f32.partialorder %v4385, 0.0
    %v4429 = vand.u32 %v4385, 2147483648
    %v4430 = vsel %vm4428, %v4429, %v4427
    %v4431 = vrsqrt.pop %v4394
    %v4432 = vmul.f32 %v4431, %v4394
    %v4433 = vmul.f32 %v4432, %v4431
    %v4434 = vmul.f32 0.5, %v4433
    %v4435 = vsub.f32 1.5, %v4434
    %v4436 = vmul.f32 %v4431, %v4435
    %v4437 = vmul.f32 %v4394, %v4436
    %vm4438 = vcmp.eq.f32.partialorder %v4394, inf
    %v4439 = vsel %vm4438, %v4394, %v4437
    %vm4440 = vcmp.eq.f32.partialorder %v4394, 0.0
    %v4441 = vand.u32 %v4394, 2147483648
    %v4442 = vsel %vm4440, %v4441, %v4439
    %v4443 = vsub.f32 %v4307, %v4303
    %v4444 = vsub.f32 %v4308, %v4304
    %v4445 = vsub.f32 %v4309, %v4305
    %v4446 = vsub.f32 %v4310, %v4306
    %v4447 = vsub.f32 %v4406, %v4443
    %v4448 = vsub.f32 %v4418, %v4444
    %v4449 = vsub.f32 %v4430, %v4445
    %v4450 = vsub.f32 %v4442, %v4446
    %v4451 = vmax.f32 %v4447, 0.0
    %v4452 = vmax.f32 %v4448, 0.0
    %v4453 = vmax.f32 %v4449, 0.0
    %v4454 = vmax.f32 %v4450, 0.0
    %v4455 = vmul.f32 %v1637, %v1637
    %v4456 = vmul.f32 %v1669, %v1669
    %v4457 = vmul.f32 %v1701, %v1701
    %v4458 = vmul.f32 %v1733, %v1733
    %v4459 = vmul.f32 %v1640, %v1640
    %v4460 = vmul.f32 %v1672, %v1672
    %v4461 = vmul.f32 %v1704, %v1704
    %v4462 = vmul.f32 %v1736, %v1736
    %v4463 = vmul.f32 %v1643, %v1643
    %v4464 = vmul.f32 %v1675, %v1675
    %v4465 = vmul.f32 %v1707, %v1707
    %v4466 = vmul.f32 %v1739, %v1739
    %v4467 = vmul.f32 %v1646, %v1646
    %v4468 = vmul.f32 %v1678, %v1678
    %v4469 = vmul.f32 %v1710, %v1710
    %v4470 = vmul.f32 %v1742, %v1742
    %v4471 = vadd.f32 %v4455, %v4459
    %v4472 = vadd.f32 %v4471, %v4463
    %v4473 = vadd.f32 %v4472, %v4467
    %v4474 = vrot.slane %v4473, 4
    %v4475 = vadd.f32 %v4473, %v4474
    %v4476 = vrot.slane %v4475, 2
    %v4477 = vadd.f32 %v4475, %v4476
    %v4478 = vrot.slane %v4477, 1
    %v4479 = vadd.f32 %v4477, %v4478
    %v4480 = vadd.f32 %v4456, %v4460
    %v4481 = vadd.f32 %v4480, %v4464
    %v4482 = vadd.f32 %v4481, %v4468
    %v4483 = vrot.slane %v4482, 4
    %v4484 = vadd.f32 %v4482, %v4483
    %v4485 = vrot.slane %v4484, 2
    %v4486 = vadd.f32 %v4484, %v4485
    %v4487 = vrot.slane %v4486, 1
    %v4488 = vadd.f32 %v4486, %v4487
    %v4489 = vadd.f32 %v4457, %v4461
    %v4490 = vadd.f32 %v4489, %v4465
    %v4491 = vadd.f32 %v4490, %v4469
    %v4492 = vrot.slane %v4491, 4
    %v4493 = vadd.f32 %v4491, %v4492
    %v4494 = vrot.slane %v4493, 2
    %v4495 = vadd.f32 %v4493, %v4494
    %v4496 = vrot.slane %v4495, 1
    %v4497 = vadd.f32 %v4495, %v4496
    %v4498 = vadd.f32 %v4458, %v4462
    %v4499 = vadd.f32 %v4498, %v4466
    %v4500 = vadd.f32 %v4499, %v4470
    %v4501 = vrot.slane %v4500, 4
    %v4502 = vadd.f32 %v4500, %v4501
    %v4503 = vrot.slane %v4502, 2
    %v4504 = vadd.f32 %v4502, %v4503
    %v4505 = vrot.slane %v4504, 1
    %v4506 = vadd.f32 %v4504, %v4505
    %v4507 = vrsqrt.pop %v4479
    %v4508 = vmul.f32 %v4507, %v4479
    %v4509 = vmul.f32 %v4508, %v4507
    %v4510 = vmul.f32 0.5, %v4509
    %v4511 = vsub.f32 1.5, %v4510
    %v4512 = vmul.f32 %v4507, %v4511
    %v4513 = vmul.f32 %v4479, %v4512
    %vm4514 = vcmp.eq.f32.partialorder %v4479, inf
    %v4515 = vsel %vm4514, %v4479, %v4513
    %vm4516 = vcmp.eq.f32.partialorder %v4479, 0.0
    %v4517 = vand.u32 %v4479, 2147483648
    %v4518 = vsel %vm4516, %v4517, %v4515
    %v4519 = vrsqrt.pop %v4488
    %v4520 = vmul.f32 %v4519, %v4488
    %v4521 = vmul.f32 %v4520, %v4519
    %v4522 = vmul.f32 0.5, %v4521
    %v4523 = vsub.f32 1.5, %v4522
    %v4524 = vmul.f32 %v4519, %v4523
    %v4525 = vmul.f32 %v4488, %v4524
    %vm4526 = vcmp.eq.f32.partialorder %v4488, inf
    %v4527 = vsel %vm4526, %v4488, %v4525
    %vm4528 = vcmp.eq.f32.partialorder %v4488, 0.0
    %v4529 = vand.u32 %v4488, 2147483648
    %v4530 = vsel %vm4528, %v4529, %v4527
    %v4531 = vrsqrt.pop %v4497
    %v4532 = vmul.f32 %v4531, %v4497
    %v4533 = vmul.f32 %v4532, %v4531
    %v4534 = vmul.f32 0.5, %v4533
    %v4535 = vsub.f32 1.5, %v4534
    %v4536 = vmul.f32 %v4531, %v4535
    %v4537 = vmul.f32 %v4497, %v4536
    %vm4538 = vcmp.eq.f32.partialorder %v4497, inf
    %v4539 = vsel %vm4538, %v4497, %v4537
    %vm4540 = vcmp.eq.f32.partialorder %v4497, 0.0
    %v4541 = vand.u32 %v4497, 2147483648
    %v4542 = vsel %vm4540, %v4541, %v4539
    %v4543 = vrsqrt.pop %v4506
    %v4544 = vmul.f32 %v4543, %v4506
    %v4545 = vmul.f32 %v4544, %v4543
    %v4546 = vmul.f32 0.5, %v4545
    %v4547 = vsub.f32 1.5, %v4546
    %v4548 = vmul.f32 %v4543, %v4547
    %v4549 = vmul.f32 %v4506, %v4548
    %vm4550 = vcmp.eq.f32.partialorder %v4506, inf
    %v4551 = vsel %vm4550, %v4506, %v4549
    %vm4552 = vcmp.eq.f32.partialorder %v4506, 0.0
    %v4553 = vand.u32 %v4506, 2147483648
    %v4554 = vsel %vm4552, %v4553, %v4551
    %v4555 = vsub.f32 %v4518, 1.0
    %v4556 = vsub.f32 %v4530, 1.0
    %v4557 = vsub.f32 %v4542, 1.0
    %v4558 = vsub.f32 %v4554, 1.0
    %v4559 = vand.u32 2147483647, %v4555
    %v4560 = vand.u32 2147483647, %v4556
    %v4561 = vand.u32 2147483647, %v4557
    %v4562 = vand.u32 2147483647, %v4558
    %v4563 = vadd.f32 %v4451, %v4559
    %v4564 = vadd.f32 %v4452, %v4560
    %v4565 = vadd.f32 %v4453, %v4561
    %v4566 = vadd.f32 %v4454, %v4562
    %v4567 = vmul.f32 %v1765, %v1765
    %v4568 = vmul.f32 %v1797, %v1797
    %v4569 = vmul.f32 %v1829, %v1829
    %v4570 = vmul.f32 %v1861, %v1861
    %v4571 = vmul.f32 %v1768, %v1768
    %v4572 = vmul.f32 %v1800, %v1800
    %v4573 = vmul.f32 %v1832, %v1832
    %v4574 = vmul.f32 %v1864, %v1864
    %v4575 = vmul.f32 %v1771, %v1771
    %v4576 = vmul.f32 %v1803, %v1803
    %v4577 = vmul.f32 %v1835, %v1835
    %v4578 = vmul.f32 %v1867, %v1867
    %v4579 = vmul.f32 %v1774, %v1774
    %v4580 = vmul.f32 %v1806, %v1806
    %v4581 = vmul.f32 %v1838, %v1838
    %v4582 = vmul.f32 %v1870, %v1870
    %v4583 = vadd.f32 %v4567, %v4571
    %v4584 = vadd.f32 %v4583, %v4575
    %v4585 = vadd.f32 %v4584, %v4579
    %v4586 = vrot.slane %v4585, 4
    %v4587 = vadd.f32 %v4585, %v4586
    %v4588 = vrot.slane %v4587, 2
    %v4589 = vadd.f32 %v4587, %v4588
    %v4590 = vrot.slane %v4589, 1
    %v4591 = vadd.f32 %v4589, %v4590
    %v4592 = vadd.f32 %v4568, %v4572
    %v4593 = vadd.f32 %v4592, %v4576
    %v4594 = vadd.f32 %v4593, %v4580
    %v4595 = vrot.slane %v4594, 4
    %v4596 = vadd.f32 %v4594, %v4595
    %v4597 = vrot.slane %v4596, 2
    %v4598 = vadd.f32 %v4596, %v4597
    %v4599 = vrot.slane %v4598, 1
    %v4600 = vadd.f32 %v4598, %v4599
    %v4601 = vadd.f32 %v4569, %v4573
    %v4602 = vadd.f32 %v4601, %v4577
    %v4603 = vadd.f32 %v4602, %v4581
    %v4604 = vrot.slane %v4603, 4
    %v4605 = vadd.f32 %v4603, %v4604
    %v4606 = vrot.slane %v4605, 2
    %v4607 = vadd.f32 %v4605, %v4606
    %v4608 = vrot.slane %v4607, 1
    %v4609 = vadd.f32 %v4607, %v4608
    %v4610 = vadd.f32 %v4570, %v4574
    %v4611 = vadd.f32 %v4610, %v4578
    %v4612 = vadd.f32 %v4611, %v4582
    %v4613 = vrot.slane %v4612, 4
    %v4614 = vadd.f32 %v4612, %v4613
    %v4615 = vrot.slane %v4614, 2
    %v4616 = vadd.f32 %v4614, %v4615
    %v4617 = vrot.slane %v4616, 1
    %v4618 = vadd.f32 %v4616, %v4617
    %v4619 = vrsqrt.pop %v4591
    %v4620 = vmul.f32 %v4619, %v4591
    %v4621 = vmul.f32 %v4620, %v4619
    %v4622 = vmul.f32 0.5, %v4621
    %v4623 = vsub.f32 1.5, %v4622
    %v4624 = vmul.f32 %v4619, %v4623
    %v4625 = vmul.f32 %v4591, %v4624
    %vm4626 = vcmp.eq.f32.partialorder %v4591, inf
    %v4627 = vsel %vm4626, %v4591, %v4625
    %vm4628 = vcmp.eq.f32.partialorder %v4591, 0.0
    %v4629 = vand.u32 %v4591, 2147483648
    %v4630 = vsel %vm4628, %v4629, %v4627
    %v4631 = vrsqrt.pop %v4600
    %v4632 = vmul.f32 %v4631, %v4600
    %v4633 = vmul.f32 %v4632, %v4631
    %v4634 = vmul.f32 0.5, %v4633
    %v4635 = vsub.f32 1.5, %v4634
    %v4636 = vmul.f32 %v4631, %v4635
    %v4637 = vmul.f32 %v4600, %v4636
    %vm4638 = vcmp.eq.f32.partialorder %v4600, inf
    %v4639 = vsel %vm4638, %v4600, %v4637
    %vm4640 = vcmp.eq.f32.partialorder %v4600, 0.0
    %v4641 = vand.u32 %v4600, 2147483648
    %v4642 = vsel %vm4640, %v4641, %v4639
    %v4643 = vrsqrt.pop %v4609
    %v4644 = vmul.f32 %v4643, %v4609
    %v4645 = vmul.f32 %v4644, %v4643
    %v4646 = vmul.f32 0.5, %v4645
    %v4647 = vsub.f32 1.5, %v4646
    %v4648 = vmul.f32 %v4643, %v4647
    %v4649 = vmul.f32 %v4609, %v4648
    %vm4650 = vcmp.eq.f32.partialorder %v4609, inf
    %v4651 = vsel %vm4650, %v4609, %v4649
    %vm4652 = vcmp.eq.f32.partialorder %v4609, 0.0
    %v4653 = vand.u32 %v4609, 2147483648
    %v4654 = vsel %vm4652, %v4653, %v4651
    %v4655 = vrsqrt.pop %v4618
    %v4656 = vmul.f32 %v4655, %v4618
    %v4657 = vmul.f32 %v4656, %v4655
    %v4658 = vmul.f32 0.5, %v4657
    %v4659 = vsub.f32 1.5, %v4658
    %v4660 = vmul.f32 %v4655, %v4659
    %v4661 = vmul.f32 %v4618, %v4660
    %vm4662 = vcmp.eq.f32.partialorder %v4618, inf
    %v4663 = vsel %vm4662, %v4618, %v4661
    %vm4664 = vcmp.eq.f32.partialorder %v4618, 0.0
    %v4665 = vand.u32 %v4618, 2147483648
    %v4666 = vsel %vm4664, %v4665, %v4663
    %v4667 = vsub.f32 %v4630, 1.0
    %v4668 = vsub.f32 %v4642, 1.0
    %v4669 = vsub.f32 %v4654, 1.0
    %v4670 = vsub.f32 %v4666, 1.0
    %v4671 = vand.u32 2147483647, %v4667
    %v4672 = vand.u32 2147483647, %v4668
    %v4673 = vand.u32 2147483647, %v4669
    %v4674 = vand.u32 2147483647, %v4670
    %v4675 = vadd.f32 %v4563, %v4671
    %v4676 = vadd.f32 %v4564, %v4672
    %v4677 = vadd.f32 %v4565, %v4673
    %v4678 = vadd.f32 %v4566, %v4674
    %v4679 = vand.u32 2147483647, %v1905
    %v4680 = vand.u32 2147483647, %v1937
    %v4681 = vand.u32 2147483647, %v1969
    %v4682 = vand.u32 2147483647, %v2001
    %v4683 = vand.u32 2147483647, %v2033
    %v4684 = vand.u32 2147483647, %v2065
    %v4685 = vand.u32 2147483647, %v2097
    %v4686 = vand.u32 2147483647, %v2129
    %v4687 = vadd.f32 %v4679, %v4683
    %v4688 = vadd.f32 %v4680, %v4684
    %v4689 = vadd.f32 %v4681, %v4685
    %v4690 = vadd.f32 %v4682, %v4686
    %v4691 = vsub.f32 %v2021, %v1893
    %v4692 = vsub.f32 %v2053, %v1925
    %v4693 = vsub.f32 %v2085, %v1957
    %v4694 = vsub.f32 %v2117, %v1989
    %v4695 = vsub.f32 %v2024, %v1896
    %v4696 = vsub.f32 %v2056, %v1928
    %v4697 = vsub.f32 %v2088, %v1960
    %v4698 = vsub.f32 %v2120, %v1992
    %v4699 = vsub.f32 %v2027, %v1899
    %v4700 = vsub.f32 %v2059, %v1931
    %v4701 = vsub.f32 %v2091, %v1963
    %v4702 = vsub.f32 %v2123, %v1995
    %v4703 = vsub.f32 %v2030, %v1902
    %v4704 = vsub.f32 %v2062, %v1934
    %v4705 = vsub.f32 %v2094, %v1966
    %v4706 = vsub.f32 %v2126, %v1998
    %v4707 = vmul.f32 %v4691, %v4691
    %v4708 = vmul.f32 %v4692, %v4692
    %v4709 = vmul.f32 %v4693, %v4693
    %v4710 = vmul.f32 %v4694, %v4694
    %v4711 = vmul.f32 %v4695, %v4695
    %v4712 = vmul.f32 %v4696, %v4696
    %v4713 = vmul.f32 %v4697, %v4697
    %v4714 = vmul.f32 %v4698, %v4698
    %v4715 = vmul.f32 %v4699, %v4699
    %v4716 = vmul.f32 %v4700, %v4700
    %v4717 = vmul.f32 %v4701, %v4701
    %v4718 = vmul.f32 %v4702, %v4702
    %v4719 = vmul.f32 %v4703, %v4703
    %v4720 = vmul.f32 %v4704, %v4704
    %v4721 = vmul.f32 %v4705, %v4705
    %v4722 = vmul.f32 %v4706, %v4706
    %v4723 = vadd.f32 %v4707, %v4711
    %v4724 = vadd.f32 %v4723, %v4715
    %v4725 = vadd.f32 %v4724, %v4719
    %v4726 = vrot.slane %v4725, 4
    %v4727 = vadd.f32 %v4725, %v4726
    %v4728 = vrot.slane %v4727, 2
    %v4729 = vadd.f32 %v4727, %v4728
    %v4730 = vrot.slane %v4729, 1
    %v4731 = vadd.f32 %v4729, %v4730
    %v4732 = vadd.f32 %v4708, %v4712
    %v4733 = vadd.f32 %v4732, %v4716
    %v4734 = vadd.f32 %v4733, %v4720
    %v4735 = vrot.slane %v4734, 4
    %v4736 = vadd.f32 %v4734, %v4735
    %v4737 = vrot.slane %v4736, 2
    %v4738 = vadd.f32 %v4736, %v4737
    %v4739 = vrot.slane %v4738, 1
    %v4740 = vadd.f32 %v4738, %v4739
    %v4741 = vadd.f32 %v4709, %v4713
    %v4742 = vadd.f32 %v4741, %v4717
    %v4743 = vadd.f32 %v4742, %v4721
    %v4744 = vrot.slane %v4743, 4
    %v4745 = vadd.f32 %v4743, %v4744
    %v4746 = vrot.slane %v4745, 2
    %v4747 = vadd.f32 %v4745, %v4746
    %v4748 = vrot.slane %v4747, 1
    %v4749 = vadd.f32 %v4747, %v4748
    %v4750 = vadd.f32 %v4710, %v4714
    %v4751 = vadd.f32 %v4750, %v4718
    %v4752 = vadd.f32 %v4751, %v4722
    %v4753 = vrot.slane %v4752, 4
    %v4754 = vadd.f32 %v4752, %v4753
    %v4755 = vrot.slane %v4754, 2
    %v4756 = vadd.f32 %v4754, %v4755
    %v4757 = vrot.slane %v4756, 1
    %v4758 = vadd.f32 %v4756, %v4757
    %v4759 = vrsqrt.pop %v4731
    %v4760 = vmul.f32 %v4759, %v4731
    %v4761 = vmul.f32 %v4760, %v4759
    %v4762 = vmul.f32 0.5, %v4761
    %v4763 = vsub.f32 1.5, %v4762
    %v4764 = vmul.f32 %v4759, %v4763
    %v4765 = vmul.f32 %v4731, %v4764
    %vm4766 = vcmp.eq.f32.partialorder %v4731, inf
    %v4767 = vsel %vm4766, %v4731, %v4765
    %vm4768 = vcmp.eq.f32.partialorder %v4731, 0.0
    %v4769 = vand.u32 %v4731, 2147483648
    %v4770 = vsel %vm4768, %v4769, %v4767
    %v4771 = vrsqrt.pop %v4740
    %v4772 = vmul.f32 %v4771, %v4740
    %v4773 = vmul.f32 %v4772, %v4771
    %v4774 = vmul.f32 0.5, %v4773
    %v4775 = vsub.f32 1.5, %v4774
    %v4776 = vmul.f32 %v4771, %v4775
    %v4777 = vmul.f32 %v4740, %v4776
    %vm4778 = vcmp.eq.f32.partialorder %v4740, inf
    %v4779 = vsel %vm4778, %v4740, %v4777
    %vm4780 = vcmp.eq.f32.partialorder %v4740, 0.0
    %v4781 = vand.u32 %v4740, 2147483648
    %v4782 = vsel %vm4780, %v4781, %v4779
    %v4783 = vrsqrt.pop %v4749
    %v4784 = vmul.f32 %v4783, %v4749
    %v4785 = vmul.f32 %v4784, %v4783
    %v4786 = vmul.f32 0.5, %v4785
    %v4787 = vsub.f32 1.5, %v4786
    %v4788 = vmul.f32 %v4783, %v4787
    %v4789 = vmul.f32 %v4749, %v4788
    %vm4790 = vcmp.eq.f32.partialorder %v4749, inf
    %v4791 = vsel %vm4790, %v4749, %v4789
    %vm4792 = vcmp.eq.f32.partialorder %v4749, 0.0
    %v4793 = vand.u32 %v4749, 2147483648
    %v4794 = vsel %vm4792, %v4793, %v4791
    %v4795 = vrsqrt.pop %v4758
    %v4796 = vmul.f32 %v4795, %v4758
    %v4797 = vmul.f32 %v4796, %v4795
    %v4798 = vmul.f32 0.5, %v4797
    %v4799 = vsub.f32 1.5, %v4798
    %v4800 = vmul.f32 %v4795, %v4799
    %v4801 = vmul.f32 %v4758, %v4800
    %vm4802 = vcmp.eq.f32.partialorder %v4758, inf
    %v4803 = vsel %vm4802, %v4758, %v4801
    %vm4804 = vcmp.eq.f32.partialorder %v4758, 0.0
    %v4805 = vand.u32 %v4758, 2147483648
    %v4806 = vsel %vm4804, %v4805, %v4803
    %v4807 = vsub.f32 %v4687, %v4770
    %v4808 = vsub.f32 %v4688, %v4782
    %v4809 = vsub.f32 %v4689, %v4794
    %v4810 = vsub.f32 %v4690, %v4806
    %v4811 = vadd.f32 %v4807, 0.0
    %v4812 = vadd.f32 %v4808, 0.0
    %v4813 = vadd.f32 %v4809, 0.0
    %v4814 = vadd.f32 %v4810, 0.0
    %v4815 = vmax.f32 %v4811, 0.0
    %v4816 = vmax.f32 %v4812, 0.0
    %v4817 = vmax.f32 %v4813, 0.0
    %v4818 = vmax.f32 %v4814, 0.0
    %v4819 = vmul.f32 %v1893, %v1893
    %v4820 = vmul.f32 %v1925, %v1925
    %v4821 = vmul.f32 %v1957, %v1957
    %v4822 = vmul.f32 %v1989, %v1989
    %v4823 = vmul.f32 %v1896, %v1896
    %v4824 = vmul.f32 %v1928, %v1928
    %v4825 = vmul.f32 %v1960, %v1960
    %v4826 = vmul.f32 %v1992, %v1992
    %v4827 = vmul.f32 %v1899, %v1899
    %v4828 = vmul.f32 %v1931, %v1931
    %v4829 = vmul.f32 %v1963, %v1963
    %v4830 = vmul.f32 %v1995, %v1995
    %v4831 = vmul.f32 %v1902, %v1902
    %v4832 = vmul.f32 %v1934, %v1934
    %v4833 = vmul.f32 %v1966, %v1966
    %v4834 = vmul.f32 %v1998, %v1998
    %v4835 = vadd.f32 %v4819, %v4823
    %v4836 = vadd.f32 %v4835, %v4827
    %v4837 = vadd.f32 %v4836, %v4831
    %v4838 = vrot.slane %v4837, 4
    %v4839 = vadd.f32 %v4837, %v4838
    %v4840 = vrot.slane %v4839, 2
    %v4841 = vadd.f32 %v4839, %v4840
    %v4842 = vrot.slane %v4841, 1
    %v4843 = vadd.f32 %v4841, %v4842
    %v4844 = vadd.f32 %v4820, %v4824
    %v4845 = vadd.f32 %v4844, %v4828
    %v4846 = vadd.f32 %v4845, %v4832
    %v4847 = vrot.slane %v4846, 4
    %v4848 = vadd.f32 %v4846, %v4847
    %v4849 = vrot.slane %v4848, 2
    %v4850 = vadd.f32 %v4848, %v4849
    %v4851 = vrot.slane %v4850, 1
    %v4852 = vadd.f32 %v4850, %v4851
    %v4853 = vadd.f32 %v4821, %v4825
    %v4854 = vadd.f32 %v4853, %v4829
    %v4855 = vadd.f32 %v4854, %v4833
    %v4856 = vrot.slane %v4855, 4
    %v4857 = vadd.f32 %v4855, %v4856
    %v4858 = vrot.slane %v4857, 2
    %v4859 = vadd.f32 %v4857, %v4858
    %v4860 = vrot.slane %v4859, 1
    %v4861 = vadd.f32 %v4859, %v4860
    %v4862 = vadd.f32 %v4822, %v4826
    %v4863 = vadd.f32 %v4862, %v4830
    %v4864 = vadd.f32 %v4863, %v4834
    %v4865 = vrot.slane %v4864, 4
    %v4866 = vadd.f32 %v4864, %v4865
    %v4867 = vrot.slane %v4866, 2
    %v4868 = vadd.f32 %v4866, %v4867
    %v4869 = vrot.slane %v4868, 1
    %v4870 = vadd.f32 %v4868, %v4869
    %v4871 = vrsqrt.pop %v4843
    %v4872 = vmul.f32 %v4871, %v4843
    %v4873 = vmul.f32 %v4872, %v4871
    %v4874 = vmul.f32 0.5, %v4873
    %v4875 = vsub.f32 1.5, %v4874
    %v4876 = vmul.f32 %v4871, %v4875
    %v4877 = vmul.f32 %v4843, %v4876
    %vm4878 = vcmp.eq.f32.partialorder %v4843, inf
    %v4879 = vsel %vm4878, %v4843, %v4877
    %vm4880 = vcmp.eq.f32.partialorder %v4843, 0.0
    %v4881 = vand.u32 %v4843, 2147483648
    %v4882 = vsel %vm4880, %v4881, %v4879
    %v4883 = vrsqrt.pop %v4852
    %v4884 = vmul.f32 %v4883, %v4852
    %v4885 = vmul.f32 %v4884, %v4883
    %v4886 = vmul.f32 0.5, %v4885
    %v4887 = vsub.f32 1.5, %v4886
    %v4888 = vmul.f32 %v4883, %v4887
    %v4889 = vmul.f32 %v4852, %v4888
    %vm4890 = vcmp.eq.f32.partialorder %v4852, inf
    %v4891 = vsel %vm4890, %v4852, %v4889
    %vm4892 = vcmp.eq.f32.partialorder %v4852, 0.0
    %v4893 = vand.u32 %v4852, 2147483648
    %v4894 = vsel %vm4892, %v4893, %v4891
    %v4895 = vrsqrt.pop %v4861
    %v4896 = vmul.f32 %v4895, %v4861
    %v4897 = vmul.f32 %v4896, %v4895
    %v4898 = vmul.f32 0.5, %v4897
    %v4899 = vsub.f32 1.5, %v4898
    %v4900 = vmul.f32 %v4895, %v4899
    %v4901 = vmul.f32 %v4861, %v4900
    %vm4902 = vcmp.eq.f32.partialorder %v4861, inf
    %v4903 = vsel %vm4902, %v4861, %v4901
    %vm4904 = vcmp.eq.f32.partialorder %v4861, 0.0
    %v4905 = vand.u32 %v4861, 2147483648
    %v4906 = vsel %vm4904, %v4905, %v4903
    %v4907 = vrsqrt.pop %v4870
    %v4908 = vmul.f32 %v4907, %v4870
    %v4909 = vmul.f32 %v4908, %v4907
    %v4910 = vmul.f32 0.5, %v4909
    %v4911 = vsub.f32 1.5, %v4910
    %v4912 = vmul.f32 %v4907, %v4911
    %v4913 = vmul.f32 %v4870, %v4912
    %vm4914 = vcmp.eq.f32.partialorder %v4870, inf
    %v4915 = vsel %vm4914, %v4870, %v4913
    %vm4916 = vcmp.eq.f32.partialorder %v4870, 0.0
    %v4917 = vand.u32 %v4870, 2147483648
    %v4918 = vsel %vm4916, %v4917, %v4915
    %v4919 = vsub.f32 %v4882, 1.0
    %v4920 = vsub.f32 %v4894, 1.0
    %v4921 = vsub.f32 %v4906, 1.0
    %v4922 = vsub.f32 %v4918, 1.0
    %v4923 = vand.u32 2147483647, %v4919
    %v4924 = vand.u32 2147483647, %v4920
    %v4925 = vand.u32 2147483647, %v4921
    %v4926 = vand.u32 2147483647, %v4922
    %v4927 = vadd.f32 %v4815, %v4923
    %v4928 = vadd.f32 %v4816, %v4924
    %v4929 = vadd.f32 %v4817, %v4925
    %v4930 = vadd.f32 %v4818, %v4926
    %v4931 = vmul.f32 %v2021, %v2021
    %v4932 = vmul.f32 %v2053, %v2053
    %v4933 = vmul.f32 %v2085, %v2085
    %v4934 = vmul.f32 %v2117, %v2117
    %v4935 = vmul.f32 %v2024, %v2024
    %v4936 = vmul.f32 %v2056, %v2056
    %v4937 = vmul.f32 %v2088, %v2088
    %v4938 = vmul.f32 %v2120, %v2120
    %v4939 = vmul.f32 %v2027, %v2027
    %v4940 = vmul.f32 %v2059, %v2059
    %v4941 = vmul.f32 %v2091, %v2091
    %v4942 = vmul.f32 %v2123, %v2123
    %v4943 = vmul.f32 %v2030, %v2030
    %v4944 = vmul.f32 %v2062, %v2062
    %v4945 = vmul.f32 %v2094, %v2094
    %v4946 = vmul.f32 %v2126, %v2126
    %v4947 = vadd.f32 %v4931, %v4935
    %v4948 = vadd.f32 %v4947, %v4939
    %v4949 = vadd.f32 %v4948, %v4943
    %v4950 = vrot.slane %v4949, 4
    %v4951 = vadd.f32 %v4949, %v4950
    %v4952 = vrot.slane %v4951, 2
    %v4953 = vadd.f32 %v4951, %v4952
    %v4954 = vrot.slane %v4953, 1
    %v4955 = vadd.f32 %v4953, %v4954
    %v4956 = vadd.f32 %v4932, %v4936
    %v4957 = vadd.f32 %v4956, %v4940
    %v4958 = vadd.f32 %v4957, %v4944
    %v4959 = vrot.slane %v4958, 4
    %v4960 = vadd.f32 %v4958, %v4959
    %v4961 = vrot.slane %v4960, 2
    %v4962 = vadd.f32 %v4960, %v4961
    %v4963 = vrot.slane %v4962, 1
    %v4964 = vadd.f32 %v4962, %v4963
    %v4965 = vadd.f32 %v4933, %v4937
    %v4966 = vadd.f32 %v4965, %v4941
    %v4967 = vadd.f32 %v4966, %v4945
    %v4968 = vrot.slane %v4967, 4
    %v4969 = vadd.f32 %v4967, %v4968
    %v4970 = vrot.slane %v4969, 2
    %v4971 = vadd.f32 %v4969, %v4970
    %v4972 = vrot.slane %v4971, 1
    %v4973 = vadd.f32 %v4971, %v4972
    %v4974 = vadd.f32 %v4934, %v4938
    %v4975 = vadd.f32 %v4974, %v4942
    %v4976 = vadd.f32 %v4975, %v4946
    %v4977 = vrot.slane %v4976, 4
    %v4978 = vadd.f32 %v4976, %v4977
    %v4979 = vrot.slane %v4978, 2
    %v4980 = vadd.f32 %v4978, %v4979
    %v4981 = vrot.slane %v4980, 1
    %v4982 = vadd.f32 %v4980, %v4981
    %v4983 = vrsqrt.pop %v4955
    %v4984 = vmul.f32 %v4983, %v4955
    %v4985 = vmul.f32 %v4984, %v4983
    %v4986 = vmul.f32 0.5, %v4985
    %v4987 = vsub.f32 1.5, %v4986
    %v4988 = vmul.f32 %v4983, %v4987
    %v4989 = vmul.f32 %v4955, %v4988
    %vm4990 = vcmp.eq.f32.partialorder %v4955, inf
    %v4991 = vsel %vm4990, %v4955, %v4989
    %vm4992 = vcmp.eq.f32.partialorder %v4955, 0.0
    %v4993 = vand.u32 %v4955, 2147483648
    %v4994 = vsel %vm4992, %v4993, %v4991
    %v4995 = vrsqrt.pop %v4964
    %v4996 = vmul.f32 %v4995, %v4964
    %v4997 = vmul.f32 %v4996, %v4995
    %v4998 = vmul.f32 0.5, %v4997
    %v4999 = vsub.f32 1.5, %v4998
    %v5000 = vmul.f32 %v4995, %v4999
    %v5001 = vmul.f32 %v4964, %v5000
    %vm5002 = vcmp.eq.f32.partialorder %v4964, inf
    %v5003 = vsel %vm5002, %v4964, %v5001
    %vm5004 = vcmp.eq.f32.partialorder %v4964, 0.0
    %v5005 = vand.u32 %v4964, 2147483648
    %v5006 = vsel %vm5004, %v5005, %v5003
    %v5007 = vrsqrt.pop %v4973
    %v5008 = vmul.f32 %v5007, %v4973
    %v5009 = vmul.f32 %v5008, %v5007
    %v5010 = vmul.f32 0.5, %v5009
    %v5011 = vsub.f32 1.5, %v5010
    %v5012 = vmul.f32 %v5007, %v5011
    %v5013 = vmul.f32 %v4973, %v5012
    %vm5014 = vcmp.eq.f32.partialorder %v4973, inf
    %v5015 = vsel %vm5014, %v4973, %v5013
    %vm5016 = vcmp.eq.f32.partialorder %v4973, 0.0
    %v5017 = vand.u32 %v4973, 2147483648
    %v5018 = vsel %vm5016, %v5017, %v5015
    %v5019 = vrsqrt.pop %v4982
    %v5020 = vmul.f32 %v5019, %v4982
    %v5021 = vmul.f32 %v5020, %v5019
    %v5022 = vmul.f32 0.5, %v5021
    %v5023 = vsub.f32 1.5, %v5022
    %v5024 = vmul.f32 %v5019, %v5023
    %v5025 = vmul.f32 %v4982, %v5024
    %vm5026 = vcmp.eq.f32.partialorder %v4982, inf
    %v5027 = vsel %vm5026, %v4982, %v5025
    %vm5028 = vcmp.eq.f32.partialorder %v4982, 0.0
    %v5029 = vand.u32 %v4982, 2147483648
    %v5030 = vsel %vm5028, %v5029, %v5027
    %v5031 = vsub.f32 %v4994, 1.0
    %v5032 = vsub.f32 %v5006, 1.0
    %v5033 = vsub.f32 %v5018, 1.0
    %v5034 = vsub.f32 %v5030, 1.0
    %v5035 = vand.u32 2147483647, %v5031
    %v5036 = vand.u32 2147483647, %v5032
    %v5037 = vand.u32 2147483647, %v5033
    %v5038 = vand.u32 2147483647, %v5034
    %v5039 = vadd.f32 %v4927, %v5035
    %v5040 = vadd.f32 %v4928, %v5036
    %v5041 = vadd.f32 %v4929, %v5037
    %v5042 = vadd.f32 %v4930, %v5038
    %v5043 = vand.u32 2147483647, %v2161
    %v5044 = vand.u32 2147483647, %v2193
    %v5045 = vand.u32 2147483647, %v2225
    %v5046 = vand.u32 2147483647, %v2257
    %v5047 = vand.u32 2147483647, %v2289
    %v5048 = vand.u32 2147483647, %v2321
    %v5049 = vand.u32 2147483647, %v2353
    %v5050 = vand.u32 2147483647, %v2385
    %v5051 = vadd.f32 %v2149, %v2741
    %v5052 = vadd.f32 %v2181, %v2770
    %v5053 = vadd.f32 %v2213, %v2799
    %v5054 = vadd.f32 %v2245, %v2828
    %v5055 = vadd.f32 %v2152, %v2744
    %v5056 = vadd.f32 %v2184, %v2773
    %v5057 = vadd.f32 %v2216, %v2802
    %v5058 = vadd.f32 %v2248, %v2831
    %v5059 = vadd.f32 %v2155, %v2747
    %v5060 = vadd.f32 %v2187, %v2776
    %v5061 = vadd.f32 %v2219, %v2805
    %v5062 = vadd.f32 %v2251, %v2834
    %v5063 = vadd.f32 %v2158, %v2750
    %v5064 = vadd.f32 %v2190, %v2779
    %v5065 = vadd.f32 %v2222, %v2808
    %v5066 = vadd.f32 %v2254, %v2837
    %v5067 = vsub.f32 %v5051, %v2277
    %v5068 = vsub.f32 %v5052, %v2309
    %v5069 = vsub.f32 %v5053, %v2341
    %v5070 = vsub.f32 %v5054, %v2373
    %v5071 = vsub.f32 %v5055, %v2280
    %v5072 = vsub.f32 %v5056, %v2312
    %v5073 = vsub.f32 %v5057, %v2344
    %v5074 = vsub.f32 %v5058, %v2376
    %v5075 = vsub.f32 %v5059, %v2283
    %v5076 = vsub.f32 %v5060, %v2315
    %v5077 = vsub.f32 %v5061, %v2347
    %v5078 = vsub.f32 %v5062, %v2379
    %v5079 = vsub.f32 %v5063, %v2286
    %v5080 = vsub.f32 %v5064, %v2318
    %v5081 = vsub.f32 %v5065, %v2350
    %v5082 = vsub.f32 %v5066, %v2382
    %v5083 = vmul.f32 %v5067, %v5067
    %v5084 = vmul.f32 %v5068, %v5068
    %v5085 = vmul.f32 %v5069, %v5069
    %v5086 = vmul.f32 %v5070, %v5070
    %v5087 = vmul.f32 %v5071, %v5071
    %v5088 = vmul.f32 %v5072, %v5072
    %v5089 = vmul.f32 %v5073, %v5073
    %v5090 = vmul.f32 %v5074, %v5074
    %v5091 = vmul.f32 %v5075, %v5075
    %v5092 = vmul.f32 %v5076, %v5076
    %v5093 = vmul.f32 %v5077, %v5077
    %v5094 = vmul.f32 %v5078, %v5078
    %v5095 = vmul.f32 %v5079, %v5079
    %v5096 = vmul.f32 %v5080, %v5080
    %v5097 = vmul.f32 %v5081, %v5081
    %v5098 = vmul.f32 %v5082, %v5082
    %v5099 = vadd.f32 %v5083, %v5087
    %v5100 = vadd.f32 %v5099, %v5091
    %v5101 = vadd.f32 %v5100, %v5095
    %v5102 = vrot.slane %v5101, 4
    %v5103 = vadd.f32 %v5101, %v5102
    %v5104 = vrot.slane %v5103, 2
    %v5105 = vadd.f32 %v5103, %v5104
    %v5106 = vrot.slane %v5105, 1
    %v5107 = vadd.f32 %v5105, %v5106
    %v5108 = vadd.f32 %v5084, %v5088
    %v5109 = vadd.f32 %v5108, %v5092
    %v5110 = vadd.f32 %v5109, %v5096
    %v5111 = vrot.slane %v5110, 4
    %v5112 = vadd.f32 %v5110, %v5111
    %v5113 = vrot.slane %v5112, 2
    %v5114 = vadd.f32 %v5112, %v5113
    %v5115 = vrot.slane %v5114, 1
    %v5116 = vadd.f32 %v5114, %v5115
    %v5117 = vadd.f32 %v5085, %v5089
    %v5118 = vadd.f32 %v5117, %v5093
    %v5119 = vadd.f32 %v5118, %v5097
    %v5120 = vrot.slane %v5119, 4
    %v5121 = vadd.f32 %v5119, %v5120
    %v5122 = vrot.slane %v5121, 2
    %v5123 = vadd.f32 %v5121, %v5122
    %v5124 = vrot.slane %v5123, 1
    %v5125 = vadd.f32 %v5123, %v5124
    %v5126 = vadd.f32 %v5086, %v5090
    %v5127 = vadd.f32 %v5126, %v5094
    %v5128 = vadd.f32 %v5127, %v5098
    %v5129 = vrot.slane %v5128, 4
    %v5130 = vadd.f32 %v5128, %v5129
    %v5131 = vrot.slane %v5130, 2
    %v5132 = vadd.f32 %v5130, %v5131
    %v5133 = vrot.slane %v5132, 1
    %v5134 = vadd.f32 %v5132, %v5133
    %v5135 = vrsqrt.pop %v5107
    %v5136 = vmul.f32 %v5135, %v5107
    %v5137 = vmul.f32 %v5136, %v5135
    %v5138 = vmul.f32 0.5, %v5137
    %v5139 = vsub.f32 1.5, %v5138
    %v5140 = vmul.f32 %v5135, %v5139
    %v5141 = vmul.f32 %v5107, %v5140
    %vm5142 = vcmp.eq.f32.partialorder %v5107, inf
    %v5143 = vsel %vm5142, %v5107, %v5141
    %vm5144 = vcmp.eq.f32.partialorder %v5107, 0.0
    %v5145 = vand.u32 %v5107, 2147483648
    %v5146 = vsel %vm5144, %v5145, %v5143
    %v5147 = vrsqrt.pop %v5116
    %v5148 = vmul.f32 %v5147, %v5116
    %v5149 = vmul.f32 %v5148, %v5147
    %v5150 = vmul.f32 0.5, %v5149
    %v5151 = vsub.f32 1.5, %v5150
    %v5152 = vmul.f32 %v5147, %v5151
    %v5153 = vmul.f32 %v5116, %v5152
    %vm5154 = vcmp.eq.f32.partialorder %v5116, inf
    %v5155 = vsel %vm5154, %v5116, %v5153
    %vm5156 = vcmp.eq.f32.partialorder %v5116, 0.0
    %v5157 = vand.u32 %v5116, 2147483648
    %v5158 = vsel %vm5156, %v5157, %v5155
    %v5159 = vrsqrt.pop %v5125
    %v5160 = vmul.f32 %v5159, %v5125
    %v5161 = vmul.f32 %v5160, %v5159
    %v5162 = vmul.f32 0.5, %v5161
    %v5163 = vsub.f32 1.5, %v5162
    %v5164 = vmul.f32 %v5159, %v5163
    %v5165 = vmul.f32 %v5125, %v5164
    %vm5166 = vcmp.eq.f32.partialorder %v5125, inf
    %v5167 = vsel %vm5166, %v5125, %v5165
    %vm5168 = vcmp.eq.f32.partialorder %v5125, 0.0
    %v5169 = vand.u32 %v5125, 2147483648
    %v5170 = vsel %vm5168, %v5169, %v5167
    %v5171 = vrsqrt.pop %v5134
    %v5172 = vmul.f32 %v5171, %v5134
    %v5173 = vmul.f32 %v5172, %v5171
    %v5174 = vmul.f32 0.5, %v5173
    %v5175 = vsub.f32 1.5, %v5174
    %v5176 = vmul.f32 %v5171, %v5175
    %v5177 = vmul.f32 %v5134, %v5176
    %vm5178 = vcmp.eq.f32.partialorder %v5134, inf
    %v5179 = vsel %vm5178, %v5134, %v5177
    %vm5180 = vcmp.eq.f32.partialorder %v5134, 0.0
    %v5181 = vand.u32 %v5134, 2147483648
    %v5182 = vsel %vm5180, %v5181, %v5179
    %v5183 = vsub.f32 %v5146, %v5043
    %v5184 = vsub.f32 %v5158, %v5044
    %v5185 = vsub.f32 %v5170, %v5045
    %v5186 = vsub.f32 %v5182, %v5046
    %v5187 = vsub.f32 %v5183, %v5047
    %v5188 = vsub.f32 %v5184, %v5048
    %v5189 = vsub.f32 %v5185, %v5049
    %v5190 = vsub.f32 %v5186, %v5050
    %v5191 = vsub.f32 0.0, %v5187
    %v5192 = vsub.f32 0.0, %v5188
    %v5193 = vsub.f32 0.0, %v5189
    %v5194 = vsub.f32 0.0, %v5190
    %v5195 = vadd.f32 %v5191, 0.0
    %v5196 = vadd.f32 %v5192, 0.0
    %v5197 = vadd.f32 %v5193, 0.0
    %v5198 = vadd.f32 %v5194, 0.0
    %v5199 = vmul.f32 %v2149, %v2149
    %v5200 = vmul.f32 %v2181, %v2181
    %v5201 = vmul.f32 %v2213, %v2213
    %v5202 = vmul.f32 %v2245, %v2245
    %v5203 = vmul.f32 %v2152, %v2152
    %v5204 = vmul.f32 %v2184, %v2184
    %v5205 = vmul.f32 %v2216, %v2216
    %v5206 = vmul.f32 %v2248, %v2248
    %v5207 = vmul.f32 %v2155, %v2155
    %v5208 = vmul.f32 %v2187, %v2187
    %v5209 = vmul.f32 %v2219, %v2219
    %v5210 = vmul.f32 %v2251, %v2251
    %v5211 = vmul.f32 %v2158, %v2158
    %v5212 = vmul.f32 %v2190, %v2190
    %v5213 = vmul.f32 %v2222, %v2222
    %v5214 = vmul.f32 %v2254, %v2254
    %v5215 = vadd.f32 %v5199, %v5203
    %v5216 = vadd.f32 %v5215, %v5207
    %v5217 = vadd.f32 %v5216, %v5211
    %v5218 = vrot.slane %v5217, 4
    %v5219 = vadd.f32 %v5217, %v5218
    %v5220 = vrot.slane %v5219, 2
    %v5221 = vadd.f32 %v5219, %v5220
    %v5222 = vrot.slane %v5221, 1
    %v5223 = vadd.f32 %v5221, %v5222
    %v5224 = vadd.f32 %v5200, %v5204
    %v5225 = vadd.f32 %v5224, %v5208
    %v5226 = vadd.f32 %v5225, %v5212
    %v5227 = vrot.slane %v5226, 4
    %v5228 = vadd.f32 %v5226, %v5227
    %v5229 = vrot.slane %v5228, 2
    %v5230 = vadd.f32 %v5228, %v5229
    %v5231 = vrot.slane %v5230, 1
    %v5232 = vadd.f32 %v5230, %v5231
    %v5233 = vadd.f32 %v5201, %v5205
    %v5234 = vadd.f32 %v5233, %v5209
    %v5235 = vadd.f32 %v5234, %v5213
    %v5236 = vrot.slane %v5235, 4
    %v5237 = vadd.f32 %v5235, %v5236
    %v5238 = vrot.slane %v5237, 2
    %v5239 = vadd.f32 %v5237, %v5238
    %v5240 = vrot.slane %v5239, 1
    %v5241 = vadd.f32 %v5239, %v5240
    %v5242 = vadd.f32 %v5202, %v5206
    %v5243 = vadd.f32 %v5242, %v5210
    %v5244 = vadd.f32 %v5243, %v5214
    %v5245 = vrot.slane %v5244, 4
    %v5246 = vadd.f32 %v5244, %v5245
    %v5247 = vrot.slane %v5246, 2
    %v5248 = vadd.f32 %v5246, %v5247
    %v5249 = vrot.slane %v5248, 1
    %v5250 = vadd.f32 %v5248, %v5249
    %v5251 = vrsqrt.pop %v5223
    %v5252 = vmul.f32 %v5251, %v5223
    %v5253 = vmul.f32 %v5252, %v5251
    %v5254 = vmul.f32 0.5, %v5253
    %v5255 = vsub.f32 1.5, %v5254
    %v5256 = vmul.f32 %v5251, %v5255
    %v5257 = vmul.f32 %v5223, %v5256
    %vm5258 = vcmp.eq.f32.partialorder %v5223, inf
    %v5259 = vsel %vm5258, %v5223, %v5257
    %vm5260 = vcmp.eq.f32.partialorder %v5223, 0.0
    %v5261 = vand.u32 %v5223, 2147483648
    %v5262 = vsel %vm5260, %v5261, %v5259
    %v5263 = vrsqrt.pop %v5232
    %v5264 = vmul.f32 %v5263, %v5232
    %v5265 = vmul.f32 %v5264, %v5263
    %v5266 = vmul.f32 0.5, %v5265
    %v5267 = vsub.f32 1.5, %v5266
    %v5268 = vmul.f32 %v5263, %v5267
    %v5269 = vmul.f32 %v5232, %v5268
    %vm5270 = vcmp.eq.f32.partialorder %v5232, inf
    %v5271 = vsel %vm5270, %v5232, %v5269
    %vm5272 = vcmp.eq.f32.partialorder %v5232, 0.0
    %v5273 = vand.u32 %v5232, 2147483648
    %v5274 = vsel %vm5272, %v5273, %v5271
    %v5275 = vrsqrt.pop %v5241
    %v5276 = vmul.f32 %v5275, %v5241
    %v5277 = vmul.f32 %v5276, %v5275
    %v5278 = vmul.f32 0.5, %v5277
    %v5279 = vsub.f32 1.5, %v5278
    %v5280 = vmul.f32 %v5275, %v5279
    %v5281 = vmul.f32 %v5241, %v5280
    %vm5282 = vcmp.eq.f32.partialorder %v5241, inf
    %v5283 = vsel %vm5282, %v5241, %v5281
    %vm5284 = vcmp.eq.f32.partialorder %v5241, 0.0
    %v5285 = vand.u32 %v5241, 2147483648
    %v5286 = vsel %vm5284, %v5285, %v5283
    %v5287 = vrsqrt.pop %v5250
    %v5288 = vmul.f32 %v5287, %v5250
    %v5289 = vmul.f32 %v5288, %v5287
    %v5290 = vmul.f32 0.5, %v5289
    %v5291 = vsub.f32 1.5, %v5290
    %v5292 = vmul.f32 %v5287, %v5291
    %v5293 = vmul.f32 %v5250, %v5292
    %vm5294 = vcmp.eq.f32.partialorder %v5250, inf
    %v5295 = vsel %vm5294, %v5250, %v5293
    %vm5296 = vcmp.eq.f32.partialorder %v5250, 0.0
    %v5297 = vand.u32 %v5250, 2147483648
    %v5298 = vsel %vm5296, %v5297, %v5295
    %v5299 = vsub.f32 %v5262, 1.0
    %v5300 = vsub.f32 %v5274, 1.0
    %v5301 = vsub.f32 %v5286, 1.0
    %v5302 = vsub.f32 %v5298, 1.0
    %v5303 = vand.u32 2147483647, %v5299
    %v5304 = vand.u32 2147483647, %v5300
    %v5305 = vand.u32 2147483647, %v5301
    %v5306 = vand.u32 2147483647, %v5302
    %v5307 = vadd.f32 %v5195, %v5303
    %v5308 = vadd.f32 %v5196, %v5304
    %v5309 = vadd.f32 %v5197, %v5305
    %v5310 = vadd.f32 %v5198, %v5306
    %v5311 = vmul.f32 %v2277, %v2277
    %v5312 = vmul.f32 %v2309, %v2309
    %v5313 = vmul.f32 %v2341, %v2341
    %v5314 = vmul.f32 %v2373, %v2373
    %v5315 = vmul.f32 %v2280, %v2280
    %v5316 = vmul.f32 %v2312, %v2312
    %v5317 = vmul.f32 %v2344, %v2344
    %v5318 = vmul.f32 %v2376, %v2376
    %v5319 = vmul.f32 %v2283, %v2283
    %v5320 = vmul.f32 %v2315, %v2315
    %v5321 = vmul.f32 %v2347, %v2347
    %v5322 = vmul.f32 %v2379, %v2379
    %v5323 = vmul.f32 %v2286, %v2286
    %v5324 = vmul.f32 %v2318, %v2318
    %v5325 = vmul.f32 %v2350, %v2350
    %v5326 = vmul.f32 %v2382, %v2382
    %v5327 = vadd.f32 %v5311, %v5315
    %v5328 = vadd.f32 %v5327, %v5319
    %v5329 = vadd.f32 %v5328, %v5323
    %v5330 = vrot.slane %v5329, 4
    %v5331 = vadd.f32 %v5329, %v5330
    %v5332 = vrot.slane %v5331, 2
    %v5333 = vadd.f32 %v5331, %v5332
    %v5334 = vrot.slane %v5333, 1
    %v5335 = vadd.f32 %v5333, %v5334
    %v5336 = vadd.f32 %v5312, %v5316
    %v5337 = vadd.f32 %v5336, %v5320
    %v5338 = vadd.f32 %v5337, %v5324
    %v5339 = vrot.slane %v5338, 4
    %v5340 = vadd.f32 %v5338, %v5339
    %v5341 = vrot.slane %v5340, 2
    %v5342 = vadd.f32 %v5340, %v5341
    %v5343 = vrot.slane %v5342, 1
    %v5344 = vadd.f32 %v5342, %v5343
    %v5345 = vadd.f32 %v5313, %v5317
    %v5346 = vadd.f32 %v5345, %v5321
    %v5347 = vadd.f32 %v5346, %v5325
    %v5348 = vrot.slane %v5347, 4
    %v5349 = vadd.f32 %v5347, %v5348
    %v5350 = vrot.slane %v5349, 2
    %v5351 = vadd.f32 %v5349, %v5350
    %v5352 = vrot.slane %v5351, 1
    %v5353 = vadd.f32 %v5351, %v5352
    %v5354 = vadd.f32 %v5314, %v5318
    %v5355 = vadd.f32 %v5354, %v5322
    %v5356 = vadd.f32 %v5355, %v5326
    %v5357 = vrot.slane %v5356, 4
    %v5358 = vadd.f32 %v5356, %v5357
    %v5359 = vrot.slane %v5358, 2
    %v5360 = vadd.f32 %v5358, %v5359
    %v5361 = vrot.slane %v5360, 1
    %v5362 = vadd.f32 %v5360, %v5361
    %v5363 = vrsqrt.pop %v5335
    %v5364 = vmul.f32 %v5363, %v5335
    %v5365 = vmul.f32 %v5364, %v5363
    %v5366 = vmul.f32 0.5, %v5365
    %v5367 = vsub.f32 1.5, %v5366
    %v5368 = vmul.f32 %v5363, %v5367
    %v5369 = vmul.f32 %v5335, %v5368
    %vm5370 = vcmp.eq.f32.partialorder %v5335, inf
    %v5371 = vsel %vm5370, %v5335, %v5369
    %vm5372 = vcmp.eq.f32.partialorder %v5335, 0.0
    %v5373 = vand.u32 %v5335, 2147483648
    %v5374 = vsel %vm5372, %v5373, %v5371
    %v5375 = vrsqrt.pop %v5344
    %v5376 = vmul.f32 %v5375, %v5344
    %v5377 = vmul.f32 %v5376, %v5375
    %v5378 = vmul.f32 0.5, %v5377
    %v5379 = vsub.f32 1.5, %v5378
    %v5380 = vmul.f32 %v5375, %v5379
    %v5381 = vmul.f32 %v5344, %v5380
    %vm5382 = vcmp.eq.f32.partialorder %v5344, inf
    %v5383 = vsel %vm5382, %v5344, %v5381
    %vm5384 = vcmp.eq.f32.partialorder %v5344, 0.0
    %v5385 = vand.u32 %v5344, 2147483648
    %v5386 = vsel %vm5384, %v5385, %v5383
    %v5387 = vrsqrt.pop %v5353
    %v5388 = vmul.f32 %v5387, %v5353
    %v5389 = vmul.f32 %v5388, %v5387
    %v5390 = vmul.f32 0.5, %v5389
    %v5391 = vsub.f32 1.5, %v5390
    %v5392 = vmul.f32 %v5387, %v5391
    %v5393 = vmul.f32 %v5353, %v5392
    %vm5394 = vcmp.eq.f32.partialorder %v5353, inf
    %v5395 = vsel %vm5394, %v5353, %v5393
    %vm5396 = vcmp.eq.f32.partialorder %v5353, 0.0
    %v5397 = vand.u32 %v5353, 2147483648
    %v5398 = vsel %vm5396, %v5397, %v5395
    %v5399 = vrsqrt.pop %v5362
    %v5400 = vmul.f32 %v5399, %v5362
    %v5401 = vmul.f32 %v5400, %v5399
    %v5402 = vmul.f32 0.5, %v5401
    %v5403 = vsub.f32 1.5, %v5402
    %v5404 = vmul.f32 %v5399, %v5403
    %v5405 = vmul.f32 %v5362, %v5404
    %vm5406 = vcmp.eq.f32.partialorder %v5362, inf
    %v5407 = vsel %vm5406, %v5362, %v5405
    %vm5408 = vcmp.eq.f32.partialorder %v5362, 0.0
    %v5409 = vand.u32 %v5362, 2147483648
    %v5410 = vsel %vm5408, %v5409, %v5407
    %v5411 = vsub.f32 %v5374, 1.0
    %v5412 = vsub.f32 %v5386, 1.0
    %v5413 = vsub.f32 %v5398, 1.0
    %v5414 = vsub.f32 %v5410, 1.0
    %v5415 = vand.u32 2147483647, %v5411
    %v5416 = vand.u32 2147483647, %v5412
    %v5417 = vand.u32 2147483647, %v5413
    %v5418 = vand.u32 2147483647, %v5414
    %v5419 = vadd.f32 %v5307, %v5415
    %v5420 = vadd.f32 %v5308, %v5416
    %v5421 = vadd.f32 %v5309, %v5417
    %v5422 = vadd.f32 %v5310, %v5418
    %v5423 = vadd.f32 %v3195, %v3923
    %v5424 = vadd.f32 %v3196, %v3924
    %v5425 = vadd.f32 %v3197, %v3925
    %v5426 = vadd.f32 %v3198, %v3926
    %v5427 = vadd.f32 %v5423, %v4299
    %v5428 = vadd.f32 %v5424, %v4300
    %v5429 = vadd.f32 %v5425, %v4301
    %v5430 = vadd.f32 %v5426, %v4302
    %v5431 = vadd.f32 %v5427, %v4675
    %v5432 = vadd.f32 %v5428, %v4676
    %v5433 = vadd.f32 %v5429, %v4677
    %v5434 = vadd.f32 %v5430, %v4678
    %v5435 = vadd.f32 %v5431, %v5039
    %v5436 = vadd.f32 %v5432, %v5040
    %v5437 = vadd.f32 %v5433, %v5041
    %v5438 = vadd.f32 %v5434, %v5042
    %v5439 = vadd.f32 %v5435, %v5419
    %v5440 = vadd.f32 %v5436, %v5420
    %v5441 = vadd.f32 %v5437, %v5421
    %v5442 = vadd.f32 %v5438, %v5422
    %vm5443 = vcmask 1040384
    %v5444 = vsel %vm5443, %v5439, 0.0
    %v5445 = vsel %vm5443, %v5440, 0.0
    %v5446 = vadd.f32 %v5444, %v5445
    %v5447 = vsel %vm5443, %v5441, 0.0
    %v5448 = vadd.f32 %v5446, %v5447
    %v5449 = vsel %vm5443, %v5442, 0.0
    %v5450 = vadd.f32 %v5448, %v5449
    %5451 = vadd.xlane.f32.xlu0 %v5450
    %v5452 = vpop.xlane.xlu0 %5451
    %v5453 = vrot.slane %v5452, 4
    %v5454 = vadd.f32 %v5452, %v5453
    %v5455 = vrot.slane %v5454, 2
    %v5456 = vadd.f32 %v5454, %v5455
    %v5457 = vrot.slane %v5456, 1
    %v5458 = vadd.f32 %v5456, %v5457
    %s5459 = vtos %v5458
    %v5460 = vrcp.pop 512.0
    %v5461 = vmul.f32 512.0, %v5460
    %v5462 = vsub.f32 1.0, %v5461
    %v5463 = vmul.f32 %v5460, %v5462
    %v5464 = vadd.f32 %v5460, %v5463
    %vm5465 = vweird.f32 %v5460
    %v5466 = vsel %vm5465, %v5460, %v5464
    %s5467 = vtos %v5466
    %s5468 = smul.f32 %s5459, %s5467
    %s5469 = scalar_lea.smem [#allocation2], 0
    %5470 = sst [smem:[%s5469]] %s5468
    // Predicated region
    $region18: #{elem_forward.3} parent=1 // pred_check
      _
    $region19: #{elem_forward.3} parent=1 // pred_check_branch
      %5472 = sbr.rel (0) target = $region21
    $region20: #{elem_forward.3} parent=1 // pred_region
      %5474 = vsyncadd [#allocation3], 0
      %s5476 = sshll.u32 %s4, 4
      %s5477 = int_to_ptr.hbm [resolvable:$true] %s5476
      %5479 = dma.smem_to_hbm [#allocation2], 16, %s5477, [#allocation3]
    $region21: #{elem_forward.3} parent=1 // pred_fallthru
      _
    // Predicated region
    $region22: #{elem_forward.3} parent=1 // pred_check
      _
    $region23: #{elem_forward.3} parent=1 // pred_check_branch
      %5481 = sbr.rel (0) target = $region25
    $region24: #{elem_forward.3} parent=1 // pred_region
      %5483 = dma.done [#allocation3], 16
    $region25: #{elem_forward.3} parent=1 // pred_fallthru
      _
    %5484 = sfence
    %5485 = vsyncpa [#allocation3], 1

</llo_original>
